<compile_context>
chip_gen: v6e
topology: v6e:2x2x1
jax: 0.10.0
libtpu: 0.0.40
codegen_flags: <defaults>
</compile_context>

<pallas_src>
import jax
import jax.numpy as jnp
from jax.experimental import pallas as pl
from jax.experimental.pallas import tpu as pltpu

HP = {'num_dimensions': 1, 'hidden_size': 150, 'latent_size': 64,
      'sequence_length': 12, 'kld_weight': 0.1}


def _leaky(v):
    # nn.LeakyReLU() default negative_slope = 0.01
    return jnp.where(v > 0, v, 0.01 * v)


def _sigmoid(v):
    # sigmoid(x) = 0.5 * tanh(0.5 x) + 0.5  -> one EUP transcendental / element
    return 0.5 * jnp.tanh(0.5 * v) + 0.5


def _lstm_cell(gates, c, PW):
    """gates: (B, 4*PW) pre-activations, PyTorch gate order (i, f, g, o),
    each gate occupying a PW-lane (128-aligned) slab."""
    sif = _sigmoid(gates[:, 0:2 * PW])          # i, f as one contiguous slab
    i_g = sif[:, 0:PW]
    f_g = sif[:, PW:2 * PW]
    g_g = jnp.tanh(gates[:, 2 * PW:3 * PW])
    c_new = f_g * c + i_g * g_g
    tanh_c = jnp.tanh(c_new)                    # on the critical c-path
    o_g = _sigmoid(gates[:, 3 * PW:4 * PW])     # deferred off the c-path
    h_new = o_g * tanh_c
    return h_new, c_new


def encoder_kernel(x_ref, w_ih_ref, b_ref, w_hh_ref, w_enc_ref, b_enc_ref,
                   out_ref):
    # x_ref:     (B, T)       raw inputs (D == 1)
    # w_ih_ref:  (1, 4*PW)    padded input-weight row, gate order (i, f, g, o)
    # b_ref:     (1, 4*PW)    padded fused bias (b_ih + b_hh)
    # w_hh_ref:  (PW, 4*PW)   padded fused recurrent weight, bf16
    # w_enc_ref: (PW, L)      padded linear1 weight (pre-transposed), f32
    # b_enc_ref: (1, L)
    # out_ref:   (B, L)
    B, T = x_ref.shape
    PW = w_hh_ref.shape[0]

    x_all = x_ref[...]                # (B, T) — one vreg
    w_ih = w_ih_ref[...]              # (1, 4*PW)
    b_all = b_ref[...]                # (1, 4*PW)

    def xb(t):
        # D == 1: input + bias gate contribution, one fma (not h-dependent).
        return x_all[:, t:t + 1] * w_ih + b_all

    # t = 0: h_0 == 0 -> recurrent matmul vanishes.
    h, c = _lstm_cell(xb(0), jnp.zeros((B, PW), jnp.float32), PW)

    # t = 1 .. T-1: one fused bf16 (B,PW)@(PW,4PW) MXU matmul per step.
    # W_hh is re-read from VMEM each step (too big for the vreg file).
    for t in range(1, T):
        gates = jnp.dot(h.astype(jnp.bfloat16), w_hh_ref[...],
                        preferred_element_type=jnp.float32) + xb(t)
        h, c = _lstm_cell(gates, c, PW)

    # Encoder head: last hidden -> linear (f32) -> LeakyReLU.
    out_ref[...] = _leaky(
        jnp.dot(h, w_enc_ref[...], preferred_element_type=jnp.float32)
        + b_enc_ref[...])


def make_params(hp, key):
    """Parameters in PyTorch layout with uniform(-1/sqrt(H), 1/sqrt(H)) init."""
    D, H, L = hp['num_dimensions'], hp['hidden_size'], hp['latent_size']
    ks = jax.random.split(key, 6)

    def unif(k, shape, fan_in):
        b = 1.0 / float(fan_in) ** 0.5
        return jax.random.uniform(k, shape, jnp.float32, -b, b)

    return {
        'w_ih': unif(ks[0], (4 * H, D), H),   # lstm1.weight_ih_l0 (i,f,g,o)
        'w_hh': unif(ks[1], (4 * H, H), H),   # lstm1.weight_hh_l0
        'b_ih': unif(ks[2], (4 * H,), H),     # lstm1.bias_ih_l0
        'b_hh': unif(ks[3], (4 * H,), H),     # lstm1.bias_hh_l0
        'w_enc': unif(ks[4], (L, H), H),      # linear1.weight
        'b_enc': unif(ks[5], (L,), H),        # linear1.bias
    }


def prepare_params(params):
    """One-time (outside jit) layout prep: pad each gate slab from H to PW
    (next multiple of 128) lanes, pad the contraction dim to PW rows with
    zeros, fuse biases, cast the recurrent weight to bf16."""
    H = params['w_hh'].shape[1]
    L = params['w_enc'].shape[0]
    PW = ((H + 127) // 128) * 128

    def pad_gate_cols(a):
        # a: (..., 4H) PyTorch gate order (i,f,g,o) -> (..., 4*PW), zero-padded
        parts = []
        for g in range(4):
            slab = a[..., g * H:(g + 1) * H]
            pad = jnp.zeros(slab.shape[:-1] + (PW - H,), a.dtype)
            parts += [slab, pad]
        return jnp.concatenate(parts, axis=-1)

    w_hh_t = pad_gate_cols(params['w_hh'].T)                    # (H, 4*PW)
    w_hh_p = jnp.zeros((PW, 4 * PW), jnp.float32).at[:H].set(w_hh_t)
    w_ih_p = pad_gate_cols(params['w_ih'][:, 0])[None, :]       # (1, 4*PW)
    b_p = pad_gate_cols(params['b_ih'] + params['b_hh'])[None, :]
    w_enc_p = jnp.zeros((PW, L), jnp.float32).at[:H].set(params['w_enc'].T)

    return {
        'w_ih': w_ih_p.astype(jnp.float32),
        'b': b_p.astype(jnp.float32),
        'w_hh': w_hh_p.astype(jnp.bfloat16),   # bf16 MXU operand
        'w_enc': w_enc_p,                       # f32 (final-layer accuracy)
        'b_enc': params['b_enc'][None, :],
    }


def encoder_forward(x, pp):
    """x: (B, T, D) batch-first, D == 1.  Returns (B, latent_size)."""
    B, T, D = x.shape
    L = pp['w_enc'].shape[1]
    x2 = x[:, :, 0]                                             # (B, T)

    vmem = pl.BlockSpec(memory_space=pltpu.MemorySpace.VMEM)
    return pl.pallas_call(
        encoder_kernel,
        out_shape=jax.ShapeDtypeStruct((B, L), jnp.float32),
        in_specs=[vmem, vmem, vmem, vmem, vmem, vmem],
        out_specs=vmem,
    )(x2, pp['w_ih'], pp['b'], pp['w_hh'], pp['w_enc'], pp['b_enc'])


def reference_encoder(x, p):
    """Pure-JAX reference mirroring the PyTorch Encoder.forward semantics."""
    B, T, D = x.shape
    H = p['w_hh'].shape[1]
    hi = jax.lax.Precision.HIGHEST
    h = jnp.zeros((B, H), jnp.float32)
    c = jnp.zeros((B, H), jnp.float32)
    b = p['b_ih'] + p['b_hh']
    for t in range(T):
        x_t = x[:, t, :]
        gates = (jnp.dot(x_t, p['w_ih'].T, precision=hi)
                 + jnp.dot(h, p['w_hh'].T, precision=hi) + b)
        i_g = jax.nn.sigmoid(gates[:, 0:H])
        f_g = jax.nn.sigmoid(gates[:, H:2 * H])
        g_g = jnp.tanh(gates[:, 2 * H:3 * H])
        o_g = jax.nn.sigmoid(gates[:, 3 * H:4 * H])
        c = f_g * c + i_g * g_g
        h = o_g * jnp.tanh(c)
    return _leaky(jnp.dot(h, p['w_enc'].T, precision=hi) + p['b_enc'])


if __name__ == "__main__":
    key = jax.random.PRNGKey(0)
    kx, kp = jax.random.split(key)

    B = 8                              # one full sublane group; any B works
    T = HP['sequence_length']          # 12
    D = HP['num_dimensions']           # 1
    L = HP['latent_size']              # 64

    x = jax.random.normal(kx, (B, T, D), jnp.float32)
    params = make_params(HP, kp)
    prepped = prepare_params(params)   # one-time layout prep, outside jit

    out = jax.block_until_ready(jax.jit(encoder_forward)(x, prepped))
    ref = reference_encoder(x, params)

    assert out.shape == (B, L)
    # Tolerance loosened slightly vs pure-f32: recurrent matmul operands are
    # bf16 (accumulation f32), reference is f32 HIGHEST precision.
    assert jnp.allclose(out, ref, atol=1e-2, rtol=1e-2), \
        float(jnp.max(jnp.abs(out - ref)))

    print("KERNEL_OK")
</pallas_src>

<mosaic_0001>
module attributes {stable_mosaic.version = 11 : i64} {
  func.func @encoder_kernel(%arg0: memref<8x12xf32, #tpu.memory_space<vmem>>, %arg1: memref<1x1024xf32, #tpu.memory_space<vmem>>, %arg2: memref<1x1024xf32, #tpu.memory_space<vmem>>, %arg3: memref<256x1024xbf16, #tpu.memory_space<vmem>>, %arg4: memref<256x64xf32, #tpu.memory_space<vmem>>, %arg5: memref<1x64xf32, #tpu.memory_space<vmem>>, %arg6: memref<8x64xf32, #tpu.memory_space<vmem>>) attributes {dimension_semantics = [], scalar_prefetch = 0 : i64, scratch_operands = 0 : i64, tpu.core_type = #tpu.core_type<tc>} {
    %c0 = arith.constant 0 : index
    %c0_0 = arith.constant 0 : index
    %0 = vector.load %arg0[%c0, %c0_0] : memref<8x12xf32, #tpu.memory_space<vmem>>, vector<8x12xf32>
    %c0_1 = arith.constant 0 : index
    %c0_2 = arith.constant 0 : index
    %1 = vector.load %arg1[%c0_1, %c0_2] : memref<1x1024xf32, #tpu.memory_space<vmem>>, vector<1x1024xf32>
    %c0_3 = arith.constant 0 : index
    %c0_4 = arith.constant 0 : index
    %2 = vector.load %arg2[%c0_3, %c0_4] : memref<1x1024xf32, #tpu.memory_space<vmem>>, vector<1x1024xf32>
    %3 = vector.extract_strided_slice %0 {offsets = [0, 0], sizes = [8, 1], strides = [1, 1]} : vector<8x12xf32> to vector<8x1xf32>
    %4 = vector.broadcast %3 : vector<8x1xf32> to vector<8x1024xf32>
    %5 = vector.broadcast %1 : vector<1x1024xf32> to vector<8x1024xf32>
    %6 = arith.mulf %4, %5 : vector<8x1024xf32>
    %7 = vector.broadcast %2 : vector<1x1024xf32> to vector<8x1024xf32>
    %8 = arith.addf %6, %7 : vector<8x1024xf32>
    %cst = arith.constant 0.000000e+00 : f32
    %9 = vector.broadcast %cst : f32 to vector<8x256xf32>
    %10 = vector.extract_strided_slice %8 {offsets = [0, 0], sizes = [8, 512], strides = [1, 1]} : vector<8x1024xf32> to vector<8x512xf32>
    %cst_5 = arith.constant 5.000000e-01 : f32
    %11 = vector.broadcast %cst_5 : f32 to vector<8x512xf32>
    %12 = arith.mulf %11, %10 : vector<8x512xf32>
    %13 = math.tanh %12 : vector<8x512xf32>
    %cst_6 = arith.constant 5.000000e-01 : f32
    %14 = vector.broadcast %cst_6 : f32 to vector<8x512xf32>
    %15 = arith.mulf %14, %13 : vector<8x512xf32>
    %cst_7 = arith.constant 5.000000e-01 : f32
    %16 = vector.broadcast %cst_7 : f32 to vector<8x512xf32>
    %17 = arith.addf %15, %16 : vector<8x512xf32>
    %18 = vector.extract_strided_slice %17 {offsets = [0, 0], sizes = [8, 256], strides = [1, 1]} : vector<8x512xf32> to vector<8x256xf32>
    %19 = vector.extract_strided_slice %17 {offsets = [0, 256], sizes = [8, 256], strides = [1, 1]} : vector<8x512xf32> to vector<8x256xf32>
    %20 = vector.extract_strided_slice %8 {offsets = [0, 512], sizes = [8, 256], strides = [1, 1]} : vector<8x1024xf32> to vector<8x256xf32>
    %21 = math.tanh %20 : vector<8x256xf32>
    %22 = arith.mulf %19, %9 : vector<8x256xf32>
    %23 = arith.mulf %18, %21 : vector<8x256xf32>
    %24 = arith.addf %22, %23 : vector<8x256xf32>
    %25 = math.tanh %24 : vector<8x256xf32>
    %26 = vector.extract_strided_slice %8 {offsets = [0, 768], sizes = [8, 256], strides = [1, 1]} : vector<8x1024xf32> to vector<8x256xf32>
    %cst_8 = arith.constant 5.000000e-01 : f32
    %27 = vector.broadcast %cst_8 : f32 to vector<8x256xf32>
    %28 = arith.mulf %27, %26 : vector<8x256xf32>
    %29 = math.tanh %28 : vector<8x256xf32>
    %cst_9 = arith.constant 5.000000e-01 : f32
    %30 = vector.broadcast %cst_9 : f32 to vector<8x256xf32>
    %31 = arith.mulf %30, %29 : vector<8x256xf32>
    %cst_10 = arith.constant 5.000000e-01 : f32
    %32 = vector.broadcast %cst_10 : f32 to vector<8x256xf32>
    %33 = arith.addf %31, %32 : vector<8x256xf32>
    %34 = arith.mulf %33, %25 : vector<8x256xf32>
    %35 = arith.truncf %34 : vector<8x256xf32> to vector<8x256xbf16>
    %c0_11 = arith.constant 0 : index
    %c0_12 = arith.constant 0 : index
    %36 = vector.load %arg3[%c0_11, %c0_12] : memref<256x1024xbf16, #tpu.memory_space<vmem>>, vector<256x1024xbf16>
    %cst_13 = arith.constant dense<0.000000e+00> : vector<8x1024xf32>
    %37 = tpu.matmul %35, %36, %cst_13 {dimension_numbers = #tpu.dot_dimension_numbers<[1], [0], [0], [1], [0, 0, 1, 1], [], []>} : vector<8x256xbf16>, vector<256x1024xbf16>, vector<8x1024xf32> -> vector<8x1024xf32>
    %38 = vector.extract_strided_slice %0 {offsets = [0, 1], sizes = [8, 1], strides = [1, 1]} : vector<8x12xf32> to vector<8x1xf32>
    %39 = vector.broadcast %38 : vector<8x1xf32> to vector<8x1024xf32>
    %40 = vector.broadcast %1 : vector<1x1024xf32> to vector<8x1024xf32>
    %41 = arith.mulf %39, %40 : vector<8x1024xf32>
    %42 = vector.broadcast %2 : vector<1x1024xf32> to vector<8x1024xf32>
    %43 = arith.addf %41, %42 : vector<8x1024xf32>
    %44 = arith.addf %37, %43 : vector<8x1024xf32>
    %45 = vector.extract_strided_slice %44 {offsets = [0, 0], sizes = [8, 512], strides = [1, 1]} : vector<8x1024xf32> to vector<8x512xf32>
    %cst_14 = arith.constant 5.000000e-01 : f32
    %46 = vector.broadcast %cst_14 : f32 to vector<8x512xf32>
    %47 = arith.mulf %46, %45 : vector<8x512xf32>
    %48 = math.tanh %47 : vector<8x512xf32>
    %cst_15 = arith.constant 5.000000e-01 : f32
    %49 = vector.broadcast %cst_15 : f32 to vector<8x512xf32>
    %50 = arith.mulf %49, %48 : vector<8x512xf32>
    %cst_16 = arith.constant 5.000000e-01 : f32
    %51 = vector.broadcast %cst_16 : f32 to vector<8x512xf32>
    %52 = arith.addf %50, %51 : vector<8x512xf32>
    %53 = vector.extract_strided_slice %52 {offsets = [0, 0], sizes = [8, 256], strides = [1, 1]} : vector<8x512xf32> to vector<8x256xf32>
    %54 = vector.extract_strided_slice %52 {offsets = [0, 256], sizes = [8, 256], strides = [1, 1]} : vector<8x512xf32> to vector<8x256xf32>
    %55 = vector.extract_strided_slice %44 {offsets = [0, 512], sizes = [8, 256], strides = [1, 1]} : vector<8x1024xf32> to vector<8x256xf32>
    %56 = math.tanh %55 : vector<8x256xf32>
    %57 = arith.mulf %54, %24 : vector<8x256xf32>
    %58 = arith.mulf %53, %56 : vector<8x256xf32>
    %59 = arith.addf %57, %58 : vector<8x256xf32>
    %60 = math.tanh %59 : vector<8x256xf32>
    %61 = vector.extract_strided_slice %44 {offsets = [0, 768], sizes = [8, 256], strides = [1, 1]} : vector<8x1024xf32> to vector<8x256xf32>
    %cst_17 = arith.constant 5.000000e-01 : f32
    %62 = vector.broadcast %cst_17 : f32 to vector<8x256xf32>
    %63 = arith.mulf %62, %61 : vector<8x256xf32>
    %64 = math.tanh %63 : vector<8x256xf32>
    %cst_18 = arith.constant 5.000000e-01 : f32
    %65 = vector.broadcast %cst_18 : f32 to vector<8x256xf32>
    %66 = arith.mulf %65, %64 : vector<8x256xf32>
    %cst_19 = arith.constant 5.000000e-01 : f32
    %67 = vector.broadcast %cst_19 : f32 to vector<8x256xf32>
    %68 = arith.addf %66, %67 : vector<8x256xf32>
    %69 = arith.mulf %68, %60 : vector<8x256xf32>
    %70 = arith.truncf %69 : vector<8x256xf32> to vector<8x256xbf16>
    %c0_20 = arith.constant 0 : index
    %c0_21 = arith.constant 0 : index
    %71 = vector.load %arg3[%c0_20, %c0_21] : memref<256x1024xbf16, #tpu.memory_space<vmem>>, vector<256x1024xbf16>
    %cst_22 = arith.constant dense<0.000000e+00> : vector<8x1024xf32>
    %72 = tpu.matmul %70, %71, %cst_22 {dimension_numbers = #tpu.dot_dimension_numbers<[1], [0], [0], [1], [0, 0, 1, 1], [], []>} : vector<8x256xbf16>, vector<256x1024xbf16>, vector<8x1024xf32> -> vector<8x1024xf32>
    %73 = vector.extract_strided_slice %0 {offsets = [0, 2], sizes = [8, 1], strides = [1, 1]} : vector<8x12xf32> to vector<8x1xf32>
    %74 = vector.broadcast %73 : vector<8x1xf32> to vector<8x1024xf32>
    %75 = vector.broadcast %1 : vector<1x1024xf32> to vector<8x1024xf32>
    %76 = arith.mulf %74, %75 : vector<8x1024xf32>
    %77 = vector.broadcast %2 : vector<1x1024xf32> to vector<8x1024xf32>
    %78 = arith.addf %76, %77 : vector<8x1024xf32>
    %79 = arith.addf %72, %78 : vector<8x1024xf32>
    %80 = vector.extract_strided_slice %79 {offsets = [0, 0], sizes = [8, 512], strides = [1, 1]} : vector<8x1024xf32> to vector<8x512xf32>
    %cst_23 = arith.constant 5.000000e-01 : f32
    %81 = vector.broadcast %cst_23 : f32 to vector<8x512xf32>
    %82 = arith.mulf %81, %80 : vector<8x512xf32>
    %83 = math.tanh %82 : vector<8x512xf32>
    %cst_24 = arith.constant 5.000000e-01 : f32
    %84 = vector.broadcast %cst_24 : f32 to vector<8x512xf32>
    %85 = arith.mulf %84, %83 : vector<8x512xf32>
    %cst_25 = arith.constant 5.000000e-01 : f32
    %86 = vector.broadcast %cst_25 : f32 to vector<8x512xf32>
    %87 = arith.addf %85, %86 : vector<8x512xf32>
    %88 = vector.extract_strided_slice %87 {offsets = [0, 0], sizes = [8, 256], strides = [1, 1]} : vector<8x512xf32> to vector<8x256xf32>
    %89 = vector.extract_strided_slice %87 {offsets = [0, 256], sizes = [8, 256], strides = [1, 1]} : vector<8x512xf32> to vector<8x256xf32>
    %90 = vector.extract_strided_slice %79 {offsets = [0, 512], sizes = [8, 256], strides = [1, 1]} : vector<8x1024xf32> to vector<8x256xf32>
    %91 = math.tanh %90 : vector<8x256xf32>
    %92 = arith.mulf %89, %59 : vector<8x256xf32>
    %93 = arith.mulf %88, %91 : vector<8x256xf32>
    %94 = arith.addf %92, %93 : vector<8x256xf32>
    %95 = math.tanh %94 : vector<8x256xf32>
    %96 = vector.extract_strided_slice %79 {offsets = [0, 768], sizes = [8, 256], strides = [1, 1]} : vector<8x1024xf32> to vector<8x256xf32>
    %cst_26 = arith.constant 5.000000e-01 : f32
    %97 = vector.broadcast %cst_26 : f32 to vector<8x256xf32>
    %98 = arith.mulf %97, %96 : vector<8x256xf32>
    %99 = math.tanh %98 : vector<8x256xf32>
    %cst_27 = arith.constant 5.000000e-01 : f32
    %100 = vector.broadcast %cst_27 : f32 to vector<8x256xf32>
    %101 = arith.mulf %100, %99 : vector<8x256xf32>
    %cst_28 = arith.constant 5.000000e-01 : f32
    %102 = vector.broadcast %cst_28 : f32 to vector<8x256xf32>
    %103 = arith.addf %101, %102 : vector<8x256xf32>
    %104 = arith.mulf %103, %95 : vector<8x256xf32>
    %105 = arith.truncf %104 : vector<8x256xf32> to vector<8x256xbf16>
    %c0_29 = arith.constant 0 : index
    %c0_30 = arith.constant 0 : index
    %106 = vector.load %arg3[%c0_29, %c0_30] : memref<256x1024xbf16, #tpu.memory_space<vmem>>, vector<256x1024xbf16>
    %cst_31 = arith.constant dense<0.000000e+00> : vector<8x1024xf32>
    %107 = tpu.matmul %105, %106, %cst_31 {dimension_numbers = #tpu.dot_dimension_numbers<[1], [0], [0], [1], [0, 0, 1, 1], [], []>} : vector<8x256xbf16>, vector<256x1024xbf16>, vector<8x1024xf32> -> vector<8x1024xf32>
    %108 = vector.extract_strided_slice %0 {offsets = [0, 3], sizes = [8, 1], strides = [1, 1]} : vector<8x12xf32> to vector<8x1xf32>
    %109 = vector.broadcast %108 : vector<8x1xf32> to vector<8x1024xf32>
    %110 = vector.broadcast %1 : vector<1x1024xf32> to vector<8x1024xf32>
    %111 = arith.mulf %109, %110 : vector<8x1024xf32>
    %112 = vector.broadcast %2 : vector<1x1024xf32> to vector<8x1024xf32>
    %113 = arith.addf %111, %112 : vector<8x1024xf32>
    %114 = arith.addf %107, %113 : vector<8x1024xf32>
    %115 = vector.extract_strided_slice %114 {offsets = [0, 0], sizes = [8, 512], strides = [1, 1]} : vector<8x1024xf32> to vector<8x512xf32>
    %cst_32 = arith.constant 5.000000e-01 : f32
    %116 = vector.broadcast %cst_32 : f32 to vector<8x512xf32>
    %117 = arith.mulf %116, %115 : vector<8x512xf32>
    %118 = math.tanh %117 : vector<8x512xf32>
    %cst_33 = arith.constant 5.000000e-01 : f32
    %119 = vector.broadcast %cst_33 : f32 to vector<8x512xf32>
    %120 = arith.mulf %119, %118 : vector<8x512xf32>
    %cst_34 = arith.constant 5.000000e-01 : f32
    %121 = vector.broadcast %cst_34 : f32 to vector<8x512xf32>
    %122 = arith.addf %120, %121 : vector<8x512xf32>
    %123 = vector.extract_strided_slice %122 {offsets = [0, 0], sizes = [8, 256], strides = [1, 1]} : vector<8x512xf32> to vector<8x256xf32>
    %124 = vector.extract_strided_slice %122 {offsets = [0, 256], sizes = [8, 256], strides = [1, 1]} : vector<8x512xf32> to vector<8x256xf32>
    %125 = vector.extract_strided_slice %114 {offsets = [0, 512], sizes = [8, 256], strides = [1, 1]} : vector<8x1024xf32> to vector<8x256xf32>
    %126 = math.tanh %125 : vector<8x256xf32>
    %127 = arith.mulf %124, %94 : vector<8x256xf32>
    %128 = arith.mulf %123, %126 : vector<8x256xf32>
    %129 = arith.addf %127, %128 : vector<8x256xf32>
    %130 = math.tanh %129 : vector<8x256xf32>
    %131 = vector.extract_strided_slice %114 {offsets = [0, 768], sizes = [8, 256], strides = [1, 1]} : vector<8x1024xf32> to vector<8x256xf32>
    %cst_35 = arith.constant 5.000000e-01 : f32
    %132 = vector.broadcast %cst_35 : f32 to vector<8x256xf32>
    %133 = arith.mulf %132, %131 : vector<8x256xf32>
    %134 = math.tanh %133 : vector<8x256xf32>
    %cst_36 = arith.constant 5.000000e-01 : f32
    %135 = vector.broadcast %cst_36 : f32 to vector<8x256xf32>
    %136 = arith.mulf %135, %134 : vector<8x256xf32>
    %cst_37 = arith.constant 5.000000e-01 : f32
    %137 = vector.broadcast %cst_37 : f32 to vector<8x256xf32>
    %138 = arith.addf %136, %137 : vector<8x256xf32>
    %139 = arith.mulf %138, %130 : vector<8x256xf32>
    %140 = arith.truncf %139 : vector<8x256xf32> to vector<8x256xbf16>
    %c0_38 = arith.constant 0 : index
    %c0_39 = arith.constant 0 : index
    %141 = vector.load %arg3[%c0_38, %c0_39] : memref<256x1024xbf16, #tpu.memory_space<vmem>>, vector<256x1024xbf16>
    %cst_40 = arith.constant dense<0.000000e+00> : vector<8x1024xf32>
    %142 = tpu.matmul %140, %141, %cst_40 {dimension_numbers = #tpu.dot_dimension_numbers<[1], [0], [0], [1], [0, 0, 1, 1], [], []>} : vector<8x256xbf16>, vector<256x1024xbf16>, vector<8x1024xf32> -> vector<8x1024xf32>
    %143 = vector.extract_strided_slice %0 {offsets = [0, 4], sizes = [8, 1], strides = [1, 1]} : vector<8x12xf32> to vector<8x1xf32>
    %144 = vector.broadcast %143 : vector<8x1xf32> to vector<8x1024xf32>
    %145 = vector.broadcast %1 : vector<1x1024xf32> to vector<8x1024xf32>
    %146 = arith.mulf %144, %145 : vector<8x1024xf32>
    %147 = vector.broadcast %2 : vector<1x1024xf32> to vector<8x1024xf32>
    %148 = arith.addf %146, %147 : vector<8x1024xf32>
    %149 = arith.addf %142, %148 : vector<8x1024xf32>
    %150 = vector.extract_strided_slice %149 {offsets = [0, 0], sizes = [8, 512], strides = [1, 1]} : vector<8x1024xf32> to vector<8x512xf32>
    %cst_41 = arith.constant 5.000000e-01 : f32
    %151 = vector.broadcast %cst_41 : f32 to vector<8x512xf32>
    %152 = arith.mulf %151, %150 : vector<8x512xf32>
    %153 = math.tanh %152 : vector<8x512xf32>
    %cst_42 = arith.constant 5.000000e-01 : f32
    %154 = vector.broadcast %cst_42 : f32 to vector<8x512xf32>
    %155 = arith.mulf %154, %153 : vector<8x512xf32>
    %cst_43 = arith.constant 5.000000e-01 : f32
    %156 = vector.broadcast %cst_43 : f32 to vector<8x512xf32>
    %157 = arith.addf %155, %156 : vector<8x512xf32>
    %158 = vector.extract_strided_slice %157 {offsets = [0, 0], sizes = [8, 256], strides = [1, 1]} : vector<8x512xf32> to vector<8x256xf32>
    %159 = vector.extract_strided_slice %157 {offsets = [0, 256], sizes = [8, 256], strides = [1, 1]} : vector<8x512xf32> to vector<8x256xf32>
    %160 = vector.extract_strided_slice %149 {offsets = [0, 512], sizes = [8, 256], strides = [1, 1]} : vector<8x1024xf32> to vector<8x256xf32>
    %161 = math.tanh %160 : vector<8x256xf32>
    %162 = arith.mulf %159, %129 : vector<8x256xf32>
    %163 = arith.mulf %158, %161 : vector<8x256xf32>
    %164 = arith.addf %162, %163 : vector<8x256xf32>
    %165 = math.tanh %164 : vector<8x256xf32>
    %166 = vector.extract_strided_slice %149 {offsets = [0, 768], sizes = [8, 256], strides = [1, 1]} : vector<8x1024xf32> to vector<8x256xf32>
    %cst_44 = arith.constant 5.000000e-01 : f32
    %167 = vector.broadcast %cst_44 : f32 to vector<8x256xf32>
    %168 = arith.mulf %167, %166 : vector<8x256xf32>
    %169 = math.tanh %168 : vector<8x256xf32>
    %cst_45 = arith.constant 5.000000e-01 : f32
    %170 = vector.broadcast %cst_45 : f32 to vector<8x256xf32>
    %171 = arith.mulf %170, %169 : vector<8x256xf32>
    %cst_46 = arith.constant 5.000000e-01 : f32
    %172 = vector.broadcast %cst_46 : f32 to vector<8x256xf32>
    %173 = arith.addf %171, %172 : vector<8x256xf32>
    %174 = arith.mulf %173, %165 : vector<8x256xf32>
    %175 = arith.truncf %174 : vector<8x256xf32> to vector<8x256xbf16>
    %c0_47 = arith.constant 0 : index
    %c0_48 = arith.constant 0 : index
    %176 = vector.load %arg3[%c0_47, %c0_48] : memref<256x1024xbf16, #tpu.memory_space<vmem>>, vector<256x1024xbf16>
    %cst_49 = arith.constant dense<0.000000e+00> : vector<8x1024xf32>
    %177 = tpu.matmul %175, %176, %cst_49 {dimension_numbers = #tpu.dot_dimension_numbers<[1], [0], [0], [1], [0, 0, 1, 1], [], []>} : vector<8x256xbf16>, vector<256x1024xbf16>, vector<8x1024xf32> -> vector<8x1024xf32>
    %178 = vector.extract_strided_slice %0 {offsets = [0, 5], sizes = [8, 1], strides = [1, 1]} : vector<8x12xf32> to vector<8x1xf32>
    %179 = vector.broadcast %178 : vector<8x1xf32> to vector<8x1024xf32>
    %180 = vector.broadcast %1 : vector<1x1024xf32> to vector<8x1024xf32>
    %181 = arith.mulf %179, %180 : vector<8x1024xf32>
    %182 = vector.broadcast %2 : vector<1x1024xf32> to vector<8x1024xf32>
    %183 = arith.addf %181, %182 : vector<8x1024xf32>
    %184 = arith.addf %177, %183 : vector<8x1024xf32>
    %185 = vector.extract_strided_slice %184 {offsets = [0, 0], sizes = [8, 512], strides = [1, 1]} : vector<8x1024xf32> to vector<8x512xf32>
    %cst_50 = arith.constant 5.000000e-01 : f32
    %186 = vector.broadcast %cst_50 : f32 to vector<8x512xf32>
    %187 = arith.mulf %186, %185 : vector<8x512xf32>
    %188 = math.tanh %187 : vector<8x512xf32>
    %cst_51 = arith.constant 5.000000e-01 : f32
    %189 = vector.broadcast %cst_51 : f32 to vector<8x512xf32>
    %190 = arith.mulf %189, %188 : vector<8x512xf32>
    %cst_52 = arith.constant 5.000000e-01 : f32
    %191 = vector.broadcast %cst_52 : f32 to vector<8x512xf32>
    %192 = arith.addf %190, %191 : vector<8x512xf32>
    %193 = vector.extract_strided_slice %192 {offsets = [0, 0], sizes = [8, 256], strides = [1, 1]} : vector<8x512xf32> to vector<8x256xf32>
    %194 = vector.extract_strided_slice %192 {offsets = [0, 256], sizes = [8, 256], strides = [1, 1]} : vector<8x512xf32> to vector<8x256xf32>
    %195 = vector.extract_strided_slice %184 {offsets = [0, 512], sizes = [8, 256], strides = [1, 1]} : vector<8x1024xf32> to vector<8x256xf32>
    %196 = math.tanh %195 : vector<8x256xf32>
    %197 = arith.mulf %194, %164 : vector<8x256xf32>
    %198 = arith.mulf %193, %196 : vector<8x256xf32>
    %199 = arith.addf %197, %198 : vector<8x256xf32>
    %200 = math.tanh %199 : vector<8x256xf32>
    %201 = vector.extract_strided_slice %184 {offsets = [0, 768], sizes = [8, 256], strides = [1, 1]} : vector<8x1024xf32> to vector<8x256xf32>
    %cst_53 = arith.constant 5.000000e-01 : f32
    %202 = vector.broadcast %cst_53 : f32 to vector<8x256xf32>
    %203 = arith.mulf %202, %201 : vector<8x256xf32>
    %204 = math.tanh %203 : vector<8x256xf32>
    %cst_54 = arith.constant 5.000000e-01 : f32
    %205 = vector.broadcast %cst_54 : f32 to vector<8x256xf32>
    %206 = arith.mulf %205, %204 : vector<8x256xf32>
    %cst_55 = arith.constant 5.000000e-01 : f32
    %207 = vector.broadcast %cst_55 : f32 to vector<8x256xf32>
    %208 = arith.addf %206, %207 : vector<8x256xf32>
    %209 = arith.mulf %208, %200 : vector<8x256xf32>
    %210 = arith.truncf %209 : vector<8x256xf32> to vector<8x256xbf16>
    %c0_56 = arith.constant 0 : index
    %c0_57 = arith.constant 0 : index
    %211 = vector.load %arg3[%c0_56, %c0_57] : memref<256x1024xbf16, #tpu.memory_space<vmem>>, vector<256x1024xbf16>
    %cst_58 = arith.constant dense<0.000000e+00> : vector<8x1024xf32>
    %212 = tpu.matmul %210, %211, %cst_58 {dimension_numbers = #tpu.dot_dimension_numbers<[1], [0], [0], [1], [0, 0, 1, 1], [], []>} : vector<8x256xbf16>, vector<256x1024xbf16>, vector<8x1024xf32> -> vector<8x1024xf32>
    %213 = vector.extract_strided_slice %0 {offsets = [0, 6], sizes = [8, 1], strides = [1, 1]} : vector<8x12xf32> to vector<8x1xf32>
    %214 = vector.broadcast %213 : vector<8x1xf32> to vector<8x1024xf32>
    %215 = vector.broadcast %1 : vector<1x1024xf32> to vector<8x1024xf32>
    %216 = arith.mulf %214, %215 : vector<8x1024xf32>
    %217 = vector.broadcast %2 : vector<1x1024xf32> to vector<8x1024xf32>
    %218 = arith.addf %216, %217 : vector<8x1024xf32>
    %219 = arith.addf %212, %218 : vector<8x1024xf32>
    %220 = vector.extract_strided_slice %219 {offsets = [0, 0], sizes = [8, 512], strides = [1, 1]} : vector<8x1024xf32> to vector<8x512xf32>
    %cst_59 = arith.constant 5.000000e-01 : f32
    %221 = vector.broadcast %cst_59 : f32 to vector<8x512xf32>
    %222 = arith.mulf %221, %220 : vector<8x512xf32>
    %223 = math.tanh %222 : vector<8x512xf32>
    %cst_60 = arith.constant 5.000000e-01 : f32
    %224 = vector.broadcast %cst_60 : f32 to vector<8x512xf32>
    %225 = arith.mulf %224, %223 : vector<8x512xf32>
    %cst_61 = arith.constant 5.000000e-01 : f32
    %226 = vector.broadcast %cst_61 : f32 to vector<8x512xf32>
    %227 = arith.addf %225, %226 : vector<8x512xf32>
    %228 = vector.extract_strided_slice %227 {offsets = [0, 0], sizes = [8, 256], strides = [1, 1]} : vector<8x512xf32> to vector<8x256xf32>
    %229 = vector.extract_strided_slice %227 {offsets = [0, 256], sizes = [8, 256], strides = [1, 1]} : vector<8x512xf32> to vector<8x256xf32>
    %230 = vector.extract_strided_slice %219 {offsets = [0, 512], sizes = [8, 256], strides = [1, 1]} : vector<8x1024xf32> to vector<8x256xf32>
    %231 = math.tanh %230 : vector<8x256xf32>
    %232 = arith.mulf %229, %199 : vector<8x256xf32>
    %233 = arith.mulf %228, %231 : vector<8x256xf32>
    %234 = arith.addf %232, %233 : vector<8x256xf32>
    %235 = math.tanh %234 : vector<8x256xf32>
    %236 = vector.extract_strided_slice %219 {offsets = [0, 768], sizes = [8, 256], strides = [1, 1]} : vector<8x1024xf32> to vector<8x256xf32>
    %cst_62 = arith.constant 5.000000e-01 : f32
    %237 = vector.broadcast %cst_62 : f32 to vector<8x256xf32>
    %238 = arith.mulf %237, %236 : vector<8x256xf32>
    %239 = math.tanh %238 : vector<8x256xf32>
    %cst_63 = arith.constant 5.000000e-01 : f32
    %240 = vector.broadcast %cst_63 : f32 to vector<8x256xf32>
    %241 = arith.mulf %240, %239 : vector<8x256xf32>
    %cst_64 = arith.constant 5.000000e-01 : f32
    %242 = vector.broadcast %cst_64 : f32 to vector<8x256xf32>
    %243 = arith.addf %241, %242 : vector<8x256xf32>
    %244 = arith.mulf %243, %235 : vector<8x256xf32>
    %245 = arith.truncf %244 : vector<8x256xf32> to vector<8x256xbf16>
    %c0_65 = arith.constant 0 : index
    %c0_66 = arith.constant 0 : index
    %246 = vector.load %arg3[%c0_65, %c0_66] : memref<256x1024xbf16, #tpu.memory_space<vmem>>, vector<256x1024xbf16>
    %cst_67 = arith.constant dense<0.000000e+00> : vector<8x1024xf32>
    %247 = tpu.matmul %245, %246, %cst_67 {dimension_numbers = #tpu.dot_dimension_numbers<[1], [0], [0], [1], [0, 0, 1, 1], [], []>} : vector<8x256xbf16>, vector<256x1024xbf16>, vector<8x1024xf32> -> vector<8x1024xf32>
    %248 = vector.extract_strided_slice %0 {offsets = [0, 7], sizes = [8, 1], strides = [1, 1]} : vector<8x12xf32> to vector<8x1xf32>
    %249 = vector.broadcast %248 : vector<8x1xf32> to vector<8x1024xf32>
    %250 = vector.broadcast %1 : vector<1x1024xf32> to vector<8x1024xf32>
    %251 = arith.mulf %249, %250 : vector<8x1024xf32>
    %252 = vector.broadcast %2 : vector<1x1024xf32> to vector<8x1024xf32>
    %253 = arith.addf %251, %252 : vector<8x1024xf32>
    %254 = arith.addf %247, %253 : vector<8x1024xf32>
    %255 = vector.extract_strided_slice %254 {offsets = [0, 0], sizes = [8, 512], strides = [1, 1]} : vector<8x1024xf32> to vector<8x512xf32>
    %cst_68 = arith.constant 5.000000e-01 : f32
    %256 = vector.broadcast %cst_68 : f32 to vector<8x512xf32>
    %257 = arith.mulf %256, %255 : vector<8x512xf32>
    %258 = math.tanh %257 : vector<8x512xf32>
    %cst_69 = arith.constant 5.000000e-01 : f32
    %259 = vector.broadcast %cst_69 : f32 to vector<8x512xf32>
    %260 = arith.mulf %259, %258 : vector<8x512xf32>
    %cst_70 = arith.constant 5.000000e-01 : f32
    %261 = vector.broadcast %cst_70 : f32 to vector<8x512xf32>
    %262 = arith.addf %260, %261 : vector<8x512xf32>
    %263 = vector.extract_strided_slice %262 {offsets = [0, 0], sizes = [8, 256], strides = [1, 1]} : vector<8x512xf32> to vector<8x256xf32>
    %264 = vector.extract_strided_slice %262 {offsets = [0, 256], sizes = [8, 256], strides = [1, 1]} : vector<8x512xf32> to vector<8x256xf32>
    %265 = vector.extract_strided_slice %254 {offsets = [0, 512], sizes = [8, 256], strides = [1, 1]} : vector<8x1024xf32> to vector<8x256xf32>
    %266 = math.tanh %265 : vector<8x256xf32>
    %267 = arith.mulf %264, %234 : vector<8x256xf32>
    %268 = arith.mulf %263, %266 : vector<8x256xf32>
    %269 = arith.addf %267, %268 : vector<8x256xf32>
    %270 = math.tanh %269 : vector<8x256xf32>
    %271 = vector.extract_strided_slice %254 {offsets = [0, 768], sizes = [8, 256], strides = [1, 1]} : vector<8x1024xf32> to vector<8x256xf32>
    %cst_71 = arith.constant 5.000000e-01 : f32
    %272 = vector.broadcast %cst_71 : f32 to vector<8x256xf32>
    %273 = arith.mulf %272, %271 : vector<8x256xf32>
    %274 = math.tanh %273 : vector<8x256xf32>
    %cst_72 = arith.constant 5.000000e-01 : f32
    %275 = vector.broadcast %cst_72 : f32 to vector<8x256xf32>
    %276 = arith.mulf %275, %274 : vector<8x256xf32>
    %cst_73 = arith.constant 5.000000e-01 : f32
    %277 = vector.broadcast %cst_73 : f32 to vector<8x256xf32>
    %278 = arith.addf %276, %277 : vector<8x256xf32>
    %279 = arith.mulf %278, %270 : vector<8x256xf32>
    %280 = arith.truncf %279 : vector<8x256xf32> to vector<8x256xbf16>
    %c0_74 = arith.constant 0 : index
    %c0_75 = arith.constant 0 : index
    %281 = vector.load %arg3[%c0_74, %c0_75] : memref<256x1024xbf16, #tpu.memory_space<vmem>>, vector<256x1024xbf16>
    %cst_76 = arith.constant dense<0.000000e+00> : vector<8x1024xf32>
    %282 = tpu.matmul %280, %281, %cst_76 {dimension_numbers = #tpu.dot_dimension_numbers<[1], [0], [0], [1], [0, 0, 1, 1], [], []>} : vector<8x256xbf16>, vector<256x1024xbf16>, vector<8x1024xf32> -> vector<8x1024xf32>
    %283 = vector.extract_strided_slice %0 {offsets = [0, 8], sizes = [8, 1], strides = [1, 1]} : vector<8x12xf32> to vector<8x1xf32>
    %284 = vector.broadcast %283 : vector<8x1xf32> to vector<8x1024xf32>
    %285 = vector.broadcast %1 : vector<1x1024xf32> to vector<8x1024xf32>
    %286 = arith.mulf %284, %285 : vector<8x1024xf32>
    %287 = vector.broadcast %2 : vector<1x1024xf32> to vector<8x1024xf32>
    %288 = arith.addf %286, %287 : vector<8x1024xf32>
    %289 = arith.addf %282, %288 : vector<8x1024xf32>
    %290 = vector.extract_strided_slice %289 {offsets = [0, 0], sizes = [8, 512], strides = [1, 1]} : vector<8x1024xf32> to vector<8x512xf32>
    %cst_77 = arith.constant 5.000000e-01 : f32
    %291 = vector.broadcast %cst_77 : f32 to vector<8x512xf32>
    %292 = arith.mulf %291, %290 : vector<8x512xf32>
    %293 = math.tanh %292 : vector<8x512xf32>
    %cst_78 = arith.constant 5.000000e-01 : f32
    %294 = vector.broadcast %cst_78 : f32 to vector<8x512xf32>
    %295 = arith.mulf %294, %293 : vector<8x512xf32>
    %cst_79 = arith.constant 5.000000e-01 : f32
    %296 = vector.broadcast %cst_79 : f32 to vector<8x512xf32>
    %297 = arith.addf %295, %296 : vector<8x512xf32>
    %298 = vector.extract_strided_slice %297 {offsets = [0, 0], sizes = [8, 256], strides = [1, 1]} : vector<8x512xf32> to vector<8x256xf32>
    %299 = vector.extract_strided_slice %297 {offsets = [0, 256], sizes = [8, 256], strides = [1, 1]} : vector<8x512xf32> to vector<8x256xf32>
    %300 = vector.extract_strided_slice %289 {offsets = [0, 512], sizes = [8, 256], strides = [1, 1]} : vector<8x1024xf32> to vector<8x256xf32>
    %301 = math.tanh %300 : vector<8x256xf32>
    %302 = arith.mulf %299, %269 : vector<8x256xf32>
    %303 = arith.mulf %298, %301 : vector<8x256xf32>
    %304 = arith.addf %302, %303 : vector<8x256xf32>
    %305 = math.tanh %304 : vector<8x256xf32>
    %306 = vector.extract_strided_slice %289 {offsets = [0, 768], sizes = [8, 256], strides = [1, 1]} : vector<8x1024xf32> to vector<8x256xf32>
    %cst_80 = arith.constant 5.000000e-01 : f32
    %307 = vector.broadcast %cst_80 : f32 to vector<8x256xf32>
    %308 = arith.mulf %307, %306 : vector<8x256xf32>
    %309 = math.tanh %308 : vector<8x256xf32>
    %cst_81 = arith.constant 5.000000e-01 : f32
    %310 = vector.broadcast %cst_81 : f32 to vector<8x256xf32>
    %311 = arith.mulf %310, %309 : vector<8x256xf32>
    %cst_82 = arith.constant 5.000000e-01 : f32
    %312 = vector.broadcast %cst_82 : f32 to vector<8x256xf32>
    %313 = arith.addf %311, %312 : vector<8x256xf32>
    %314 = arith.mulf %313, %305 : vector<8x256xf32>
    %315 = arith.truncf %314 : vector<8x256xf32> to vector<8x256xbf16>
    %c0_83 = arith.constant 0 : index
    %c0_84 = arith.constant 0 : index
    %316 = vector.load %arg3[%c0_83, %c0_84] : memref<256x1024xbf16, #tpu.memory_space<vmem>>, vector<256x1024xbf16>
    %cst_85 = arith.constant dense<0.000000e+00> : vector<8x1024xf32>
    %317 = tpu.matmul %315, %316, %cst_85 {dimension_numbers = #tpu.dot_dimension_numbers<[1], [0], [0], [1], [0, 0, 1, 1], [], []>} : vector<8x256xbf16>, vector<256x1024xbf16>, vector<8x1024xf32> -> vector<8x1024xf32>
    %318 = vector.extract_strided_slice %0 {offsets = [0, 9], sizes = [8, 1], strides = [1, 1]} : vector<8x12xf32> to vector<8x1xf32>
    %319 = vector.broadcast %318 : vector<8x1xf32> to vector<8x1024xf32>
    %320 = vector.broadcast %1 : vector<1x1024xf32> to vector<8x1024xf32>
    %321 = arith.mulf %319, %320 : vector<8x1024xf32>
    %322 = vector.broadcast %2 : vector<1x1024xf32> to vector<8x1024xf32>
    %323 = arith.addf %321, %322 : vector<8x1024xf32>
    %324 = arith.addf %317, %323 : vector<8x1024xf32>
    %325 = vector.extract_strided_slice %324 {offsets = [0, 0], sizes = [8, 512], strides = [1, 1]} : vector<8x1024xf32> to vector<8x512xf32>
    %cst_86 = arith.constant 5.000000e-01 : f32
    %326 = vector.broadcast %cst_86 : f32 to vector<8x512xf32>
    %327 = arith.mulf %326, %325 : vector<8x512xf32>
    %328 = math.tanh %327 : vector<8x512xf32>
    %cst_87 = arith.constant 5.000000e-01 : f32
    %329 = vector.broadcast %cst_87 : f32 to vector<8x512xf32>
    %330 = arith.mulf %329, %328 : vector<8x512xf32>
    %cst_88 = arith.constant 5.000000e-01 : f32
    %331 = vector.broadcast %cst_88 : f32 to vector<8x512xf32>
    %332 = arith.addf %330, %331 : vector<8x512xf32>
    %333 = vector.extract_strided_slice %332 {offsets = [0, 0], sizes = [8, 256], strides = [1, 1]} : vector<8x512xf32> to vector<8x256xf32>
    %334 = vector.extract_strided_slice %332 {offsets = [0, 256], sizes = [8, 256], strides = [1, 1]} : vector<8x512xf32> to vector<8x256xf32>
    %335 = vector.extract_strided_slice %324 {offsets = [0, 512], sizes = [8, 256], strides = [1, 1]} : vector<8x1024xf32> to vector<8x256xf32>
    %336 = math.tanh %335 : vector<8x256xf32>
    %337 = arith.mulf %334, %304 : vector<8x256xf32>
    %338 = arith.mulf %333, %336 : vector<8x256xf32>
    %339 = arith.addf %337, %338 : vector<8x256xf32>
    %340 = math.tanh %339 : vector<8x256xf32>
    %341 = vector.extract_strided_slice %324 {offsets = [0, 768], sizes = [8, 256], strides = [1, 1]} : vector<8x1024xf32> to vector<8x256xf32>
    %cst_89 = arith.constant 5.000000e-01 : f32
    %342 = vector.broadcast %cst_89 : f32 to vector<8x256xf32>
    %343 = arith.mulf %342, %341 : vector<8x256xf32>
    %344 = math.tanh %343 : vector<8x256xf32>
    %cst_90 = arith.constant 5.000000e-01 : f32
    %345 = vector.broadcast %cst_90 : f32 to vector<8x256xf32>
    %346 = arith.mulf %345, %344 : vector<8x256xf32>
    %cst_91 = arith.constant 5.000000e-01 : f32
    %347 = vector.broadcast %cst_91 : f32 to vector<8x256xf32>
    %348 = arith.addf %346, %347 : vector<8x256xf32>
    %349 = arith.mulf %348, %340 : vector<8x256xf32>
    %350 = arith.truncf %349 : vector<8x256xf32> to vector<8x256xbf16>
    %c0_92 = arith.constant 0 : index
    %c0_93 = arith.constant 0 : index
    %351 = vector.load %arg3[%c0_92, %c0_93] : memref<256x1024xbf16, #tpu.memory_space<vmem>>, vector<256x1024xbf16>
    %cst_94 = arith.constant dense<0.000000e+00> : vector<8x1024xf32>
    %352 = tpu.matmul %350, %351, %cst_94 {dimension_numbers = #tpu.dot_dimension_numbers<[1], [0], [0], [1], [0, 0, 1, 1], [], []>} : vector<8x256xbf16>, vector<256x1024xbf16>, vector<8x1024xf32> -> vector<8x1024xf32>
    %353 = vector.extract_strided_slice %0 {offsets = [0, 10], sizes = [8, 1], strides = [1, 1]} : vector<8x12xf32> to vector<8x1xf32>
    %354 = vector.broadcast %353 : vector<8x1xf32> to vector<8x1024xf32>
    %355 = vector.broadcast %1 : vector<1x1024xf32> to vector<8x1024xf32>
    %356 = arith.mulf %354, %355 : vector<8x1024xf32>
    %357 = vector.broadcast %2 : vector<1x1024xf32> to vector<8x1024xf32>
    %358 = arith.addf %356, %357 : vector<8x1024xf32>
    %359 = arith.addf %352, %358 : vector<8x1024xf32>
    %360 = vector.extract_strided_slice %359 {offsets = [0, 0], sizes = [8, 512], strides = [1, 1]} : vector<8x1024xf32> to vector<8x512xf32>
    %cst_95 = arith.constant 5.000000e-01 : f32
    %361 = vector.broadcast %cst_95 : f32 to vector<8x512xf32>
    %362 = arith.mulf %361, %360 : vector<8x512xf32>
    %363 = math.tanh %362 : vector<8x512xf32>
    %cst_96 = arith.constant 5.000000e-01 : f32
    %364 = vector.broadcast %cst_96 : f32 to vector<8x512xf32>
    %365 = arith.mulf %364, %363 : vector<8x512xf32>
    %cst_97 = arith.constant 5.000000e-01 : f32
    %366 = vector.broadcast %cst_97 : f32 to vector<8x512xf32>
    %367 = arith.addf %365, %366 : vector<8x512xf32>
    %368 = vector.extract_strided_slice %367 {offsets = [0, 0], sizes = [8, 256], strides = [1, 1]} : vector<8x512xf32> to vector<8x256xf32>
    %369 = vector.extract_strided_slice %367 {offsets = [0, 256], sizes = [8, 256], strides = [1, 1]} : vector<8x512xf32> to vector<8x256xf32>
    %370 = vector.extract_strided_slice %359 {offsets = [0, 512], sizes = [8, 256], strides = [1, 1]} : vector<8x1024xf32> to vector<8x256xf32>
    %371 = math.tanh %370 : vector<8x256xf32>
    %372 = arith.mulf %369, %339 : vector<8x256xf32>
    %373 = arith.mulf %368, %371 : vector<8x256xf32>
    %374 = arith.addf %372, %373 : vector<8x256xf32>
    %375 = math.tanh %374 : vector<8x256xf32>
    %376 = vector.extract_strided_slice %359 {offsets = [0, 768], sizes = [8, 256], strides = [1, 1]} : vector<8x1024xf32> to vector<8x256xf32>
    %cst_98 = arith.constant 5.000000e-01 : f32
    %377 = vector.broadcast %cst_98 : f32 to vector<8x256xf32>
    %378 = arith.mulf %377, %376 : vector<8x256xf32>
    %379 = math.tanh %378 : vector<8x256xf32>
    %cst_99 = arith.constant 5.000000e-01 : f32
    %380 = vector.broadcast %cst_99 : f32 to vector<8x256xf32>
    %381 = arith.mulf %380, %379 : vector<8x256xf32>
    %cst_100 = arith.constant 5.000000e-01 : f32
    %382 = vector.broadcast %cst_100 : f32 to vector<8x256xf32>
    %383 = arith.addf %381, %382 : vector<8x256xf32>
    %384 = arith.mulf %383, %375 : vector<8x256xf32>
    %385 = arith.truncf %384 : vector<8x256xf32> to vector<8x256xbf16>
    %c0_101 = arith.constant 0 : index
    %c0_102 = arith.constant 0 : index
    %386 = vector.load %arg3[%c0_101, %c0_102] : memref<256x1024xbf16, #tpu.memory_space<vmem>>, vector<256x1024xbf16>
    %cst_103 = arith.constant dense<0.000000e+00> : vector<8x1024xf32>
    %387 = tpu.matmul %385, %386, %cst_103 {dimension_numbers = #tpu.dot_dimension_numbers<[1], [0], [0], [1], [0, 0, 1, 1], [], []>} : vector<8x256xbf16>, vector<256x1024xbf16>, vector<8x1024xf32> -> vector<8x1024xf32>
    %388 = vector.extract_strided_slice %0 {offsets = [0, 11], sizes = [8, 1], strides = [1, 1]} : vector<8x12xf32> to vector<8x1xf32>
    %389 = vector.broadcast %388 : vector<8x1xf32> to vector<8x1024xf32>
    %390 = vector.broadcast %1 : vector<1x1024xf32> to vector<8x1024xf32>
    %391 = arith.mulf %389, %390 : vector<8x1024xf32>
    %392 = vector.broadcast %2 : vector<1x1024xf32> to vector<8x1024xf32>
    %393 = arith.addf %391, %392 : vector<8x1024xf32>
    %394 = arith.addf %387, %393 : vector<8x1024xf32>
    %395 = vector.extract_strided_slice %394 {offsets = [0, 0], sizes = [8, 512], strides = [1, 1]} : vector<8x1024xf32> to vector<8x512xf32>
    %cst_104 = arith.constant 5.000000e-01 : f32
    %396 = vector.broadcast %cst_104 : f32 to vector<8x512xf32>
    %397 = arith.mulf %396, %395 : vector<8x512xf32>
    %398 = math.tanh %397 : vector<8x512xf32>
    %cst_105 = arith.constant 5.000000e-01 : f32
    %399 = vector.broadcast %cst_105 : f32 to vector<8x512xf32>
    %400 = arith.mulf %399, %398 : vector<8x512xf32>
    %cst_106 = arith.constant 5.000000e-01 : f32
    %401 = vector.broadcast %cst_106 : f32 to vector<8x512xf32>
    %402 = arith.addf %400, %401 : vector<8x512xf32>
    %403 = vector.extract_strided_slice %402 {offsets = [0, 0], sizes = [8, 256], strides = [1, 1]} : vector<8x512xf32> to vector<8x256xf32>
    %404 = vector.extract_strided_slice %402 {offsets = [0, 256], sizes = [8, 256], strides = [1, 1]} : vector<8x512xf32> to vector<8x256xf32>
    %405 = vector.extract_strided_slice %394 {offsets = [0, 512], sizes = [8, 256], strides = [1, 1]} : vector<8x1024xf32> to vector<8x256xf32>
    %406 = math.tanh %405 : vector<8x256xf32>
    %407 = arith.mulf %404, %374 : vector<8x256xf32>
    %408 = arith.mulf %403, %406 : vector<8x256xf32>
    %409 = arith.addf %407, %408 : vector<8x256xf32>
    %410 = math.tanh %409 : vector<8x256xf32>
    %411 = vector.extract_strided_slice %394 {offsets = [0, 768], sizes = [8, 256], strides = [1, 1]} : vector<8x1024xf32> to vector<8x256xf32>
    %cst_107 = arith.constant 5.000000e-01 : f32
    %412 = vector.broadcast %cst_107 : f32 to vector<8x256xf32>
    %413 = arith.mulf %412, %411 : vector<8x256xf32>
    %414 = math.tanh %413 : vector<8x256xf32>
    %cst_108 = arith.constant 5.000000e-01 : f32
    %415 = vector.broadcast %cst_108 : f32 to vector<8x256xf32>
    %416 = arith.mulf %415, %414 : vector<8x256xf32>
    %cst_109 = arith.constant 5.000000e-01 : f32
    %417 = vector.broadcast %cst_109 : f32 to vector<8x256xf32>
    %418 = arith.addf %416, %417 : vector<8x256xf32>
    %419 = arith.mulf %418, %410 : vector<8x256xf32>
    %c0_110 = arith.constant 0 : index
    %c0_111 = arith.constant 0 : index
    %420 = vector.load %arg4[%c0_110, %c0_111] : memref<256x64xf32, #tpu.memory_space<vmem>>, vector<256x64xf32>
    %cst_112 = arith.constant dense<0.000000e+00> : vector<8x64xf32>
    %421 = tpu.matmul %419, %420, %cst_112 {dimension_numbers = #tpu.dot_dimension_numbers<[1], [0], [0], [1], [0, 0, 1, 1], [], []>} : vector<8x256xf32>, vector<256x64xf32>, vector<8x64xf32> -> vector<8x64xf32>
    %c0_113 = arith.constant 0 : index
    %c0_114 = arith.constant 0 : index
    %422 = vector.load %arg5[%c0_113, %c0_114] : memref<1x64xf32, #tpu.memory_space<vmem>>, vector<1x64xf32>
    %423 = vector.broadcast %422 : vector<1x64xf32> to vector<8x64xf32>
    %424 = arith.addf %421, %423 : vector<8x64xf32>
    %cst_115 = arith.constant 0.000000e+00 : f32
    %425 = vector.broadcast %cst_115 : f32 to vector<8x64xf32>
    %426 = arith.cmpf ogt, %424, %425 : vector<8x64xf32>
    %cst_116 = arith.constant 0.00999999977 : f32
    %427 = vector.broadcast %cst_116 : f32 to vector<8x64xf32>
    %428 = arith.mulf %427, %424 : vector<8x64xf32>
    %429 = arith.select %426, %424, %428 : vector<8x64xi1>, vector<8x64xf32>
    %c0_117 = arith.constant 0 : index
    %c0_118 = arith.constant 0 : index
    %430 = vector.load %arg6[%c0_117, %c0_118] : memref<8x64xf32, #tpu.memory_space<vmem>>, vector<8x64xf32>
    tpu.vector_store %arg6[%c0_117, %c0_118], %429 {strides = array<i32>} : memref<8x64xf32, #tpu.memory_space<vmem>>, vector<8x64xf32>,
    return
  }
}

</mosaic_0001>

<llo_original>
// kernel: encoder_forward.1
$region0: #{encoder_forward.1}
  #allocation0 [shape = 'u32[]', space=smem, size = 0x4, offset = 0x4, fixed_abs, tag = 'smem constant byte address 0x4 - core index']
  #allocation1 [shape = 'u32[144,128]{1,0:T(1,128)}', space=vmem, size = 0x12000, scoped, tag = 'internal scratch']
  %s0 = inlined_call_operand.vmem [shape: f32[8,12], index: 0, kind: input, shape index: {}]
  %s1 = inlined_call_operand.vmem [shape: f32[1,1024], index: 1, kind: input, shape index: {}]
  %s2 = inlined_call_operand.vmem [shape: f32[1,1024], index: 2, kind: input, shape index: {}]
  %s3 = inlined_call_operand.hbm [shape: bf16[256,1024], index: 3, kind: input, shape index: {}]
  %s4 = inlined_call_operand.vmem [shape: f32[256,64], index: 4, kind: input, shape index: {}]
  %s5 = inlined_call_operand.vmem [shape: f32[1,64], index: 5, kind: input, shape index: {}]
  %s6 = inlined_call_operand.hbm [shape: f32[8,64], index: 6, kind: output, shape index: {}]
  %s7 = sld [smem:[#allocation0]]
  $region38: #{encoder_forward.1} parent=0
    _
  %s9 = ssub.s32 1, %s7
  %s10 = scalar_select 0, %s9, %s7
  $region1: #{encoder_forward.1} parent=0
    #allocation2 [shape = 'u8[524288]{0}', space=vmem, size = 0x80000, scoped, tag = 'input window, operand 3, single buffered']
    #allocation3 [shape = 's32[1]{0}', space=sflag, size = 0x4, scoped, tag = 'scoped memory for encoder_forward.1']
    #allocation4 [shape = 's32[1]{0}', space=sflag, size = 0x4, scoped, tag = 'scoped memory for encoder_forward.1']
    #allocation5 [shape = 'u8[4096]{0}', space=vmem, size = 0x1000, scoped, tag = 'output window, operand 0, single buffered']
    %11 = vsyncpa [#allocation3], 0
    %12 = vsyncpa [#allocation4], 0
    // Predicated region
    $region2: #{encoder_forward.1} parent=1 // pred_check
      _
    $region3: #{encoder_forward.1} parent=1 // pred_check_branch
      %14 = sbr.rel (0) target = $region5
    $region4: #{encoder_forward.1} parent=1 // pred_region
      _
    $region5: #{encoder_forward.1} parent=1 // pred_fallthru
      _
    // Predicated region
    $region6: #{encoder_forward.1} parent=1 // pred_check
      _
    $region7: #{encoder_forward.1} parent=1 // pred_check_branch
      %16 = sbr.rel (0) target = $region9
    $region8: #{encoder_forward.1} parent=1 // pred_region
      _
    $region9: #{encoder_forward.1} parent=1 // pred_fallthru
      _
    // Predicated region
    $region10: #{encoder_forward.1} parent=1 // pred_check
      _
    $region11: #{encoder_forward.1} parent=1 // pred_check_branch
      %18 = sbr.rel (0) target = $region13
    $region12: #{encoder_forward.1} parent=1 // pred_region
      _
    $region13: #{encoder_forward.1} parent=1 // pred_fallthru
      _
    // Predicated region
    $region14: #{encoder_forward.1} parent=1 // pred_check
      _
    $region15: #{encoder_forward.1} parent=1 // pred_check_branch
      %20 = sbr.rel (0) target = $region17
    $region16: #{encoder_forward.1} parent=1 // pred_region
      %s22 = ssub.s32 16384, 16384
      %23 = vsyncadd [#allocation3], %s22
      %s24 = sshll.u32 [#allocation2], 4
      %s25 = int_to_ptr.vmem [resolvable:$true] %s24
      %30 = dma.hbm_to_vmem [thread:$0]  %s3, 16384, %s25, [#allocation3], 512, 512, 32
    $region17: #{encoder_forward.1} parent=1 // pred_fallthru
      _
    // Predicated region
    $region18: #{encoder_forward.1} parent=1 // pred_check
      _
    $region19: #{encoder_forward.1} parent=1 // pred_check_branch
      %32 = sbr.rel (0) target = $region21
    $region20: #{encoder_forward.1} parent=1 // pred_region
      _
    $region21: #{encoder_forward.1} parent=1 // pred_fallthru
      _
    // Predicated region
    $region22: #{encoder_forward.1} parent=1 // pred_check
      _
    $region23: #{encoder_forward.1} parent=1 // pred_check_branch
      %34 = sbr.rel (0) target = $region25
    $region24: #{encoder_forward.1} parent=1 // pred_region
      _
    $region25: #{encoder_forward.1} parent=1 // pred_fallthru
      _
    // Predicated region
    $region26: #{encoder_forward.1} parent=1 // pred_check
      _
    $region27: #{encoder_forward.1} parent=1 // pred_check_branch
      %36 = sbr.rel (0) target = $region29
    $region28: #{encoder_forward.1} parent=1 // pred_region
      %37 = dma.done [#allocation3], 16384
    $region29: #{encoder_forward.1} parent=1 // pred_fallthru
      _
    %v38 = vld [vmem:[%s0] sm:$0xff]
    %v39 = vld [vmem:[%s1] sm:$0xff]
    %v40 = vld [vmem:[%s2] sm:$0xff]
    %42 = vset.pattern.permute.xlu0 0
    %43 = vperm.xlu0 %42, %v38
    %v44 = vpop.permute.xlu0 %43
    %v47 = vlaneseq
    %v48 = vshrl.u32 %v47, 7
    %v49 = vsub.s32 0, %v48
    %v50 = vrot.slane %v39, %v49
    %v51 = vlaneseq
    %v52 = vshrl.u32 %v51, 7
    %v53 = vsub.s32 1, %v52
    %v54 = vrot.slane %v39, %v53
    %v55 = vlaneseq
    %v56 = vshrl.u32 %v55, 7
    %v57 = vsub.s32 2, %v56
    %v58 = vrot.slane %v39, %v57
    %v59 = vlaneseq
    %v60 = vshrl.u32 %v59, 7
    %v61 = vsub.s32 3, %v60
    %v62 = vrot.slane %v39, %v61
    %v63 = vlaneseq
    %v64 = vshrl.u32 %v63, 7
    %v65 = vsub.s32 4, %v64
    %v66 = vrot.slane %v39, %v65
    %v67 = vlaneseq
    %v68 = vshrl.u32 %v67, 7
    %v69 = vsub.s32 5, %v68
    %v70 = vrot.slane %v39, %v69
    %v71 = vlaneseq
    %v72 = vshrl.u32 %v71, 7
    %v73 = vsub.s32 6, %v72
    %v74 = vrot.slane %v39, %v73
    %v75 = vlaneseq
    %v76 = vshrl.u32 %v75, 7
    %v77 = vsub.s32 7, %v76
    %v78 = vrot.slane %v39, %v77
    %v87 = vmul.f32 %v44, %v50
    %v88 = vmul.f32 %v44, %v54
    %v89 = vmul.f32 %v44, %v58
    %v90 = vmul.f32 %v44, %v62
    %v91 = vmul.f32 %v44, %v66
    %v92 = vmul.f32 %v44, %v70
    %v93 = vmul.f32 %v44, %v74
    %v94 = vmul.f32 %v44, %v78
    %v96 = vlaneseq
    %v97 = vshrl.u32 %v96, 7
    %v98 = vsub.s32 0, %v97
    %v99 = vrot.slane %v40, %v98
    %v100 = vlaneseq
    %v101 = vshrl.u32 %v100, 7
    %v102 = vsub.s32 1, %v101
    %v103 = vrot.slane %v40, %v102
    %v104 = vlaneseq
    %v105 = vshrl.u32 %v104, 7
    %v106 = vsub.s32 2, %v105
    %v107 = vrot.slane %v40, %v106
    %v108 = vlaneseq
    %v109 = vshrl.u32 %v108, 7
    %v110 = vsub.s32 3, %v109
    %v111 = vrot.slane %v40, %v110
    %v112 = vlaneseq
    %v113 = vshrl.u32 %v112, 7
    %v114 = vsub.s32 4, %v113
    %v115 = vrot.slane %v40, %v114
    %v116 = vlaneseq
    %v117 = vshrl.u32 %v116, 7
    %v118 = vsub.s32 5, %v117
    %v119 = vrot.slane %v40, %v118
    %v120 = vlaneseq
    %v121 = vshrl.u32 %v120, 7
    %v122 = vsub.s32 6, %v121
    %v123 = vrot.slane %v40, %v122
    %v124 = vlaneseq
    %v125 = vshrl.u32 %v124, 7
    %v126 = vsub.s32 7, %v125
    %v127 = vrot.slane %v40, %v126
    %v136 = vadd.f32 %v87, %v99
    %v137 = vadd.f32 %v88, %v103
    %v138 = vadd.f32 %v89, %v107
    %v139 = vadd.f32 %v90, %v111
    %v140 = vadd.f32 %v91, %v115
    %v141 = vadd.f32 %v92, %v119
    %v142 = vadd.f32 %v93, %v123
    %v143 = vadd.f32 %v94, %v127
    %v144 = vmul.f32 %v136, 0.5
    %v145 = vmul.f32 %v137, 0.5
    %v146 = vmul.f32 %v138, 0.5
    %v147 = vmul.f32 %v139, 0.5
    %v148 = vtanh.pop %v144
    %v149 = vtanh.pop %v145
    %v150 = vtanh.pop %v146
    %v151 = vtanh.pop %v147
    %v152 = vmul.f32 %v148, 0.5
    %v153 = vmul.f32 %v149, 0.5
    %v154 = vmul.f32 %v150, 0.5
    %v155 = vmul.f32 %v151, 0.5
    %v156 = vadd.f32 %v152, 0.5
    %v157 = vadd.f32 %v153, 0.5
    %v158 = vadd.f32 %v154, 0.5
    %v159 = vadd.f32 %v155, 0.5
    %v160 = vtanh.pop %v140
    %v161 = vtanh.pop %v141
    %v162 = vmul.f32 %v158, 0.0
    %v163 = vmul.f32 %v159, 0.0
    %v164 = vmul.f32 %v156, %v160
    %v165 = vmul.f32 %v157, %v161
    %v166 = vadd.f32 %v162, %v164
    %v167 = vadd.f32 %v163, %v165
    %v168 = vtanh.pop %v166
    %v169 = vtanh.pop %v167
    %v170 = vmul.f32 %v142, 0.5
    %v171 = vmul.f32 %v143, 0.5
    %v172 = vtanh.pop %v170
    %v173 = vtanh.pop %v171
    %v174 = vmul.f32 %v172, 0.5
    %v175 = vmul.f32 %v173, 0.5
    %v176 = vadd.f32 %v174, 0.5
    %v177 = vadd.f32 %v175, 0.5
    %v178 = vmul.f32 %v176, %v168
    %v179 = vmul.f32 %v177, %v169
    %v180 = vpack.c.bf16 %v178, %v178
    %v181 = vpack.c.bf16 %v179, %v179
    %v182 = vld [vmem:[#allocation2] sm:$0xff]
    %v183 = vld [vmem:[#allocation2 + $0x8] sm:$0xff]
    %v184 = vld [vmem:[#allocation2 + $0x10] sm:$0xff]
    %v185 = vld [vmem:[#allocation2 + $0x18] sm:$0xff]
    %v186 = vld [vmem:[#allocation2 + $0x20] sm:$0xff]
    %v187 = vld [vmem:[#allocation2 + $0x28] sm:$0xff]
    %v188 = vld [vmem:[#allocation2 + $0x30] sm:$0xff]
    %v189 = vld [vmem:[#allocation2 + $0x38] sm:$0xff]
    %v190 = vld [vmem:[#allocation2 + $0x40] sm:$0xff]
    %v191 = vld [vmem:[#allocation2 + $0x48] sm:$0xff]
    %v192 = vld [vmem:[#allocation2 + $0x50] sm:$0xff]
    %v193 = vld [vmem:[#allocation2 + $0x58] sm:$0xff]
    %v194 = vld [vmem:[#allocation2 + $0x60] sm:$0xff]
    %v195 = vld [vmem:[#allocation2 + $0x68] sm:$0xff]
    %v196 = vld [vmem:[#allocation2 + $0x70] sm:$0xff]
    %v197 = vld [vmem:[#allocation2 + $0x78] sm:$0xff]
    %v198 = vld [vmem:[#allocation2 + $0x80] sm:$0xff]
    %v199 = vld [vmem:[#allocation2 + $0x88] sm:$0xff]
    %v200 = vld [vmem:[#allocation2 + $0x90] sm:$0xff]
    %v201 = vld [vmem:[#allocation2 + $0x98] sm:$0xff]
    %v202 = vld [vmem:[#allocation2 + $0xa0] sm:$0xff]
    %v203 = vld [vmem:[#allocation2 + $0xa8] sm:$0xff]
    %v204 = vld [vmem:[#allocation2 + $0xb0] sm:$0xff]
    %v205 = vld [vmem:[#allocation2 + $0xb8] sm:$0xff]
    %v206 = vld [vmem:[#allocation2 + $0xc0] sm:$0xff]
    %v207 = vld [vmem:[#allocation2 + $0xc8] sm:$0xff]
    %v208 = vld [vmem:[#allocation2 + $0xd0] sm:$0xff]
    %v209 = vld [vmem:[#allocation2 + $0xd8] sm:$0xff]
    %v210 = vld [vmem:[#allocation2 + $0xe0] sm:$0xff]
    %v211 = vld [vmem:[#allocation2 + $0xe8] sm:$0xff]
    %v212 = vld [vmem:[#allocation2 + $0xf0] sm:$0xff]
    %v213 = vld [vmem:[#allocation2 + $0xf8] sm:$0xff]
    %v214 = vld [vmem:[#allocation2 + $0x100] sm:$0xff]
    %v215 = vld [vmem:[#allocation2 + $0x108] sm:$0xff]
    %v216 = vld [vmem:[#allocation2 + $0x110] sm:$0xff]
    %v217 = vld [vmem:[#allocation2 + $0x118] sm:$0xff]
    %v218 = vld [vmem:[#allocation2 + $0x120] sm:$0xff]
    %v219 = vld [vmem:[#allocation2 + $0x128] sm:$0xff]
    %v220 = vld [vmem:[#allocation2 + $0x130] sm:$0xff]
    %v221 = vld [vmem:[#allocation2 + $0x138] sm:$0xff]
    %v222 = vld [vmem:[#allocation2 + $0x140] sm:$0xff]
    %v223 = vld [vmem:[#allocation2 + $0x148] sm:$0xff]
    %v224 = vld [vmem:[#allocation2 + $0x150] sm:$0xff]
    %v225 = vld [vmem:[#allocation2 + $0x158] sm:$0xff]
    %v226 = vld [vmem:[#allocation2 + $0x160] sm:$0xff]
    %v227 = vld [vmem:[#allocation2 + $0x168] sm:$0xff]
    %v228 = vld [vmem:[#allocation2 + $0x170] sm:$0xff]
    %v229 = vld [vmem:[#allocation2 + $0x178] sm:$0xff]
    %v230 = vld [vmem:[#allocation2 + $0x180] sm:$0xff]
    %v231 = vld [vmem:[#allocation2 + $0x188] sm:$0xff]
    %v232 = vld [vmem:[#allocation2 + $0x190] sm:$0xff]
    %v233 = vld [vmem:[#allocation2 + $0x198] sm:$0xff]
    %v234 = vld [vmem:[#allocation2 + $0x1a0] sm:$0xff]
    %v235 = vld [vmem:[#allocation2 + $0x1a8] sm:$0xff]
    %v236 = vld [vmem:[#allocation2 + $0x1b0] sm:$0xff]
    %v237 = vld [vmem:[#allocation2 + $0x1b8] sm:$0xff]
    %v238 = vld [vmem:[#allocation2 + $0x1c0] sm:$0xff]
    %v239 = vld [vmem:[#allocation2 + $0x1c8] sm:$0xff]
    %v240 = vld [vmem:[#allocation2 + $0x1d0] sm:$0xff]
    %v241 = vld [vmem:[#allocation2 + $0x1d8] sm:$0xff]
    %v242 = vld [vmem:[#allocation2 + $0x1e0] sm:$0xff]
    %v243 = vld [vmem:[#allocation2 + $0x1e8] sm:$0xff]
    %v244 = vld [vmem:[#allocation2 + $0x1f0] sm:$0xff]
    %v245 = vld [vmem:[#allocation2 + $0x1f8] sm:$0xff]
    %v246 = vld [vmem:[#allocation2 + $0x200] sm:$0xff]
    %v247 = vld [vmem:[#allocation2 + $0x208] sm:$0xff]
    %v248 = vld [vmem:[#allocation2 + $0x210] sm:$0xff]
    %v249 = vld [vmem:[#allocation2 + $0x218] sm:$0xff]
    %v250 = vld [vmem:[#allocation2 + $0x220] sm:$0xff]
    %v251 = vld [vmem:[#allocation2 + $0x228] sm:$0xff]
    %v252 = vld [vmem:[#allocation2 + $0x230] sm:$0xff]
    %v253 = vld [vmem:[#allocation2 + $0x238] sm:$0xff]
    %v254 = vld [vmem:[#allocation2 + $0x240] sm:$0xff]
    %v255 = vld [vmem:[#allocation2 + $0x248] sm:$0xff]
    %v256 = vld [vmem:[#allocation2 + $0x250] sm:$0xff]
    %v257 = vld [vmem:[#allocation2 + $0x258] sm:$0xff]
    %v258 = vld [vmem:[#allocation2 + $0x260] sm:$0xff]
    %v259 = vld [vmem:[#allocation2 + $0x268] sm:$0xff]
    %v260 = vld [vmem:[#allocation2 + $0x270] sm:$0xff]
    %v261 = vld [vmem:[#allocation2 + $0x278] sm:$0xff]
    %v262 = vld [vmem:[#allocation2 + $0x280] sm:$0xff]
    %v263 = vld [vmem:[#allocation2 + $0x288] sm:$0xff]
    %v264 = vld [vmem:[#allocation2 + $0x290] sm:$0xff]
    %v265 = vld [vmem:[#allocation2 + $0x298] sm:$0xff]
    %v266 = vld [vmem:[#allocation2 + $0x2a0] sm:$0xff]
    %v267 = vld [vmem:[#allocation2 + $0x2a8] sm:$0xff]
    %v268 = vld [vmem:[#allocation2 + $0x2b0] sm:$0xff]
    %v269 = vld [vmem:[#allocation2 + $0x2b8] sm:$0xff]
    %v270 = vld [vmem:[#allocation2 + $0x2c0] sm:$0xff]
    %v271 = vld [vmem:[#allocation2 + $0x2c8] sm:$0xff]
    %v272 = vld [vmem:[#allocation2 + $0x2d0] sm:$0xff]
    %v273 = vld [vmem:[#allocation2 + $0x2d8] sm:$0xff]
    %v274 = vld [vmem:[#allocation2 + $0x2e0] sm:$0xff]
    %v275 = vld [vmem:[#allocation2 + $0x2e8] sm:$0xff]
    %v276 = vld [vmem:[#allocation2 + $0x2f0] sm:$0xff]
    %v277 = vld [vmem:[#allocation2 + $0x2f8] sm:$0xff]
    %v278 = vld [vmem:[#allocation2 + $0x300] sm:$0xff]
    %v279 = vld [vmem:[#allocation2 + $0x308] sm:$0xff]
    %v280 = vld [vmem:[#allocation2 + $0x310] sm:$0xff]
    %v281 = vld [vmem:[#allocation2 + $0x318] sm:$0xff]
    %v282 = vld [vmem:[#allocation2 + $0x320] sm:$0xff]
    %v283 = vld [vmem:[#allocation2 + $0x328] sm:$0xff]
    %v284 = vld [vmem:[#allocation2 + $0x330] sm:$0xff]
    %v285 = vld [vmem:[#allocation2 + $0x338] sm:$0xff]
    %v286 = vld [vmem:[#allocation2 + $0x340] sm:$0xff]
    %v287 = vld [vmem:[#allocation2 + $0x348] sm:$0xff]
    %v288 = vld [vmem:[#allocation2 + $0x350] sm:$0xff]
    %v289 = vld [vmem:[#allocation2 + $0x358] sm:$0xff]
    %v290 = vld [vmem:[#allocation2 + $0x360] sm:$0xff]
    %v291 = vld [vmem:[#allocation2 + $0x368] sm:$0xff]
    %v292 = vld [vmem:[#allocation2 + $0x370] sm:$0xff]
    %v293 = vld [vmem:[#allocation2 + $0x378] sm:$0xff]
    %v294 = vld [vmem:[#allocation2 + $0x380] sm:$0xff]
    %v295 = vld [vmem:[#allocation2 + $0x388] sm:$0xff]
    %v296 = vld [vmem:[#allocation2 + $0x390] sm:$0xff]
    %v297 = vld [vmem:[#allocation2 + $0x398] sm:$0xff]
    %v298 = vld [vmem:[#allocation2 + $0x3a0] sm:$0xff]
    %v299 = vld [vmem:[#allocation2 + $0x3a8] sm:$0xff]
    %v300 = vld [vmem:[#allocation2 + $0x3b0] sm:$0xff]
    %v301 = vld [vmem:[#allocation2 + $0x3b8] sm:$0xff]
    %v302 = vld [vmem:[#allocation2 + $0x3c0] sm:$0xff]
    %v303 = vld [vmem:[#allocation2 + $0x3c8] sm:$0xff]
    %v304 = vld [vmem:[#allocation2 + $0x3d0] sm:$0xff]
    %v305 = vld [vmem:[#allocation2 + $0x3d8] sm:$0xff]
    %v306 = vld [vmem:[#allocation2 + $0x3e0] sm:$0xff]
    %v307 = vld [vmem:[#allocation2 + $0x3e8] sm:$0xff]
    %v308 = vld [vmem:[#allocation2 + $0x3f0] sm:$0xff]
    %v309 = vld [vmem:[#allocation2 + $0x3f8] sm:$0xff]
    %310 = vset.pattern.permute.xlu0 1
    %311 = vperm.xlu0 %310, %v38
    %v312 = vpop.permute.xlu0 %311
    %v314 = vmul.f32 %v312, %v50
    %v315 = vmul.f32 %v312, %v54
    %v316 = vmul.f32 %v312, %v58
    %v317 = vmul.f32 %v312, %v62
    %v318 = vmul.f32 %v312, %v66
    %v319 = vmul.f32 %v312, %v70
    %v320 = vmul.f32 %v312, %v74
    %v321 = vmul.f32 %v312, %v78
    %v322 = vadd.f32 %v314, %v99
    %v323 = vadd.f32 %v315, %v103
    %v324 = vadd.f32 %v316, %v107
    %v325 = vadd.f32 %v317, %v111
    %v326 = vadd.f32 %v318, %v115
    %v327 = vadd.f32 %v319, %v119
    %v328 = vadd.f32 %v320, %v123
    %v329 = vadd.f32 %v321, %v127
    %v458 = vunpack.c.l.b16 %v182
    %v459 = vunpack.c.h.b16 %v182
    %v460 = vunpack.c.l.b16 %v183
    %v461 = vunpack.c.h.b16 %v183
    %v462 = vunpack.c.l.b16 %v184
    %v463 = vunpack.c.h.b16 %v184
    %v464 = vunpack.c.l.b16 %v185
    %v465 = vunpack.c.h.b16 %v185
    %v466 = vunpack.c.l.b16 %v186
    %v467 = vunpack.c.h.b16 %v186
    %v468 = vunpack.c.l.b16 %v187
    %v469 = vunpack.c.h.b16 %v187
    %v470 = vunpack.c.l.b16 %v188
    %v471 = vunpack.c.h.b16 %v188
    %v472 = vunpack.c.l.b16 %v189
    %v473 = vunpack.c.h.b16 %v189
    %v474 = vunpack.c.l.b16 %v190
    %v475 = vunpack.c.h.b16 %v190
    %v476 = vunpack.c.l.b16 %v191
    %v477 = vunpack.c.h.b16 %v191
    %v478 = vunpack.c.l.b16 %v192
    %v479 = vunpack.c.h.b16 %v192
    %v480 = vunpack.c.l.b16 %v193
    %v481 = vunpack.c.h.b16 %v193
    %v482 = vunpack.c.l.b16 %v194
    %v483 = vunpack.c.h.b16 %v194
    %v484 = vunpack.c.l.b16 %v195
    %v485 = vunpack.c.h.b16 %v195
    %v486 = vunpack.c.l.b16 %v196
    %v487 = vunpack.c.h.b16 %v196
    %v488 = vunpack.c.l.b16 %v197
    %v489 = vunpack.c.h.b16 %v197
    %v490 = vunpack.c.l.b16 %v198
    %v491 = vunpack.c.h.b16 %v198
    %v492 = vunpack.c.l.b16 %v199
    %v493 = vunpack.c.h.b16 %v199
    %v494 = vunpack.c.l.b16 %v200
    %v495 = vunpack.c.h.b16 %v200
    %v496 = vunpack.c.l.b16 %v201
    %v497 = vunpack.c.h.b16 %v201
    %v498 = vunpack.c.l.b16 %v202
    %v499 = vunpack.c.h.b16 %v202
    %v500 = vunpack.c.l.b16 %v203
    %v501 = vunpack.c.h.b16 %v203
    %v502 = vunpack.c.l.b16 %v204
    %v503 = vunpack.c.h.b16 %v204
    %v504 = vunpack.c.l.b16 %v205
    %v505 = vunpack.c.h.b16 %v205
    %v506 = vunpack.c.l.b16 %v206
    %v507 = vunpack.c.h.b16 %v206
    %v508 = vunpack.c.l.b16 %v207
    %v509 = vunpack.c.h.b16 %v207
    %v510 = vunpack.c.l.b16 %v208
    %v511 = vunpack.c.h.b16 %v208
    %v512 = vunpack.c.l.b16 %v209
    %v513 = vunpack.c.h.b16 %v209
    %v514 = vunpack.c.l.b16 %v210
    %v515 = vunpack.c.h.b16 %v210
    %v516 = vunpack.c.l.b16 %v211
    %v517 = vunpack.c.h.b16 %v211
    %v518 = vunpack.c.l.b16 %v212
    %v519 = vunpack.c.h.b16 %v212
    %v520 = vunpack.c.l.b16 %v213
    %v521 = vunpack.c.h.b16 %v213
    %v522 = vunpack.c.l.b16 %v214
    %v523 = vunpack.c.h.b16 %v214
    %v524 = vunpack.c.l.b16 %v215
    %v525 = vunpack.c.h.b16 %v215
    %v526 = vunpack.c.l.b16 %v216
    %v527 = vunpack.c.h.b16 %v216
    %v528 = vunpack.c.l.b16 %v217
    %v529 = vunpack.c.h.b16 %v217
    %v530 = vunpack.c.l.b16 %v218
    %v531 = vunpack.c.h.b16 %v218
    %v532 = vunpack.c.l.b16 %v219
    %v533 = vunpack.c.h.b16 %v219
    %v534 = vunpack.c.l.b16 %v220
    %v535 = vunpack.c.h.b16 %v220
    %v536 = vunpack.c.l.b16 %v221
    %v537 = vunpack.c.h.b16 %v221
    %v538 = vunpack.c.l.b16 %v222
    %v539 = vunpack.c.h.b16 %v222
    %v540 = vunpack.c.l.b16 %v223
    %v541 = vunpack.c.h.b16 %v223
    %v542 = vunpack.c.l.b16 %v224
    %v543 = vunpack.c.h.b16 %v224
    %v544 = vunpack.c.l.b16 %v225
    %v545 = vunpack.c.h.b16 %v225
    %v546 = vunpack.c.l.b16 %v226
    %v547 = vunpack.c.h.b16 %v226
    %v548 = vunpack.c.l.b16 %v227
    %v549 = vunpack.c.h.b16 %v227
    %v550 = vunpack.c.l.b16 %v228
    %v551 = vunpack.c.h.b16 %v228
    %v552 = vunpack.c.l.b16 %v229
    %v553 = vunpack.c.h.b16 %v229
    %v554 = vunpack.c.l.b16 %v230
    %v555 = vunpack.c.h.b16 %v230
    %v556 = vunpack.c.l.b16 %v231
    %v557 = vunpack.c.h.b16 %v231
    %v558 = vunpack.c.l.b16 %v232
    %v559 = vunpack.c.h.b16 %v232
    %v560 = vunpack.c.l.b16 %v233
    %v561 = vunpack.c.h.b16 %v233
    %v562 = vunpack.c.l.b16 %v234
    %v563 = vunpack.c.h.b16 %v234
    %v564 = vunpack.c.l.b16 %v235
    %v565 = vunpack.c.h.b16 %v235
    %v566 = vunpack.c.l.b16 %v236
    %v567 = vunpack.c.h.b16 %v236
    %v568 = vunpack.c.l.b16 %v237
    %v569 = vunpack.c.h.b16 %v237
    %v570 = vunpack.c.l.b16 %v238
    %v571 = vunpack.c.h.b16 %v238
    %v572 = vunpack.c.l.b16 %v239
    %v573 = vunpack.c.h.b16 %v239
    %v574 = vunpack.c.l.b16 %v240
    %v575 = vunpack.c.h.b16 %v240
    %v576 = vunpack.c.l.b16 %v241
    %v577 = vunpack.c.h.b16 %v241
    %v578 = vunpack.c.l.b16 %v242
    %v579 = vunpack.c.h.b16 %v242
    %v580 = vunpack.c.l.b16 %v243
    %v581 = vunpack.c.h.b16 %v243
    %v582 = vunpack.c.l.b16 %v244
    %v583 = vunpack.c.h.b16 %v244
    %v584 = vunpack.c.l.b16 %v245
    %v585 = vunpack.c.h.b16 %v245
    %v586 = vunpack.c.l.b16 %v246
    %v587 = vunpack.c.h.b16 %v246
    %v588 = vunpack.c.l.b16 %v247
    %v589 = vunpack.c.h.b16 %v247
    %v590 = vunpack.c.l.b16 %v248
    %v591 = vunpack.c.h.b16 %v248
    %v592 = vunpack.c.l.b16 %v249
    %v593 = vunpack.c.h.b16 %v249
    %v594 = vunpack.c.l.b16 %v250
    %v595 = vunpack.c.h.b16 %v250
    %v596 = vunpack.c.l.b16 %v251
    %v597 = vunpack.c.h.b16 %v251
    %v598 = vunpack.c.l.b16 %v252
    %v599 = vunpack.c.h.b16 %v252
    %v600 = vunpack.c.l.b16 %v253
    %v601 = vunpack.c.h.b16 %v253
    %v602 = vunpack.c.l.b16 %v254
    %v603 = vunpack.c.h.b16 %v254
    %v604 = vunpack.c.l.b16 %v255
    %v605 = vunpack.c.h.b16 %v255
    %v606 = vunpack.c.l.b16 %v256
    %v607 = vunpack.c.h.b16 %v256
    %v608 = vunpack.c.l.b16 %v257
    %v609 = vunpack.c.h.b16 %v257
    %v610 = vunpack.c.l.b16 %v258
    %v611 = vunpack.c.h.b16 %v258
    %v612 = vunpack.c.l.b16 %v259
    %v613 = vunpack.c.h.b16 %v259
    %v614 = vunpack.c.l.b16 %v260
    %v615 = vunpack.c.h.b16 %v260
    %v616 = vunpack.c.l.b16 %v261
    %v617 = vunpack.c.h.b16 %v261
    %v618 = vunpack.c.l.b16 %v262
    %v619 = vunpack.c.h.b16 %v262
    %v620 = vunpack.c.l.b16 %v263
    %v621 = vunpack.c.h.b16 %v263
    %v622 = vunpack.c.l.b16 %v264
    %v623 = vunpack.c.h.b16 %v264
    %v624 = vunpack.c.l.b16 %v265
    %v625 = vunpack.c.h.b16 %v265
    %v626 = vunpack.c.l.b16 %v266
    %v627 = vunpack.c.h.b16 %v266
    %v628 = vunpack.c.l.b16 %v267
    %v629 = vunpack.c.h.b16 %v267
    %v630 = vunpack.c.l.b16 %v268
    %v631 = vunpack.c.h.b16 %v268
    %v632 = vunpack.c.l.b16 %v269
    %v633 = vunpack.c.h.b16 %v269
    %v634 = vunpack.c.l.b16 %v270
    %v635 = vunpack.c.h.b16 %v270
    %v636 = vunpack.c.l.b16 %v271
    %v637 = vunpack.c.h.b16 %v271
    %v638 = vunpack.c.l.b16 %v272
    %v639 = vunpack.c.h.b16 %v272
    %v640 = vunpack.c.l.b16 %v273
    %v641 = vunpack.c.h.b16 %v273
    %v642 = vunpack.c.l.b16 %v274
    %v643 = vunpack.c.h.b16 %v274
    %v644 = vunpack.c.l.b16 %v275
    %v645 = vunpack.c.h.b16 %v275
    %v646 = vunpack.c.l.b16 %v276
    %v647 = vunpack.c.h.b16 %v276
    %v648 = vunpack.c.l.b16 %v277
    %v649 = vunpack.c.h.b16 %v277
    %v650 = vunpack.c.l.b16 %v278
    %v651 = vunpack.c.h.b16 %v278
    %v652 = vunpack.c.l.b16 %v279
    %v653 = vunpack.c.h.b16 %v279
    %v654 = vunpack.c.l.b16 %v280
    %v655 = vunpack.c.h.b16 %v280
    %v656 = vunpack.c.l.b16 %v281
    %v657 = vunpack.c.h.b16 %v281
    %v658 = vunpack.c.l.b16 %v282
    %v659 = vunpack.c.h.b16 %v282
    %v660 = vunpack.c.l.b16 %v283
    %v661 = vunpack.c.h.b16 %v283
    %v662 = vunpack.c.l.b16 %v284
    %v663 = vunpack.c.h.b16 %v284
    %v664 = vunpack.c.l.b16 %v285
    %v665 = vunpack.c.h.b16 %v285
    %v666 = vunpack.c.l.b16 %v286
    %v667 = vunpack.c.h.b16 %v286
    %v668 = vunpack.c.l.b16 %v287
    %v669 = vunpack.c.h.b16 %v287
    %v670 = vunpack.c.l.b16 %v288
    %v671 = vunpack.c.h.b16 %v288
    %v672 = vunpack.c.l.b16 %v289
    %v673 = vunpack.c.h.b16 %v289
    %v674 = vunpack.c.l.b16 %v290
    %v675 = vunpack.c.h.b16 %v290
    %v676 = vunpack.c.l.b16 %v291
    %v677 = vunpack.c.h.b16 %v291
    %v678 = vunpack.c.l.b16 %v292
    %v679 = vunpack.c.h.b16 %v292
    %v680 = vunpack.c.l.b16 %v293
    %v681 = vunpack.c.h.b16 %v293
    %v682 = vunpack.c.l.b16 %v294
    %v683 = vunpack.c.h.b16 %v294
    %v684 = vunpack.c.l.b16 %v295
    %v685 = vunpack.c.h.b16 %v295
    %v686 = vunpack.c.l.b16 %v296
    %v687 = vunpack.c.h.b16 %v296
    %v688 = vunpack.c.l.b16 %v297
    %v689 = vunpack.c.h.b16 %v297
    %v690 = vunpack.c.l.b16 %v298
    %v691 = vunpack.c.h.b16 %v298
    %v692 = vunpack.c.l.b16 %v299
    %v693 = vunpack.c.h.b16 %v299
    %v694 = vunpack.c.l.b16 %v300
    %v695 = vunpack.c.h.b16 %v300
    %v696 = vunpack.c.l.b16 %v301
    %v697 = vunpack.c.h.b16 %v301
    %v698 = vunpack.c.l.b16 %v302
    %v699 = vunpack.c.h.b16 %v302
    %v700 = vunpack.c.l.b16 %v303
    %v701 = vunpack.c.h.b16 %v303
    %v702 = vunpack.c.l.b16 %v304
    %v703 = vunpack.c.h.b16 %v304
    %v704 = vunpack.c.l.b16 %v305
    %v705 = vunpack.c.h.b16 %v305
    %v706 = vunpack.c.l.b16 %v306
    %v707 = vunpack.c.h.b16 %v306
    %v708 = vunpack.c.l.b16 %v307
    %v709 = vunpack.c.h.b16 %v307
    %v710 = vunpack.c.l.b16 %v308
    %v711 = vunpack.c.h.b16 %v308
    %v712 = vunpack.c.l.b16 %v309
    %v713 = vunpack.c.h.b16 %v309
    %v714 = vpack.c.b16 %v466, %v458
    %v715 = vpack.c.b16 %v467, %v459
    %v716 = vpack.c.b16 %v468, %v460
    %v717 = vpack.c.b16 %v469, %v461
    %v718 = vpack.c.b16 %v470, %v462
    %v719 = vpack.c.b16 %v471, %v463
    %v720 = vpack.c.b16 %v472, %v464
    %v721 = vpack.c.b16 %v473, %v465
    %v722 = vpack.c.b16 %v482, %v474
    %v723 = vpack.c.b16 %v483, %v475
    %v724 = vpack.c.b16 %v484, %v476
    %v725 = vpack.c.b16 %v485, %v477
    %v726 = vpack.c.b16 %v486, %v478
    %v727 = vpack.c.b16 %v487, %v479
    %v728 = vpack.c.b16 %v488, %v480
    %v729 = vpack.c.b16 %v489, %v481
    %v730 = vpack.c.b16 %v498, %v490
    %v731 = vpack.c.b16 %v499, %v491
    %v732 = vpack.c.b16 %v500, %v492
    %v733 = vpack.c.b16 %v501, %v493
    %v734 = vpack.c.b16 %v502, %v494
    %v735 = vpack.c.b16 %v503, %v495
    %v736 = vpack.c.b16 %v504, %v496
    %v737 = vpack.c.b16 %v505, %v497
    %v738 = vpack.c.b16 %v514, %v506
    %v739 = vpack.c.b16 %v515, %v507
    %v740 = vpack.c.b16 %v516, %v508
    %v741 = vpack.c.b16 %v517, %v509
    %v742 = vpack.c.b16 %v518, %v510
    %v743 = vpack.c.b16 %v519, %v511
    %v744 = vpack.c.b16 %v520, %v512
    %v745 = vpack.c.b16 %v521, %v513
    %v746 = vpack.c.b16 %v530, %v522
    %v747 = vpack.c.b16 %v531, %v523
    %v748 = vpack.c.b16 %v532, %v524
    %v749 = vpack.c.b16 %v533, %v525
    %v750 = vpack.c.b16 %v534, %v526
    %v751 = vpack.c.b16 %v535, %v527
    %v752 = vpack.c.b16 %v536, %v528
    %v753 = vpack.c.b16 %v537, %v529
    %v754 = vpack.c.b16 %v546, %v538
    %v755 = vpack.c.b16 %v547, %v539
    %v756 = vpack.c.b16 %v548, %v540
    %v757 = vpack.c.b16 %v549, %v541
    %v758 = vpack.c.b16 %v550, %v542
    %v759 = vpack.c.b16 %v551, %v543
    %v760 = vpack.c.b16 %v552, %v544
    %v761 = vpack.c.b16 %v553, %v545
    %v762 = vpack.c.b16 %v562, %v554
    %v763 = vpack.c.b16 %v563, %v555
    %v764 = vpack.c.b16 %v564, %v556
    %v765 = vpack.c.b16 %v565, %v557
    %v766 = vpack.c.b16 %v566, %v558
    %v767 = vpack.c.b16 %v567, %v559
    %v768 = vpack.c.b16 %v568, %v560
    %v769 = vpack.c.b16 %v569, %v561
    %v770 = vpack.c.b16 %v578, %v570
    %v771 = vpack.c.b16 %v579, %v571
    %v772 = vpack.c.b16 %v580, %v572
    %v773 = vpack.c.b16 %v581, %v573
    %v774 = vpack.c.b16 %v582, %v574
    %v775 = vpack.c.b16 %v583, %v575
    %v776 = vpack.c.b16 %v584, %v576
    %v777 = vpack.c.b16 %v585, %v577
    %v778 = vpack.c.b16 %v594, %v586
    %v779 = vpack.c.b16 %v595, %v587
    %v780 = vpack.c.b16 %v596, %v588
    %v781 = vpack.c.b16 %v597, %v589
    %v782 = vpack.c.b16 %v598, %v590
    %v783 = vpack.c.b16 %v599, %v591
    %v784 = vpack.c.b16 %v600, %v592
    %v785 = vpack.c.b16 %v601, %v593
    %v786 = vpack.c.b16 %v610, %v602
    %v787 = vpack.c.b16 %v611, %v603
    %v788 = vpack.c.b16 %v612, %v604
    %v789 = vpack.c.b16 %v613, %v605
    %v790 = vpack.c.b16 %v614, %v606
    %v791 = vpack.c.b16 %v615, %v607
    %v792 = vpack.c.b16 %v616, %v608
    %v793 = vpack.c.b16 %v617, %v609
    %v794 = vpack.c.b16 %v626, %v618
    %v795 = vpack.c.b16 %v627, %v619
    %v796 = vpack.c.b16 %v628, %v620
    %v797 = vpack.c.b16 %v629, %v621
    %v798 = vpack.c.b16 %v630, %v622
    %v799 = vpack.c.b16 %v631, %v623
    %v800 = vpack.c.b16 %v632, %v624
    %v801 = vpack.c.b16 %v633, %v625
    %v802 = vpack.c.b16 %v642, %v634
    %v803 = vpack.c.b16 %v643, %v635
    %v804 = vpack.c.b16 %v644, %v636
    %v805 = vpack.c.b16 %v645, %v637
    %v806 = vpack.c.b16 %v646, %v638
    %v807 = vpack.c.b16 %v647, %v639
    %v808 = vpack.c.b16 %v648, %v640
    %v809 = vpack.c.b16 %v649, %v641
    %v810 = vpack.c.b16 %v658, %v650
    %v811 = vpack.c.b16 %v659, %v651
    %v812 = vpack.c.b16 %v660, %v652
    %v813 = vpack.c.b16 %v661, %v653
    %v814 = vpack.c.b16 %v662, %v654
    %v815 = vpack.c.b16 %v663, %v655
    %v816 = vpack.c.b16 %v664, %v656
    %v817 = vpack.c.b16 %v665, %v657
    %v818 = vpack.c.b16 %v674, %v666
    %v819 = vpack.c.b16 %v675, %v667
    %v820 = vpack.c.b16 %v676, %v668
    %v821 = vpack.c.b16 %v677, %v669
    %v822 = vpack.c.b16 %v678, %v670
    %v823 = vpack.c.b16 %v679, %v671
    %v824 = vpack.c.b16 %v680, %v672
    %v825 = vpack.c.b16 %v681, %v673
    %v826 = vpack.c.b16 %v690, %v682
    %v827 = vpack.c.b16 %v691, %v683
    %v828 = vpack.c.b16 %v692, %v684
    %v829 = vpack.c.b16 %v693, %v685
    %v830 = vpack.c.b16 %v694, %v686
    %v831 = vpack.c.b16 %v695, %v687
    %v832 = vpack.c.b16 %v696, %v688
    %v833 = vpack.c.b16 %v697, %v689
    %v834 = vpack.c.b16 %v706, %v698
    %v835 = vpack.c.b16 %v707, %v699
    %v836 = vpack.c.b16 %v708, %v700
    %v837 = vpack.c.b16 %v709, %v701
    %v838 = vpack.c.b16 %v710, %v702
    %v839 = vpack.c.b16 %v711, %v703
    %v840 = vpack.c.b16 %v712, %v704
    %v841 = vpack.c.b16 %v713, %v705
    %970 = vmatprep.subr.bf16.mxu0 %v771
    %971 = vmatpush1.bf16.msra.mxu0 %v770
    %972 = vmatprep.subr.bf16.mxu0 %v763
    %973 = vmatpush1.bf16.msra.mxu0 %v762
    %974 = vmatprep.subr.bf16.mxu0 %v755
    %975 = vmatpush1.bf16.msra.mxu0 %v754
    %976 = vmatprep.subr.bf16.mxu0 %v747
    %977 = vmatpush1.bf16.msra.mxu0 %v746
    %978 = vmatprep.subr.bf16.mxu0 %v739
    %979 = vmatpush1.bf16.msra.mxu0 %v738
    %980 = vmatprep.subr.bf16.mxu0 %v731
    %981 = vmatpush1.bf16.msra.mxu0 %v730
    %982 = vmatprep.subr.bf16.mxu0 %v723
    %983 = vmatpush1.bf16.msra.mxu0 %v722
    %984 = vmatprep.subr.bf16.mxu0 %v715
    %985 = vmatpush1.bf16.msra.mxu0 %v714
    %986 = vmatprep.subr.bf16.mxu0 %v835
    %987 = vmatpush2.bf16.msra.mxu0 %v834
    %988 = vmatprep.subr.bf16.mxu0 %v827
    %989 = vmatpush2.bf16.msra.mxu0 %v826
    %990 = vmatprep.subr.bf16.mxu0 %v819
    %991 = vmatpush2.bf16.msra.mxu0 %v818
    %992 = vmatprep.subr.bf16.mxu0 %v811
    %993 = vmatpush2.bf16.msra.mxu0 %v810
    %994 = vmatprep.subr.bf16.mxu0 %v803
    %995 = vmatpush2.bf16.msra.mxu0 %v802
    %996 = vmatprep.subr.bf16.mxu0 %v795
    %997 = vmatpush2.bf16.msra.mxu0 %v794
    %998 = vmatprep.subr.bf16.mxu0 %v787
    %999 = vmatpush2.bf16.msra.mxu0 %v786
    %1000 = vmatprep.subr.bf16.mxu0 %v779
    %1001 = vmatpush2.bf16.msra.mxu0 %v778
    %1002 = vmatprep.mubr.bf16.mxu0 %v181
    %1003 = vmatmul.mubr.bf16.gmra.mxu0 %v180
    %v1004 = vpop.f32.mrf.mxu0
    %v1005 = vadd.f32 %v322, %v1004
    %v1006 = vpop.f32.mrf.mxu0
    %v1007 = vadd.f32 %v323, %v1006
    %v1008 = vpop.f32.mrf.mxu0
    %v1009 = vpop.f32.mrf.mxu0
    %1010 = vdwg.mxu0
    %1011 = vmatprep.subr.bf16.mxu0 %v773
    %1012 = vmatpush1.bf16.msra.mxu0 %v772
    %1013 = vmatprep.subr.bf16.mxu0 %v765
    %1014 = vmatpush1.bf16.msra.mxu0 %v764
    %1015 = vmatprep.subr.bf16.mxu0 %v757
    %1016 = vmatpush1.bf16.msra.mxu0 %v756
    %1017 = vmatprep.subr.bf16.mxu0 %v749
    %1018 = vmatpush1.bf16.msra.mxu0 %v748
    %1019 = vmatprep.subr.bf16.mxu0 %v741
    %1020 = vmatpush1.bf16.msra.mxu0 %v740
    %1021 = vmatprep.subr.bf16.mxu0 %v733
    %1022 = vmatpush1.bf16.msra.mxu0 %v732
    %1023 = vmatprep.subr.bf16.mxu0 %v725
    %1024 = vmatpush1.bf16.msra.mxu0 %v724
    %1025 = vmatprep.subr.bf16.mxu0 %v717
    %1026 = vmatpush1.bf16.msra.mxu0 %v716
    %1027 = vmatprep.subr.bf16.mxu0 %v837
    %1028 = vmatpush2.bf16.msra.mxu0 %v836
    %1029 = vmatprep.subr.bf16.mxu0 %v829
    %1030 = vmatpush2.bf16.msra.mxu0 %v828
    %1031 = vmatprep.subr.bf16.mxu0 %v821
    %1032 = vmatpush2.bf16.msra.mxu0 %v820
    %1033 = vmatprep.subr.bf16.mxu0 %v813
    %1034 = vmatpush2.bf16.msra.mxu0 %v812
    %1035 = vmatprep.subr.bf16.mxu0 %v805
    %1036 = vmatpush2.bf16.msra.mxu0 %v804
    %1037 = vmatprep.subr.bf16.mxu0 %v797
    %1038 = vmatpush2.bf16.msra.mxu0 %v796
    %1039 = vmatprep.subr.bf16.mxu0 %v789
    %1040 = vmatpush2.bf16.msra.mxu0 %v788
    %1041 = vmatprep.subr.bf16.mxu0 %v781
    %1042 = vmatpush2.bf16.msra.mxu0 %v780
    %1043 = vmatprep.mubr.bf16.mxu0 %v181
    %1044 = vmatmul.mubr.bf16.gmra.mxu0 %v180
    %v1045 = vpop.f32.mrf.mxu0
    %v1046 = vadd.f32 %v324, %v1045
    %v1047 = vpop.f32.mrf.mxu0
    %v1048 = vadd.f32 %v325, %v1047
    %v1049 = vpop.f32.mrf.mxu0
    %v1050 = vpop.f32.mrf.mxu0
    %1051 = vdwg.mxu0
    %1052 = vmatprep.subr.bf16.mxu0 %v775
    %1053 = vmatpush1.bf16.msra.mxu0 %v774
    %1054 = vmatprep.subr.bf16.mxu0 %v767
    %1055 = vmatpush1.bf16.msra.mxu0 %v766
    %1056 = vmatprep.subr.bf16.mxu0 %v759
    %1057 = vmatpush1.bf16.msra.mxu0 %v758
    %1058 = vmatprep.subr.bf16.mxu0 %v751
    %1059 = vmatpush1.bf16.msra.mxu0 %v750
    %1060 = vmatprep.subr.bf16.mxu0 %v743
    %1061 = vmatpush1.bf16.msra.mxu0 %v742
    %1062 = vmatprep.subr.bf16.mxu0 %v735
    %1063 = vmatpush1.bf16.msra.mxu0 %v734
    %1064 = vmatprep.subr.bf16.mxu0 %v727
    %1065 = vmatpush1.bf16.msra.mxu0 %v726
    %1066 = vmatprep.subr.bf16.mxu0 %v719
    %1067 = vmatpush1.bf16.msra.mxu0 %v718
    %1068 = vmatprep.subr.bf16.mxu0 %v839
    %1069 = vmatpush2.bf16.msra.mxu0 %v838
    %1070 = vmatprep.subr.bf16.mxu0 %v831
    %1071 = vmatpush2.bf16.msra.mxu0 %v830
    %1072 = vmatprep.subr.bf16.mxu0 %v823
    %1073 = vmatpush2.bf16.msra.mxu0 %v822
    %1074 = vmatprep.subr.bf16.mxu0 %v815
    %1075 = vmatpush2.bf16.msra.mxu0 %v814
    %1076 = vmatprep.subr.bf16.mxu0 %v807
    %1077 = vmatpush2.bf16.msra.mxu0 %v806
    %1078 = vmatprep.subr.bf16.mxu0 %v799
    %1079 = vmatpush2.bf16.msra.mxu0 %v798
    %1080 = vmatprep.subr.bf16.mxu0 %v791
    %1081 = vmatpush2.bf16.msra.mxu0 %v790
    %1082 = vmatprep.subr.bf16.mxu0 %v783
    %1083 = vmatpush2.bf16.msra.mxu0 %v782
    %1084 = vmatprep.mubr.bf16.mxu0 %v181
    %1085 = vmatmul.mubr.bf16.gmra.mxu0 %v180
    %v1086 = vpop.f32.mrf.mxu0
    %v1087 = vadd.f32 %v326, %v1086
    %v1088 = vpop.f32.mrf.mxu0
    %v1089 = vadd.f32 %v327, %v1088
    %v1090 = vpop.f32.mrf.mxu0
    %v1091 = vpop.f32.mrf.mxu0
    %1092 = vdwg.mxu0
    %1093 = vmatprep.subr.bf16.mxu0 %v777
    %1094 = vmatpush1.bf16.msra.mxu0 %v776
    %1095 = vmatprep.subr.bf16.mxu0 %v769
    %1096 = vmatpush1.bf16.msra.mxu0 %v768
    %1097 = vmatprep.subr.bf16.mxu0 %v761
    %1098 = vmatpush1.bf16.msra.mxu0 %v760
    %1099 = vmatprep.subr.bf16.mxu0 %v753
    %1100 = vmatpush1.bf16.msra.mxu0 %v752
    %1101 = vmatprep.subr.bf16.mxu0 %v745
    %1102 = vmatpush1.bf16.msra.mxu0 %v744
    %1103 = vmatprep.subr.bf16.mxu0 %v737
    %1104 = vmatpush1.bf16.msra.mxu0 %v736
    %1105 = vmatprep.subr.bf16.mxu0 %v729
    %1106 = vmatpush1.bf16.msra.mxu0 %v728
    %1107 = vmatprep.subr.bf16.mxu0 %v721
    %1108 = vmatpush1.bf16.msra.mxu0 %v720
    %1109 = vmatprep.subr.bf16.mxu0 %v841
    %1110 = vmatpush2.bf16.msra.mxu0 %v840
    %1111 = vmatprep.subr.bf16.mxu0 %v833
    %1112 = vmatpush2.bf16.msra.mxu0 %v832
    %1113 = vmatprep.subr.bf16.mxu0 %v825
    %1114 = vmatpush2.bf16.msra.mxu0 %v824
    %1115 = vmatprep.subr.bf16.mxu0 %v817
    %1116 = vmatpush2.bf16.msra.mxu0 %v816
    %1117 = vmatprep.subr.bf16.mxu0 %v809
    %1118 = vmatpush2.bf16.msra.mxu0 %v808
    %1119 = vmatprep.subr.bf16.mxu0 %v801
    %1120 = vmatpush2.bf16.msra.mxu0 %v800
    %1121 = vmatprep.subr.bf16.mxu0 %v793
    %1122 = vmatpush2.bf16.msra.mxu0 %v792
    %1123 = vmatprep.subr.bf16.mxu0 %v785
    %1124 = vmatpush2.bf16.msra.mxu0 %v784
    %1125 = vmatprep.mubr.bf16.mxu0 %v181
    %1126 = vmatmul.mubr.bf16.gmra.mxu0 %v180
    %v1127 = vpop.f32.mrf.mxu0
    %v1128 = vadd.f32 %v328, %v1127
    %v1129 = vpop.f32.mrf.mxu0
    %v1130 = vadd.f32 %v329, %v1129
    %v1131 = vpop.f32.mrf.mxu0
    %v1132 = vpop.f32.mrf.mxu0
    %1133 = vdwg.mxu0
    %v1134 = vmul.f32 %v1005, 0.5
    %v1135 = vmul.f32 %v1007, 0.5
    %v1136 = vmul.f32 %v1046, 0.5
    %v1137 = vmul.f32 %v1048, 0.5
    %v1138 = vtanh.pop %v1134
    %v1139 = vtanh.pop %v1135
    %v1140 = vtanh.pop %v1136
    %v1141 = vtanh.pop %v1137
    %v1142 = vmul.f32 %v1138, 0.5
    %v1143 = vmul.f32 %v1139, 0.5
    %v1144 = vmul.f32 %v1140, 0.5
    %v1145 = vmul.f32 %v1141, 0.5
    %v1146 = vadd.f32 %v1142, 0.5
    %v1147 = vadd.f32 %v1143, 0.5
    %v1148 = vadd.f32 %v1144, 0.5
    %v1149 = vadd.f32 %v1145, 0.5
    %v1150 = vtanh.pop %v1087
    %v1151 = vtanh.pop %v1089
    %v1152 = vmul.f32 %v1148, %v166
    %v1153 = vmul.f32 %v1149, %v167
    %v1154 = vmul.f32 %v1146, %v1150
    %v1155 = vmul.f32 %v1147, %v1151
    %v1156 = vadd.f32 %v1152, %v1154
    %v1157 = vadd.f32 %v1153, %v1155
    %v1158 = vtanh.pop %v1156
    %v1159 = vtanh.pop %v1157
    %v1160 = vmul.f32 %v1128, 0.5
    %v1161 = vmul.f32 %v1130, 0.5
    %v1162 = vtanh.pop %v1160
    %v1163 = vtanh.pop %v1161
    %v1164 = vmul.f32 %v1162, 0.5
    %v1165 = vmul.f32 %v1163, 0.5
    %v1166 = vadd.f32 %v1164, 0.5
    %v1167 = vadd.f32 %v1165, 0.5
    %v1168 = vmul.f32 %v1166, %v1158
    %v1169 = vmul.f32 %v1167, %v1159
    %v1170 = vpack.c.bf16 %v1168, %v1168
    %v1171 = vpack.c.bf16 %v1169, %v1169
    %1172 = vset.pattern.permute.xlu0 2
    %1173 = vperm.xlu0 %1172, %v38
    %v1174 = vpop.permute.xlu0 %1173
    %v1176 = vmul.f32 %v1174, %v50
    %v1177 = vmul.f32 %v1174, %v54
    %v1178 = vmul.f32 %v1174, %v58
    %v1179 = vmul.f32 %v1174, %v62
    %v1180 = vmul.f32 %v1174, %v66
    %v1181 = vmul.f32 %v1174, %v70
    %v1182 = vmul.f32 %v1174, %v74
    %v1183 = vmul.f32 %v1174, %v78
    %v1184 = vadd.f32 %v1176, %v99
    %v1185 = vadd.f32 %v1177, %v103
    %v1186 = vadd.f32 %v1178, %v107
    %v1187 = vadd.f32 %v1179, %v111
    %v1188 = vadd.f32 %v1180, %v115
    %v1189 = vadd.f32 %v1181, %v119
    %v1190 = vadd.f32 %v1182, %v123
    %v1191 = vadd.f32 %v1183, %v127
    %1192 = vmatprep.subr.bf16.mxu0 %v771
    %1193 = vmatpush1.bf16.msra.mxu0 %v770
    %1194 = vmatprep.subr.bf16.mxu0 %v763
    %1195 = vmatpush1.bf16.msra.mxu0 %v762
    %1196 = vmatprep.subr.bf16.mxu0 %v755
    %1197 = vmatpush1.bf16.msra.mxu0 %v754
    %1198 = vmatprep.subr.bf16.mxu0 %v747
    %1199 = vmatpush1.bf16.msra.mxu0 %v746
    %1200 = vmatprep.subr.bf16.mxu0 %v739
    %1201 = vmatpush1.bf16.msra.mxu0 %v738
    %1202 = vmatprep.subr.bf16.mxu0 %v731
    %1203 = vmatpush1.bf16.msra.mxu0 %v730
    %1204 = vmatprep.subr.bf16.mxu0 %v723
    %1205 = vmatpush1.bf16.msra.mxu0 %v722
    %1206 = vmatprep.subr.bf16.mxu0 %v715
    %1207 = vmatpush1.bf16.msra.mxu0 %v714
    %1208 = vmatprep.subr.bf16.mxu0 %v835
    %1209 = vmatpush2.bf16.msra.mxu0 %v834
    %1210 = vmatprep.subr.bf16.mxu0 %v827
    %1211 = vmatpush2.bf16.msra.mxu0 %v826
    %1212 = vmatprep.subr.bf16.mxu0 %v819
    %1213 = vmatpush2.bf16.msra.mxu0 %v818
    %1214 = vmatprep.subr.bf16.mxu0 %v811
    %1215 = vmatpush2.bf16.msra.mxu0 %v810
    %1216 = vmatprep.subr.bf16.mxu0 %v803
    %1217 = vmatpush2.bf16.msra.mxu0 %v802
    %1218 = vmatprep.subr.bf16.mxu0 %v795
    %1219 = vmatpush2.bf16.msra.mxu0 %v794
    %1220 = vmatprep.subr.bf16.mxu0 %v787
    %1221 = vmatpush2.bf16.msra.mxu0 %v786
    %1222 = vmatprep.subr.bf16.mxu0 %v779
    %1223 = vmatpush2.bf16.msra.mxu0 %v778
    %1224 = vmatprep.mubr.bf16.mxu0 %v1171
    %1225 = vmatmul.mubr.bf16.gmra.mxu0 %v1170
    %v1226 = vpop.f32.mrf.mxu0
    %v1227 = vadd.f32 %v1184, %v1226
    %v1228 = vpop.f32.mrf.mxu0
    %v1229 = vadd.f32 %v1185, %v1228
    %v1230 = vpop.f32.mrf.mxu0
    %v1231 = vpop.f32.mrf.mxu0
    %1232 = vdwg.mxu0
    %1233 = vmatprep.subr.bf16.mxu0 %v773
    %1234 = vmatpush1.bf16.msra.mxu0 %v772
    %1235 = vmatprep.subr.bf16.mxu0 %v765
    %1236 = vmatpush1.bf16.msra.mxu0 %v764
    %1237 = vmatprep.subr.bf16.mxu0 %v757
    %1238 = vmatpush1.bf16.msra.mxu0 %v756
    %1239 = vmatprep.subr.bf16.mxu0 %v749
    %1240 = vmatpush1.bf16.msra.mxu0 %v748
    %1241 = vmatprep.subr.bf16.mxu0 %v741
    %1242 = vmatpush1.bf16.msra.mxu0 %v740
    %1243 = vmatprep.subr.bf16.mxu0 %v733
    %1244 = vmatpush1.bf16.msra.mxu0 %v732
    %1245 = vmatprep.subr.bf16.mxu0 %v725
    %1246 = vmatpush1.bf16.msra.mxu0 %v724
    %1247 = vmatprep.subr.bf16.mxu0 %v717
    %1248 = vmatpush1.bf16.msra.mxu0 %v716
    %1249 = vmatprep.subr.bf16.mxu0 %v837
    %1250 = vmatpush2.bf16.msra.mxu0 %v836
    %1251 = vmatprep.subr.bf16.mxu0 %v829
    %1252 = vmatpush2.bf16.msra.mxu0 %v828
    %1253 = vmatprep.subr.bf16.mxu0 %v821
    %1254 = vmatpush2.bf16.msra.mxu0 %v820
    %1255 = vmatprep.subr.bf16.mxu0 %v813
    %1256 = vmatpush2.bf16.msra.mxu0 %v812
    %1257 = vmatprep.subr.bf16.mxu0 %v805
    %1258 = vmatpush2.bf16.msra.mxu0 %v804
    %1259 = vmatprep.subr.bf16.mxu0 %v797
    %1260 = vmatpush2.bf16.msra.mxu0 %v796
    %1261 = vmatprep.subr.bf16.mxu0 %v789
    %1262 = vmatpush2.bf16.msra.mxu0 %v788
    %1263 = vmatprep.subr.bf16.mxu0 %v781
    %1264 = vmatpush2.bf16.msra.mxu0 %v780
    %1265 = vmatprep.mubr.bf16.mxu0 %v1171
    %1266 = vmatmul.mubr.bf16.gmra.mxu0 %v1170
    %v1267 = vpop.f32.mrf.mxu0
    %v1268 = vadd.f32 %v1186, %v1267
    %v1269 = vpop.f32.mrf.mxu0
    %v1270 = vadd.f32 %v1187, %v1269
    %v1271 = vpop.f32.mrf.mxu0
    %v1272 = vpop.f32.mrf.mxu0
    %1273 = vdwg.mxu0
    %1274 = vmatprep.subr.bf16.mxu0 %v775
    %1275 = vmatpush1.bf16.msra.mxu0 %v774
    %1276 = vmatprep.subr.bf16.mxu0 %v767
    %1277 = vmatpush1.bf16.msra.mxu0 %v766
    %1278 = vmatprep.subr.bf16.mxu0 %v759
    %1279 = vmatpush1.bf16.msra.mxu0 %v758
    %1280 = vmatprep.subr.bf16.mxu0 %v751
    %1281 = vmatpush1.bf16.msra.mxu0 %v750
    %1282 = vmatprep.subr.bf16.mxu0 %v743
    %1283 = vmatpush1.bf16.msra.mxu0 %v742
    %1284 = vmatprep.subr.bf16.mxu0 %v735
    %1285 = vmatpush1.bf16.msra.mxu0 %v734
    %1286 = vmatprep.subr.bf16.mxu0 %v727
    %1287 = vmatpush1.bf16.msra.mxu0 %v726
    %1288 = vmatprep.subr.bf16.mxu0 %v719
    %1289 = vmatpush1.bf16.msra.mxu0 %v718
    %1290 = vmatprep.subr.bf16.mxu0 %v839
    %1291 = vmatpush2.bf16.msra.mxu0 %v838
    %1292 = vmatprep.subr.bf16.mxu0 %v831
    %1293 = vmatpush2.bf16.msra.mxu0 %v830
    %1294 = vmatprep.subr.bf16.mxu0 %v823
    %1295 = vmatpush2.bf16.msra.mxu0 %v822
    %1296 = vmatprep.subr.bf16.mxu0 %v815
    %1297 = vmatpush2.bf16.msra.mxu0 %v814
    %1298 = vmatprep.subr.bf16.mxu0 %v807
    %1299 = vmatpush2.bf16.msra.mxu0 %v806
    %1300 = vmatprep.subr.bf16.mxu0 %v799
    %1301 = vmatpush2.bf16.msra.mxu0 %v798
    %1302 = vmatprep.subr.bf16.mxu0 %v791
    %1303 = vmatpush2.bf16.msra.mxu0 %v790
    %1304 = vmatprep.subr.bf16.mxu0 %v783
    %1305 = vmatpush2.bf16.msra.mxu0 %v782
    %1306 = vmatprep.mubr.bf16.mxu0 %v1171
    %1307 = vmatmul.mubr.bf16.gmra.mxu0 %v1170
    %v1308 = vpop.f32.mrf.mxu0
    %v1309 = vadd.f32 %v1188, %v1308
    %v1310 = vpop.f32.mrf.mxu0
    %v1311 = vadd.f32 %v1189, %v1310
    %v1312 = vpop.f32.mrf.mxu0
    %v1313 = vpop.f32.mrf.mxu0
    %1314 = vdwg.mxu0
    %1315 = vmatprep.subr.bf16.mxu0 %v777
    %1316 = vmatpush1.bf16.msra.mxu0 %v776
    %1317 = vmatprep.subr.bf16.mxu0 %v769
    %1318 = vmatpush1.bf16.msra.mxu0 %v768
    %1319 = vmatprep.subr.bf16.mxu0 %v761
    %1320 = vmatpush1.bf16.msra.mxu0 %v760
    %1321 = vmatprep.subr.bf16.mxu0 %v753
    %1322 = vmatpush1.bf16.msra.mxu0 %v752
    %1323 = vmatprep.subr.bf16.mxu0 %v745
    %1324 = vmatpush1.bf16.msra.mxu0 %v744
    %1325 = vmatprep.subr.bf16.mxu0 %v737
    %1326 = vmatpush1.bf16.msra.mxu0 %v736
    %1327 = vmatprep.subr.bf16.mxu0 %v729
    %1328 = vmatpush1.bf16.msra.mxu0 %v728
    %1329 = vmatprep.subr.bf16.mxu0 %v721
    %1330 = vmatpush1.bf16.msra.mxu0 %v720
    %1331 = vmatprep.subr.bf16.mxu0 %v841
    %1332 = vmatpush2.bf16.msra.mxu0 %v840
    %1333 = vmatprep.subr.bf16.mxu0 %v833
    %1334 = vmatpush2.bf16.msra.mxu0 %v832
    %1335 = vmatprep.subr.bf16.mxu0 %v825
    %1336 = vmatpush2.bf16.msra.mxu0 %v824
    %1337 = vmatprep.subr.bf16.mxu0 %v817
    %1338 = vmatpush2.bf16.msra.mxu0 %v816
    %1339 = vmatprep.subr.bf16.mxu0 %v809
    %1340 = vmatpush2.bf16.msra.mxu0 %v808
    %1341 = vmatprep.subr.bf16.mxu0 %v801
    %1342 = vmatpush2.bf16.msra.mxu0 %v800
    %1343 = vmatprep.subr.bf16.mxu0 %v793
    %1344 = vmatpush2.bf16.msra.mxu0 %v792
    %1345 = vmatprep.subr.bf16.mxu0 %v785
    %1346 = vmatpush2.bf16.msra.mxu0 %v784
    %1347 = vmatprep.mubr.bf16.mxu0 %v1171
    %1348 = vmatmul.mubr.bf16.gmra.mxu0 %v1170
    %v1349 = vpop.f32.mrf.mxu0
    %v1350 = vadd.f32 %v1190, %v1349
    %v1351 = vpop.f32.mrf.mxu0
    %v1352 = vadd.f32 %v1191, %v1351
    %v1353 = vpop.f32.mrf.mxu0
    %v1354 = vpop.f32.mrf.mxu0
    %1355 = vdwg.mxu0
    %v1356 = vmul.f32 %v1227, 0.5
    %v1357 = vmul.f32 %v1229, 0.5
    %v1358 = vmul.f32 %v1268, 0.5
    %v1359 = vmul.f32 %v1270, 0.5
    %v1360 = vtanh.pop %v1356
    %v1361 = vtanh.pop %v1357
    %v1362 = vtanh.pop %v1358
    %v1363 = vtanh.pop %v1359
    %v1364 = vmul.f32 %v1360, 0.5
    %v1365 = vmul.f32 %v1361, 0.5
    %v1366 = vmul.f32 %v1362, 0.5
    %v1367 = vmul.f32 %v1363, 0.5
    %v1368 = vadd.f32 %v1364, 0.5
    %v1369 = vadd.f32 %v1365, 0.5
    %v1370 = vadd.f32 %v1366, 0.5
    %v1371 = vadd.f32 %v1367, 0.5
    %v1372 = vtanh.pop %v1309
    %v1373 = vtanh.pop %v1311
    %v1374 = vmul.f32 %v1370, %v1156
    %v1375 = vmul.f32 %v1371, %v1157
    %v1376 = vmul.f32 %v1368, %v1372
    %v1377 = vmul.f32 %v1369, %v1373
    %v1378 = vadd.f32 %v1374, %v1376
    %v1379 = vadd.f32 %v1375, %v1377
    %v1380 = vtanh.pop %v1378
    %v1381 = vtanh.pop %v1379
    %v1382 = vmul.f32 %v1350, 0.5
    %v1383 = vmul.f32 %v1352, 0.5
    %v1384 = vtanh.pop %v1382
    %v1385 = vtanh.pop %v1383
    %v1386 = vmul.f32 %v1384, 0.5
    %v1387 = vmul.f32 %v1385, 0.5
    %v1388 = vadd.f32 %v1386, 0.5
    %v1389 = vadd.f32 %v1387, 0.5
    %v1390 = vmul.f32 %v1388, %v1380
    %v1391 = vmul.f32 %v1389, %v1381
    %v1392 = vpack.c.bf16 %v1390, %v1390
    %v1393 = vpack.c.bf16 %v1391, %v1391
    %1394 = vset.pattern.permute.xlu0 3
    %1395 = vperm.xlu0 %1394, %v38
    %v1396 = vpop.permute.xlu0 %1395
    %v1398 = vmul.f32 %v1396, %v50
    %v1399 = vmul.f32 %v1396, %v54
    %v1400 = vmul.f32 %v1396, %v58
    %v1401 = vmul.f32 %v1396, %v62
    %v1402 = vmul.f32 %v1396, %v66
    %v1403 = vmul.f32 %v1396, %v70
    %v1404 = vmul.f32 %v1396, %v74
    %v1405 = vmul.f32 %v1396, %v78
    %v1406 = vadd.f32 %v1398, %v99
    %v1407 = vadd.f32 %v1399, %v103
    %v1408 = vadd.f32 %v1400, %v107
    %v1409 = vadd.f32 %v1401, %v111
    %v1410 = vadd.f32 %v1402, %v115
    %v1411 = vadd.f32 %v1403, %v119
    %v1412 = vadd.f32 %v1404, %v123
    %v1413 = vadd.f32 %v1405, %v127
    %1414 = vmatprep.subr.bf16.mxu0 %v771
    %1415 = vmatpush1.bf16.msra.mxu0 %v770
    %1416 = vmatprep.subr.bf16.mxu0 %v763
    %1417 = vmatpush1.bf16.msra.mxu0 %v762
    %1418 = vmatprep.subr.bf16.mxu0 %v755
    %1419 = vmatpush1.bf16.msra.mxu0 %v754
    %1420 = vmatprep.subr.bf16.mxu0 %v747
    %1421 = vmatpush1.bf16.msra.mxu0 %v746
    %1422 = vmatprep.subr.bf16.mxu0 %v739
    %1423 = vmatpush1.bf16.msra.mxu0 %v738
    %1424 = vmatprep.subr.bf16.mxu0 %v731
    %1425 = vmatpush1.bf16.msra.mxu0 %v730
    %1426 = vmatprep.subr.bf16.mxu0 %v723
    %1427 = vmatpush1.bf16.msra.mxu0 %v722
    %1428 = vmatprep.subr.bf16.mxu0 %v715
    %1429 = vmatpush1.bf16.msra.mxu0 %v714
    %1430 = vmatprep.subr.bf16.mxu0 %v835
    %1431 = vmatpush2.bf16.msra.mxu0 %v834
    %1432 = vmatprep.subr.bf16.mxu0 %v827
    %1433 = vmatpush2.bf16.msra.mxu0 %v826
    %1434 = vmatprep.subr.bf16.mxu0 %v819
    %1435 = vmatpush2.bf16.msra.mxu0 %v818
    %1436 = vmatprep.subr.bf16.mxu0 %v811
    %1437 = vmatpush2.bf16.msra.mxu0 %v810
    %1438 = vmatprep.subr.bf16.mxu0 %v803
    %1439 = vmatpush2.bf16.msra.mxu0 %v802
    %1440 = vmatprep.subr.bf16.mxu0 %v795
    %1441 = vmatpush2.bf16.msra.mxu0 %v794
    %1442 = vmatprep.subr.bf16.mxu0 %v787
    %1443 = vmatpush2.bf16.msra.mxu0 %v786
    %1444 = vmatprep.subr.bf16.mxu0 %v779
    %1445 = vmatpush2.bf16.msra.mxu0 %v778
    %1446 = vmatprep.mubr.bf16.mxu0 %v1393
    %1447 = vmatmul.mubr.bf16.gmra.mxu0 %v1392
    %v1448 = vpop.f32.mrf.mxu0
    %v1449 = vadd.f32 %v1406, %v1448
    %v1450 = vpop.f32.mrf.mxu0
    %v1451 = vadd.f32 %v1407, %v1450
    %v1452 = vpop.f32.mrf.mxu0
    %v1453 = vpop.f32.mrf.mxu0
    %1454 = vdwg.mxu0
    %1455 = vmatprep.subr.bf16.mxu0 %v773
    %1456 = vmatpush1.bf16.msra.mxu0 %v772
    %1457 = vmatprep.subr.bf16.mxu0 %v765
    %1458 = vmatpush1.bf16.msra.mxu0 %v764
    %1459 = vmatprep.subr.bf16.mxu0 %v757
    %1460 = vmatpush1.bf16.msra.mxu0 %v756
    %1461 = vmatprep.subr.bf16.mxu0 %v749
    %1462 = vmatpush1.bf16.msra.mxu0 %v748
    %1463 = vmatprep.subr.bf16.mxu0 %v741
    %1464 = vmatpush1.bf16.msra.mxu0 %v740
    %1465 = vmatprep.subr.bf16.mxu0 %v733
    %1466 = vmatpush1.bf16.msra.mxu0 %v732
    %1467 = vmatprep.subr.bf16.mxu0 %v725
    %1468 = vmatpush1.bf16.msra.mxu0 %v724
    %1469 = vmatprep.subr.bf16.mxu0 %v717
    %1470 = vmatpush1.bf16.msra.mxu0 %v716
    %1471 = vmatprep.subr.bf16.mxu0 %v837
    %1472 = vmatpush2.bf16.msra.mxu0 %v836
    %1473 = vmatprep.subr.bf16.mxu0 %v829
    %1474 = vmatpush2.bf16.msra.mxu0 %v828
    %1475 = vmatprep.subr.bf16.mxu0 %v821
    %1476 = vmatpush2.bf16.msra.mxu0 %v820
    %1477 = vmatprep.subr.bf16.mxu0 %v813
    %1478 = vmatpush2.bf16.msra.mxu0 %v812
    %1479 = vmatprep.subr.bf16.mxu0 %v805
    %1480 = vmatpush2.bf16.msra.mxu0 %v804
    %1481 = vmatprep.subr.bf16.mxu0 %v797
    %1482 = vmatpush2.bf16.msra.mxu0 %v796
    %1483 = vmatprep.subr.bf16.mxu0 %v789
    %1484 = vmatpush2.bf16.msra.mxu0 %v788
    %1485 = vmatprep.subr.bf16.mxu0 %v781
    %1486 = vmatpush2.bf16.msra.mxu0 %v780
    %1487 = vmatprep.mubr.bf16.mxu0 %v1393
    %1488 = vmatmul.mubr.bf16.gmra.mxu0 %v1392
    %v1489 = vpop.f32.mrf.mxu0
    %v1490 = vadd.f32 %v1408, %v1489
    %v1491 = vpop.f32.mrf.mxu0
    %v1492 = vadd.f32 %v1409, %v1491
    %v1493 = vpop.f32.mrf.mxu0
    %v1494 = vpop.f32.mrf.mxu0
    %1495 = vdwg.mxu0
    %1496 = vmatprep.subr.bf16.mxu0 %v775
    %1497 = vmatpush1.bf16.msra.mxu0 %v774
    %1498 = vmatprep.subr.bf16.mxu0 %v767
    %1499 = vmatpush1.bf16.msra.mxu0 %v766
    %1500 = vmatprep.subr.bf16.mxu0 %v759
    %1501 = vmatpush1.bf16.msra.mxu0 %v758
    %1502 = vmatprep.subr.bf16.mxu0 %v751
    %1503 = vmatpush1.bf16.msra.mxu0 %v750
    %1504 = vmatprep.subr.bf16.mxu0 %v743
    %1505 = vmatpush1.bf16.msra.mxu0 %v742
    %1506 = vmatprep.subr.bf16.mxu0 %v735
    %1507 = vmatpush1.bf16.msra.mxu0 %v734
    %1508 = vmatprep.subr.bf16.mxu0 %v727
    %1509 = vmatpush1.bf16.msra.mxu0 %v726
    %1510 = vmatprep.subr.bf16.mxu0 %v719
    %1511 = vmatpush1.bf16.msra.mxu0 %v718
    %1512 = vmatprep.subr.bf16.mxu0 %v839
    %1513 = vmatpush2.bf16.msra.mxu0 %v838
    %1514 = vmatprep.subr.bf16.mxu0 %v831
    %1515 = vmatpush2.bf16.msra.mxu0 %v830
    %1516 = vmatprep.subr.bf16.mxu0 %v823
    %1517 = vmatpush2.bf16.msra.mxu0 %v822
    %1518 = vmatprep.subr.bf16.mxu0 %v815
    %1519 = vmatpush2.bf16.msra.mxu0 %v814
    %1520 = vmatprep.subr.bf16.mxu0 %v807
    %1521 = vmatpush2.bf16.msra.mxu0 %v806
    %1522 = vmatprep.subr.bf16.mxu0 %v799
    %1523 = vmatpush2.bf16.msra.mxu0 %v798
    %1524 = vmatprep.subr.bf16.mxu0 %v791
    %1525 = vmatpush2.bf16.msra.mxu0 %v790
    %1526 = vmatprep.subr.bf16.mxu0 %v783
    %1527 = vmatpush2.bf16.msra.mxu0 %v782
    %1528 = vmatprep.mubr.bf16.mxu0 %v1393
    %1529 = vmatmul.mubr.bf16.gmra.mxu0 %v1392
    %v1530 = vpop.f32.mrf.mxu0
    %v1531 = vadd.f32 %v1410, %v1530
    %v1532 = vpop.f32.mrf.mxu0
    %v1533 = vadd.f32 %v1411, %v1532
    %v1534 = vpop.f32.mrf.mxu0
    %v1535 = vpop.f32.mrf.mxu0
    %1536 = vdwg.mxu0
    %1537 = vmatprep.subr.bf16.mxu0 %v777
    %1538 = vmatpush1.bf16.msra.mxu0 %v776
    %1539 = vmatprep.subr.bf16.mxu0 %v769
    %1540 = vmatpush1.bf16.msra.mxu0 %v768
    %1541 = vmatprep.subr.bf16.mxu0 %v761
    %1542 = vmatpush1.bf16.msra.mxu0 %v760
    %1543 = vmatprep.subr.bf16.mxu0 %v753
    %1544 = vmatpush1.bf16.msra.mxu0 %v752
    %1545 = vmatprep.subr.bf16.mxu0 %v745
    %1546 = vmatpush1.bf16.msra.mxu0 %v744
    %1547 = vmatprep.subr.bf16.mxu0 %v737
    %1548 = vmatpush1.bf16.msra.mxu0 %v736
    %1549 = vmatprep.subr.bf16.mxu0 %v729
    %1550 = vmatpush1.bf16.msra.mxu0 %v728
    %1551 = vmatprep.subr.bf16.mxu0 %v721
    %1552 = vmatpush1.bf16.msra.mxu0 %v720
    %1553 = vmatprep.subr.bf16.mxu0 %v841
    %1554 = vmatpush2.bf16.msra.mxu0 %v840
    %1555 = vmatprep.subr.bf16.mxu0 %v833
    %1556 = vmatpush2.bf16.msra.mxu0 %v832
    %1557 = vmatprep.subr.bf16.mxu0 %v825
    %1558 = vmatpush2.bf16.msra.mxu0 %v824
    %1559 = vmatprep.subr.bf16.mxu0 %v817
    %1560 = vmatpush2.bf16.msra.mxu0 %v816
    %1561 = vmatprep.subr.bf16.mxu0 %v809
    %1562 = vmatpush2.bf16.msra.mxu0 %v808
    %1563 = vmatprep.subr.bf16.mxu0 %v801
    %1564 = vmatpush2.bf16.msra.mxu0 %v800
    %1565 = vmatprep.subr.bf16.mxu0 %v793
    %1566 = vmatpush2.bf16.msra.mxu0 %v792
    %1567 = vmatprep.subr.bf16.mxu0 %v785
    %1568 = vmatpush2.bf16.msra.mxu0 %v784
    %1569 = vmatprep.mubr.bf16.mxu0 %v1393
    %1570 = vmatmul.mubr.bf16.gmra.mxu0 %v1392
    %v1571 = vpop.f32.mrf.mxu0
    %v1572 = vadd.f32 %v1412, %v1571
    %v1573 = vpop.f32.mrf.mxu0
    %v1574 = vadd.f32 %v1413, %v1573
    %v1575 = vpop.f32.mrf.mxu0
    %v1576 = vpop.f32.mrf.mxu0
    %1577 = vdwg.mxu0
    %v1578 = vmul.f32 %v1449, 0.5
    %v1579 = vmul.f32 %v1451, 0.5
    %v1580 = vmul.f32 %v1490, 0.5
    %v1581 = vmul.f32 %v1492, 0.5
    %v1582 = vtanh.pop %v1578
    %v1583 = vtanh.pop %v1579
    %v1584 = vtanh.pop %v1580
    %v1585 = vtanh.pop %v1581
    %v1586 = vmul.f32 %v1582, 0.5
    %v1587 = vmul.f32 %v1583, 0.5
    %v1588 = vmul.f32 %v1584, 0.5
    %v1589 = vmul.f32 %v1585, 0.5
    %v1590 = vadd.f32 %v1586, 0.5
    %v1591 = vadd.f32 %v1587, 0.5
    %v1592 = vadd.f32 %v1588, 0.5
    %v1593 = vadd.f32 %v1589, 0.5
    %v1594 = vtanh.pop %v1531
    %v1595 = vtanh.pop %v1533
    %v1596 = vmul.f32 %v1592, %v1378
    %v1597 = vmul.f32 %v1593, %v1379
    %v1598 = vmul.f32 %v1590, %v1594
    %v1599 = vmul.f32 %v1591, %v1595
    %v1600 = vadd.f32 %v1596, %v1598
    %v1601 = vadd.f32 %v1597, %v1599
    %v1602 = vtanh.pop %v1600
    %v1603 = vtanh.pop %v1601
    %v1604 = vmul.f32 %v1572, 0.5
    %v1605 = vmul.f32 %v1574, 0.5
    %v1606 = vtanh.pop %v1604
    %v1607 = vtanh.pop %v1605
    %v1608 = vmul.f32 %v1606, 0.5
    %v1609 = vmul.f32 %v1607, 0.5
    %v1610 = vadd.f32 %v1608, 0.5
    %v1611 = vadd.f32 %v1609, 0.5
    %v1612 = vmul.f32 %v1610, %v1602
    %v1613 = vmul.f32 %v1611, %v1603
    %v1614 = vpack.c.bf16 %v1612, %v1612
    %v1615 = vpack.c.bf16 %v1613, %v1613
    %1616 = vset.pattern.permute.xlu0 4
    %1617 = vperm.xlu0 %1616, %v38
    %v1618 = vpop.permute.xlu0 %1617
    %v1620 = vmul.f32 %v1618, %v50
    %v1621 = vmul.f32 %v1618, %v54
    %v1622 = vmul.f32 %v1618, %v58
    %v1623 = vmul.f32 %v1618, %v62
    %v1624 = vmul.f32 %v1618, %v66
    %v1625 = vmul.f32 %v1618, %v70
    %v1626 = vmul.f32 %v1618, %v74
    %v1627 = vmul.f32 %v1618, %v78
    %v1628 = vadd.f32 %v1620, %v99
    %v1629 = vadd.f32 %v1621, %v103
    %v1630 = vadd.f32 %v1622, %v107
    %v1631 = vadd.f32 %v1623, %v111
    %v1632 = vadd.f32 %v1624, %v115
    %v1633 = vadd.f32 %v1625, %v119
    %v1634 = vadd.f32 %v1626, %v123
    %v1635 = vadd.f32 %v1627, %v127
    %1636 = vmatprep.subr.bf16.mxu0 %v771
    %1637 = vmatpush1.bf16.msra.mxu0 %v770
    %1638 = vmatprep.subr.bf16.mxu0 %v763
    %1639 = vmatpush1.bf16.msra.mxu0 %v762
    %1640 = vmatprep.subr.bf16.mxu0 %v755
    %1641 = vmatpush1.bf16.msra.mxu0 %v754
    %1642 = vmatprep.subr.bf16.mxu0 %v747
    %1643 = vmatpush1.bf16.msra.mxu0 %v746
    %1644 = vmatprep.subr.bf16.mxu0 %v739
    %1645 = vmatpush1.bf16.msra.mxu0 %v738
    %1646 = vmatprep.subr.bf16.mxu0 %v731
    %1647 = vmatpush1.bf16.msra.mxu0 %v730
    %1648 = vmatprep.subr.bf16.mxu0 %v723
    %1649 = vmatpush1.bf16.msra.mxu0 %v722
    %1650 = vmatprep.subr.bf16.mxu0 %v715
    %1651 = vmatpush1.bf16.msra.mxu0 %v714
    %1652 = vmatprep.subr.bf16.mxu0 %v835
    %1653 = vmatpush2.bf16.msra.mxu0 %v834
    %1654 = vmatprep.subr.bf16.mxu0 %v827
    %1655 = vmatpush2.bf16.msra.mxu0 %v826
    %1656 = vmatprep.subr.bf16.mxu0 %v819
    %1657 = vmatpush2.bf16.msra.mxu0 %v818
    %1658 = vmatprep.subr.bf16.mxu0 %v811
    %1659 = vmatpush2.bf16.msra.mxu0 %v810
    %1660 = vmatprep.subr.bf16.mxu0 %v803
    %1661 = vmatpush2.bf16.msra.mxu0 %v802
    %1662 = vmatprep.subr.bf16.mxu0 %v795
    %1663 = vmatpush2.bf16.msra.mxu0 %v794
    %1664 = vmatprep.subr.bf16.mxu0 %v787
    %1665 = vmatpush2.bf16.msra.mxu0 %v786
    %1666 = vmatprep.subr.bf16.mxu0 %v779
    %1667 = vmatpush2.bf16.msra.mxu0 %v778
    %1668 = vmatprep.mubr.bf16.mxu0 %v1615
    %1669 = vmatmul.mubr.bf16.gmra.mxu0 %v1614
    %v1670 = vpop.f32.mrf.mxu0
    %v1671 = vadd.f32 %v1628, %v1670
    %v1672 = vpop.f32.mrf.mxu0
    %v1673 = vadd.f32 %v1629, %v1672
    %v1674 = vpop.f32.mrf.mxu0
    %v1675 = vpop.f32.mrf.mxu0
    %1676 = vdwg.mxu0
    %1677 = vmatprep.subr.bf16.mxu0 %v773
    %1678 = vmatpush1.bf16.msra.mxu0 %v772
    %1679 = vmatprep.subr.bf16.mxu0 %v765
    %1680 = vmatpush1.bf16.msra.mxu0 %v764
    %1681 = vmatprep.subr.bf16.mxu0 %v757
    %1682 = vmatpush1.bf16.msra.mxu0 %v756
    %1683 = vmatprep.subr.bf16.mxu0 %v749
    %1684 = vmatpush1.bf16.msra.mxu0 %v748
    %1685 = vmatprep.subr.bf16.mxu0 %v741
    %1686 = vmatpush1.bf16.msra.mxu0 %v740
    %1687 = vmatprep.subr.bf16.mxu0 %v733
    %1688 = vmatpush1.bf16.msra.mxu0 %v732
    %1689 = vmatprep.subr.bf16.mxu0 %v725
    %1690 = vmatpush1.bf16.msra.mxu0 %v724
    %1691 = vmatprep.subr.bf16.mxu0 %v717
    %1692 = vmatpush1.bf16.msra.mxu0 %v716
    %1693 = vmatprep.subr.bf16.mxu0 %v837
    %1694 = vmatpush2.bf16.msra.mxu0 %v836
    %1695 = vmatprep.subr.bf16.mxu0 %v829
    %1696 = vmatpush2.bf16.msra.mxu0 %v828
    %1697 = vmatprep.subr.bf16.mxu0 %v821
    %1698 = vmatpush2.bf16.msra.mxu0 %v820
    %1699 = vmatprep.subr.bf16.mxu0 %v813
    %1700 = vmatpush2.bf16.msra.mxu0 %v812
    %1701 = vmatprep.subr.bf16.mxu0 %v805
    %1702 = vmatpush2.bf16.msra.mxu0 %v804
    %1703 = vmatprep.subr.bf16.mxu0 %v797
    %1704 = vmatpush2.bf16.msra.mxu0 %v796
    %1705 = vmatprep.subr.bf16.mxu0 %v789
    %1706 = vmatpush2.bf16.msra.mxu0 %v788
    %1707 = vmatprep.subr.bf16.mxu0 %v781
    %1708 = vmatpush2.bf16.msra.mxu0 %v780
    %1709 = vmatprep.mubr.bf16.mxu0 %v1615
    %1710 = vmatmul.mubr.bf16.gmra.mxu0 %v1614
    %v1711 = vpop.f32.mrf.mxu0
    %v1712 = vadd.f32 %v1630, %v1711
    %v1713 = vpop.f32.mrf.mxu0
    %v1714 = vadd.f32 %v1631, %v1713
    %v1715 = vpop.f32.mrf.mxu0
    %v1716 = vpop.f32.mrf.mxu0
    %1717 = vdwg.mxu0
    %1718 = vmatprep.subr.bf16.mxu0 %v775
    %1719 = vmatpush1.bf16.msra.mxu0 %v774
    %1720 = vmatprep.subr.bf16.mxu0 %v767
    %1721 = vmatpush1.bf16.msra.mxu0 %v766
    %1722 = vmatprep.subr.bf16.mxu0 %v759
    %1723 = vmatpush1.bf16.msra.mxu0 %v758
    %1724 = vmatprep.subr.bf16.mxu0 %v751
    %1725 = vmatpush1.bf16.msra.mxu0 %v750
    %1726 = vmatprep.subr.bf16.mxu0 %v743
    %1727 = vmatpush1.bf16.msra.mxu0 %v742
    %1728 = vmatprep.subr.bf16.mxu0 %v735
    %1729 = vmatpush1.bf16.msra.mxu0 %v734
    %1730 = vmatprep.subr.bf16.mxu0 %v727
    %1731 = vmatpush1.bf16.msra.mxu0 %v726
    %1732 = vmatprep.subr.bf16.mxu0 %v719
    %1733 = vmatpush1.bf16.msra.mxu0 %v718
    %1734 = vmatprep.subr.bf16.mxu0 %v839
    %1735 = vmatpush2.bf16.msra.mxu0 %v838
    %1736 = vmatprep.subr.bf16.mxu0 %v831
    %1737 = vmatpush2.bf16.msra.mxu0 %v830
    %1738 = vmatprep.subr.bf16.mxu0 %v823
    %1739 = vmatpush2.bf16.msra.mxu0 %v822
    %1740 = vmatprep.subr.bf16.mxu0 %v815
    %1741 = vmatpush2.bf16.msra.mxu0 %v814
    %1742 = vmatprep.subr.bf16.mxu0 %v807
    %1743 = vmatpush2.bf16.msra.mxu0 %v806
    %1744 = vmatprep.subr.bf16.mxu0 %v799
    %1745 = vmatpush2.bf16.msra.mxu0 %v798
    %1746 = vmatprep.subr.bf16.mxu0 %v791
    %1747 = vmatpush2.bf16.msra.mxu0 %v790
    %1748 = vmatprep.subr.bf16.mxu0 %v783
    %1749 = vmatpush2.bf16.msra.mxu0 %v782
    %1750 = vmatprep.mubr.bf16.mxu0 %v1615
    %1751 = vmatmul.mubr.bf16.gmra.mxu0 %v1614
    %v1752 = vpop.f32.mrf.mxu0
    %v1753 = vadd.f32 %v1632, %v1752
    %v1754 = vpop.f32.mrf.mxu0
    %v1755 = vadd.f32 %v1633, %v1754
    %v1756 = vpop.f32.mrf.mxu0
    %v1757 = vpop.f32.mrf.mxu0
    %1758 = vdwg.mxu0
    %1759 = vmatprep.subr.bf16.mxu0 %v777
    %1760 = vmatpush1.bf16.msra.mxu0 %v776
    %1761 = vmatprep.subr.bf16.mxu0 %v769
    %1762 = vmatpush1.bf16.msra.mxu0 %v768
    %1763 = vmatprep.subr.bf16.mxu0 %v761
    %1764 = vmatpush1.bf16.msra.mxu0 %v760
    %1765 = vmatprep.subr.bf16.mxu0 %v753
    %1766 = vmatpush1.bf16.msra.mxu0 %v752
    %1767 = vmatprep.subr.bf16.mxu0 %v745
    %1768 = vmatpush1.bf16.msra.mxu0 %v744
    %1769 = vmatprep.subr.bf16.mxu0 %v737
    %1770 = vmatpush1.bf16.msra.mxu0 %v736
    %1771 = vmatprep.subr.bf16.mxu0 %v729
    %1772 = vmatpush1.bf16.msra.mxu0 %v728
    %1773 = vmatprep.subr.bf16.mxu0 %v721
    %1774 = vmatpush1.bf16.msra.mxu0 %v720
    %1775 = vmatprep.subr.bf16.mxu0 %v841
    %1776 = vmatpush2.bf16.msra.mxu0 %v840
    %1777 = vmatprep.subr.bf16.mxu0 %v833
    %1778 = vmatpush2.bf16.msra.mxu0 %v832
    %1779 = vmatprep.subr.bf16.mxu0 %v825
    %1780 = vmatpush2.bf16.msra.mxu0 %v824
    %1781 = vmatprep.subr.bf16.mxu0 %v817
    %1782 = vmatpush2.bf16.msra.mxu0 %v816
    %1783 = vmatprep.subr.bf16.mxu0 %v809
    %1784 = vmatpush2.bf16.msra.mxu0 %v808
    %1785 = vmatprep.subr.bf16.mxu0 %v801
    %1786 = vmatpush2.bf16.msra.mxu0 %v800
    %1787 = vmatprep.subr.bf16.mxu0 %v793
    %1788 = vmatpush2.bf16.msra.mxu0 %v792
    %1789 = vmatprep.subr.bf16.mxu0 %v785
    %1790 = vmatpush2.bf16.msra.mxu0 %v784
    %1791 = vmatprep.mubr.bf16.mxu0 %v1615
    %1792 = vmatmul.mubr.bf16.gmra.mxu0 %v1614
    %v1793 = vpop.f32.mrf.mxu0
    %v1794 = vadd.f32 %v1634, %v1793
    %v1795 = vpop.f32.mrf.mxu0
    %v1796 = vadd.f32 %v1635, %v1795
    %v1797 = vpop.f32.mrf.mxu0
    %v1798 = vpop.f32.mrf.mxu0
    %1799 = vdwg.mxu0
    %v1800 = vmul.f32 %v1671, 0.5
    %v1801 = vmul.f32 %v1673, 0.5
    %v1802 = vmul.f32 %v1712, 0.5
    %v1803 = vmul.f32 %v1714, 0.5
    %v1804 = vtanh.pop %v1800
    %v1805 = vtanh.pop %v1801
    %v1806 = vtanh.pop %v1802
    %v1807 = vtanh.pop %v1803
    %v1808 = vmul.f32 %v1804, 0.5
    %v1809 = vmul.f32 %v1805, 0.5
    %v1810 = vmul.f32 %v1806, 0.5
    %v1811 = vmul.f32 %v1807, 0.5
    %v1812 = vadd.f32 %v1808, 0.5
    %v1813 = vadd.f32 %v1809, 0.5
    %v1814 = vadd.f32 %v1810, 0.5
    %v1815 = vadd.f32 %v1811, 0.5
    %v1816 = vtanh.pop %v1753
    %v1817 = vtanh.pop %v1755
    %v1818 = vmul.f32 %v1814, %v1600
    %v1819 = vmul.f32 %v1815, %v1601
    %v1820 = vmul.f32 %v1812, %v1816
    %v1821 = vmul.f32 %v1813, %v1817
    %v1822 = vadd.f32 %v1818, %v1820
    %v1823 = vadd.f32 %v1819, %v1821
    %v1824 = vtanh.pop %v1822
    %v1825 = vtanh.pop %v1823
    %v1826 = vmul.f32 %v1794, 0.5
    %v1827 = vmul.f32 %v1796, 0.5
    %v1828 = vtanh.pop %v1826
    %v1829 = vtanh.pop %v1827
    %v1830 = vmul.f32 %v1828, 0.5
    %v1831 = vmul.f32 %v1829, 0.5
    %v1832 = vadd.f32 %v1830, 0.5
    %v1833 = vadd.f32 %v1831, 0.5
    %v1834 = vmul.f32 %v1832, %v1824
    %v1835 = vmul.f32 %v1833, %v1825
    %v1836 = vpack.c.bf16 %v1834, %v1834
    %v1837 = vpack.c.bf16 %v1835, %v1835
    %1838 = vset.pattern.permute.xlu0 5
    %1839 = vperm.xlu0 %1838, %v38
    %v1840 = vpop.permute.xlu0 %1839
    %v1842 = vmul.f32 %v1840, %v50
    %v1843 = vmul.f32 %v1840, %v54
    %v1844 = vmul.f32 %v1840, %v58
    %v1845 = vmul.f32 %v1840, %v62
    %v1846 = vmul.f32 %v1840, %v66
    %v1847 = vmul.f32 %v1840, %v70
    %v1848 = vmul.f32 %v1840, %v74
    %v1849 = vmul.f32 %v1840, %v78
    %v1850 = vadd.f32 %v1842, %v99
    %v1851 = vadd.f32 %v1843, %v103
    %v1852 = vadd.f32 %v1844, %v107
    %v1853 = vadd.f32 %v1845, %v111
    %v1854 = vadd.f32 %v1846, %v115
    %v1855 = vadd.f32 %v1847, %v119
    %v1856 = vadd.f32 %v1848, %v123
    %v1857 = vadd.f32 %v1849, %v127
    %1858 = vmatprep.subr.bf16.mxu0 %v771
    %1859 = vmatpush1.bf16.msra.mxu0 %v770
    %1860 = vmatprep.subr.bf16.mxu0 %v763
    %1861 = vmatpush1.bf16.msra.mxu0 %v762
    %1862 = vmatprep.subr.bf16.mxu0 %v755
    %1863 = vmatpush1.bf16.msra.mxu0 %v754
    %1864 = vmatprep.subr.bf16.mxu0 %v747
    %1865 = vmatpush1.bf16.msra.mxu0 %v746
    %1866 = vmatprep.subr.bf16.mxu0 %v739
    %1867 = vmatpush1.bf16.msra.mxu0 %v738
    %1868 = vmatprep.subr.bf16.mxu0 %v731
    %1869 = vmatpush1.bf16.msra.mxu0 %v730
    %1870 = vmatprep.subr.bf16.mxu0 %v723
    %1871 = vmatpush1.bf16.msra.mxu0 %v722
    %1872 = vmatprep.subr.bf16.mxu0 %v715
    %1873 = vmatpush1.bf16.msra.mxu0 %v714
    %1874 = vmatprep.subr.bf16.mxu0 %v835
    %1875 = vmatpush2.bf16.msra.mxu0 %v834
    %1876 = vmatprep.subr.bf16.mxu0 %v827
    %1877 = vmatpush2.bf16.msra.mxu0 %v826
    %1878 = vmatprep.subr.bf16.mxu0 %v819
    %1879 = vmatpush2.bf16.msra.mxu0 %v818
    %1880 = vmatprep.subr.bf16.mxu0 %v811
    %1881 = vmatpush2.bf16.msra.mxu0 %v810
    %1882 = vmatprep.subr.bf16.mxu0 %v803
    %1883 = vmatpush2.bf16.msra.mxu0 %v802
    %1884 = vmatprep.subr.bf16.mxu0 %v795
    %1885 = vmatpush2.bf16.msra.mxu0 %v794
    %1886 = vmatprep.subr.bf16.mxu0 %v787
    %1887 = vmatpush2.bf16.msra.mxu0 %v786
    %1888 = vmatprep.subr.bf16.mxu0 %v779
    %1889 = vmatpush2.bf16.msra.mxu0 %v778
    %1890 = vmatprep.mubr.bf16.mxu0 %v1837
    %1891 = vmatmul.mubr.bf16.gmra.mxu0 %v1836
    %v1892 = vpop.f32.mrf.mxu0
    %v1893 = vadd.f32 %v1850, %v1892
    %v1894 = vpop.f32.mrf.mxu0
    %v1895 = vadd.f32 %v1851, %v1894
    %v1896 = vpop.f32.mrf.mxu0
    %v1897 = vpop.f32.mrf.mxu0
    %1898 = vdwg.mxu0
    %1899 = vmatprep.subr.bf16.mxu0 %v773
    %1900 = vmatpush1.bf16.msra.mxu0 %v772
    %1901 = vmatprep.subr.bf16.mxu0 %v765
    %1902 = vmatpush1.bf16.msra.mxu0 %v764
    %1903 = vmatprep.subr.bf16.mxu0 %v757
    %1904 = vmatpush1.bf16.msra.mxu0 %v756
    %1905 = vmatprep.subr.bf16.mxu0 %v749
    %1906 = vmatpush1.bf16.msra.mxu0 %v748
    %1907 = vmatprep.subr.bf16.mxu0 %v741
    %1908 = vmatpush1.bf16.msra.mxu0 %v740
    %1909 = vmatprep.subr.bf16.mxu0 %v733
    %1910 = vmatpush1.bf16.msra.mxu0 %v732
    %1911 = vmatprep.subr.bf16.mxu0 %v725
    %1912 = vmatpush1.bf16.msra.mxu0 %v724
    %1913 = vmatprep.subr.bf16.mxu0 %v717
    %1914 = vmatpush1.bf16.msra.mxu0 %v716
    %1915 = vmatprep.subr.bf16.mxu0 %v837
    %1916 = vmatpush2.bf16.msra.mxu0 %v836
    %1917 = vmatprep.subr.bf16.mxu0 %v829
    %1918 = vmatpush2.bf16.msra.mxu0 %v828
    %1919 = vmatprep.subr.bf16.mxu0 %v821
    %1920 = vmatpush2.bf16.msra.mxu0 %v820
    %1921 = vmatprep.subr.bf16.mxu0 %v813
    %1922 = vmatpush2.bf16.msra.mxu0 %v812
    %1923 = vmatprep.subr.bf16.mxu0 %v805
    %1924 = vmatpush2.bf16.msra.mxu0 %v804
    %1925 = vmatprep.subr.bf16.mxu0 %v797
    %1926 = vmatpush2.bf16.msra.mxu0 %v796
    %1927 = vmatprep.subr.bf16.mxu0 %v789
    %1928 = vmatpush2.bf16.msra.mxu0 %v788
    %1929 = vmatprep.subr.bf16.mxu0 %v781
    %1930 = vmatpush2.bf16.msra.mxu0 %v780
    %1931 = vmatprep.mubr.bf16.mxu0 %v1837
    %1932 = vmatmul.mubr.bf16.gmra.mxu0 %v1836
    %v1933 = vpop.f32.mrf.mxu0
    %v1934 = vadd.f32 %v1852, %v1933
    %v1935 = vpop.f32.mrf.mxu0
    %v1936 = vadd.f32 %v1853, %v1935
    %v1937 = vpop.f32.mrf.mxu0
    %v1938 = vpop.f32.mrf.mxu0
    %1939 = vdwg.mxu0
    %1940 = vmatprep.subr.bf16.mxu0 %v775
    %1941 = vmatpush1.bf16.msra.mxu0 %v774
    %1942 = vmatprep.subr.bf16.mxu0 %v767
    %1943 = vmatpush1.bf16.msra.mxu0 %v766
    %1944 = vmatprep.subr.bf16.mxu0 %v759
    %1945 = vmatpush1.bf16.msra.mxu0 %v758
    %1946 = vmatprep.subr.bf16.mxu0 %v751
    %1947 = vmatpush1.bf16.msra.mxu0 %v750
    %1948 = vmatprep.subr.bf16.mxu0 %v743
    %1949 = vmatpush1.bf16.msra.mxu0 %v742
    %1950 = vmatprep.subr.bf16.mxu0 %v735
    %1951 = vmatpush1.bf16.msra.mxu0 %v734
    %1952 = vmatprep.subr.bf16.mxu0 %v727
    %1953 = vmatpush1.bf16.msra.mxu0 %v726
    %1954 = vmatprep.subr.bf16.mxu0 %v719
    %1955 = vmatpush1.bf16.msra.mxu0 %v718
    %1956 = vmatprep.subr.bf16.mxu0 %v839
    %1957 = vmatpush2.bf16.msra.mxu0 %v838
    %1958 = vmatprep.subr.bf16.mxu0 %v831
    %1959 = vmatpush2.bf16.msra.mxu0 %v830
    %1960 = vmatprep.subr.bf16.mxu0 %v823
    %1961 = vmatpush2.bf16.msra.mxu0 %v822
    %1962 = vmatprep.subr.bf16.mxu0 %v815
    %1963 = vmatpush2.bf16.msra.mxu0 %v814
    %1964 = vmatprep.subr.bf16.mxu0 %v807
    %1965 = vmatpush2.bf16.msra.mxu0 %v806
    %1966 = vmatprep.subr.bf16.mxu0 %v799
    %1967 = vmatpush2.bf16.msra.mxu0 %v798
    %1968 = vmatprep.subr.bf16.mxu0 %v791
    %1969 = vmatpush2.bf16.msra.mxu0 %v790
    %1970 = vmatprep.subr.bf16.mxu0 %v783
    %1971 = vmatpush2.bf16.msra.mxu0 %v782
    %1972 = vmatprep.mubr.bf16.mxu0 %v1837
    %1973 = vmatmul.mubr.bf16.gmra.mxu0 %v1836
    %v1974 = vpop.f32.mrf.mxu0
    %v1975 = vadd.f32 %v1854, %v1974
    %v1976 = vpop.f32.mrf.mxu0
    %v1977 = vadd.f32 %v1855, %v1976
    %v1978 = vpop.f32.mrf.mxu0
    %v1979 = vpop.f32.mrf.mxu0
    %1980 = vdwg.mxu0
    %1981 = vmatprep.subr.bf16.mxu0 %v777
    %1982 = vmatpush1.bf16.msra.mxu0 %v776
    %1983 = vmatprep.subr.bf16.mxu0 %v769
    %1984 = vmatpush1.bf16.msra.mxu0 %v768
    %1985 = vmatprep.subr.bf16.mxu0 %v761
    %1986 = vmatpush1.bf16.msra.mxu0 %v760
    %1987 = vmatprep.subr.bf16.mxu0 %v753
    %1988 = vmatpush1.bf16.msra.mxu0 %v752
    %1989 = vmatprep.subr.bf16.mxu0 %v745
    %1990 = vmatpush1.bf16.msra.mxu0 %v744
    %1991 = vmatprep.subr.bf16.mxu0 %v737
    %1992 = vmatpush1.bf16.msra.mxu0 %v736
    %1993 = vmatprep.subr.bf16.mxu0 %v729
    %1994 = vmatpush1.bf16.msra.mxu0 %v728
    %1995 = vmatprep.subr.bf16.mxu0 %v721
    %1996 = vmatpush1.bf16.msra.mxu0 %v720
    %1997 = vmatprep.subr.bf16.mxu0 %v841
    %1998 = vmatpush2.bf16.msra.mxu0 %v840
    %1999 = vmatprep.subr.bf16.mxu0 %v833
    %2000 = vmatpush2.bf16.msra.mxu0 %v832
    %2001 = vmatprep.subr.bf16.mxu0 %v825
    %2002 = vmatpush2.bf16.msra.mxu0 %v824
    %2003 = vmatprep.subr.bf16.mxu0 %v817
    %2004 = vmatpush2.bf16.msra.mxu0 %v816
    %2005 = vmatprep.subr.bf16.mxu0 %v809
    %2006 = vmatpush2.bf16.msra.mxu0 %v808
    %2007 = vmatprep.subr.bf16.mxu0 %v801
    %2008 = vmatpush2.bf16.msra.mxu0 %v800
    %2009 = vmatprep.subr.bf16.mxu0 %v793
    %2010 = vmatpush2.bf16.msra.mxu0 %v792
    %2011 = vmatprep.subr.bf16.mxu0 %v785
    %2012 = vmatpush2.bf16.msra.mxu0 %v784
    %2013 = vmatprep.mubr.bf16.mxu0 %v1837
    %2014 = vmatmul.mubr.bf16.gmra.mxu0 %v1836
    %v2015 = vpop.f32.mrf.mxu0
    %v2016 = vadd.f32 %v1856, %v2015
    %v2017 = vpop.f32.mrf.mxu0
    %v2018 = vadd.f32 %v1857, %v2017
    %v2019 = vpop.f32.mrf.mxu0
    %v2020 = vpop.f32.mrf.mxu0
    %2021 = vdwg.mxu0
    %v2022 = vmul.f32 %v1893, 0.5
    %v2023 = vmul.f32 %v1895, 0.5
    %v2024 = vmul.f32 %v1934, 0.5
    %v2025 = vmul.f32 %v1936, 0.5
    %v2026 = vtanh.pop %v2022
    %v2027 = vtanh.pop %v2023
    %v2028 = vtanh.pop %v2024
    %v2029 = vtanh.pop %v2025
    %v2030 = vmul.f32 %v2026, 0.5
    %v2031 = vmul.f32 %v2027, 0.5
    %v2032 = vmul.f32 %v2028, 0.5
    %v2033 = vmul.f32 %v2029, 0.5
    %v2034 = vadd.f32 %v2030, 0.5
    %v2035 = vadd.f32 %v2031, 0.5
    %v2036 = vadd.f32 %v2032, 0.5
    %v2037 = vadd.f32 %v2033, 0.5
    %v2038 = vtanh.pop %v1975
    %v2039 = vtanh.pop %v1977
    %v2040 = vmul.f32 %v2036, %v1822
    %v2041 = vmul.f32 %v2037, %v1823
    %v2042 = vmul.f32 %v2034, %v2038
    %v2043 = vmul.f32 %v2035, %v2039
    %v2044 = vadd.f32 %v2040, %v2042
    %v2045 = vadd.f32 %v2041, %v2043
    %v2046 = vtanh.pop %v2044
    %v2047 = vtanh.pop %v2045
    %v2048 = vmul.f32 %v2016, 0.5
    %v2049 = vmul.f32 %v2018, 0.5
    %v2050 = vtanh.pop %v2048
    %v2051 = vtanh.pop %v2049
    %v2052 = vmul.f32 %v2050, 0.5
    %v2053 = vmul.f32 %v2051, 0.5
    %v2054 = vadd.f32 %v2052, 0.5
    %v2055 = vadd.f32 %v2053, 0.5
    %v2056 = vmul.f32 %v2054, %v2046
    %v2057 = vmul.f32 %v2055, %v2047
    %v2058 = vpack.c.bf16 %v2056, %v2056
    %v2059 = vpack.c.bf16 %v2057, %v2057
    %2060 = vset.pattern.permute.xlu0 6
    %2061 = vperm.xlu0 %2060, %v38
    %v2062 = vpop.permute.xlu0 %2061
    %v2064 = vmul.f32 %v2062, %v50
    %v2065 = vmul.f32 %v2062, %v54
    %v2066 = vmul.f32 %v2062, %v58
    %v2067 = vmul.f32 %v2062, %v62
    %v2068 = vmul.f32 %v2062, %v66
    %v2069 = vmul.f32 %v2062, %v70
    %v2070 = vmul.f32 %v2062, %v74
    %v2071 = vmul.f32 %v2062, %v78
    %v2072 = vadd.f32 %v2064, %v99
    %v2073 = vadd.f32 %v2065, %v103
    %v2074 = vadd.f32 %v2066, %v107
    %v2075 = vadd.f32 %v2067, %v111
    %v2076 = vadd.f32 %v2068, %v115
    %v2077 = vadd.f32 %v2069, %v119
    %v2078 = vadd.f32 %v2070, %v123
    %v2079 = vadd.f32 %v2071, %v127
    %2080 = vmatprep.subr.bf16.mxu0 %v771
    %2081 = vmatpush1.bf16.msra.mxu0 %v770
    %2082 = vmatprep.subr.bf16.mxu0 %v763
    %2083 = vmatpush1.bf16.msra.mxu0 %v762
    %2084 = vmatprep.subr.bf16.mxu0 %v755
    %2085 = vmatpush1.bf16.msra.mxu0 %v754
    %2086 = vmatprep.subr.bf16.mxu0 %v747
    %2087 = vmatpush1.bf16.msra.mxu0 %v746
    %2088 = vmatprep.subr.bf16.mxu0 %v739
    %2089 = vmatpush1.bf16.msra.mxu0 %v738
    %2090 = vmatprep.subr.bf16.mxu0 %v731
    %2091 = vmatpush1.bf16.msra.mxu0 %v730
    %2092 = vmatprep.subr.bf16.mxu0 %v723
    %2093 = vmatpush1.bf16.msra.mxu0 %v722
    %2094 = vmatprep.subr.bf16.mxu0 %v715
    %2095 = vmatpush1.bf16.msra.mxu0 %v714
    %2096 = vmatprep.subr.bf16.mxu0 %v835
    %2097 = vmatpush2.bf16.msra.mxu0 %v834
    %2098 = vmatprep.subr.bf16.mxu0 %v827
    %2099 = vmatpush2.bf16.msra.mxu0 %v826
    %2100 = vmatprep.subr.bf16.mxu0 %v819
    %2101 = vmatpush2.bf16.msra.mxu0 %v818
    %2102 = vmatprep.subr.bf16.mxu0 %v811
    %2103 = vmatpush2.bf16.msra.mxu0 %v810
    %2104 = vmatprep.subr.bf16.mxu0 %v803
    %2105 = vmatpush2.bf16.msra.mxu0 %v802
    %2106 = vmatprep.subr.bf16.mxu0 %v795
    %2107 = vmatpush2.bf16.msra.mxu0 %v794
    %2108 = vmatprep.subr.bf16.mxu0 %v787
    %2109 = vmatpush2.bf16.msra.mxu0 %v786
    %2110 = vmatprep.subr.bf16.mxu0 %v779
    %2111 = vmatpush2.bf16.msra.mxu0 %v778
    %2112 = vmatprep.mubr.bf16.mxu0 %v2059
    %2113 = vmatmul.mubr.bf16.gmra.mxu0 %v2058
    %v2114 = vpop.f32.mrf.mxu0
    %v2115 = vadd.f32 %v2072, %v2114
    %v2116 = vpop.f32.mrf.mxu0
    %v2117 = vadd.f32 %v2073, %v2116
    %v2118 = vpop.f32.mrf.mxu0
    %v2119 = vpop.f32.mrf.mxu0
    %2120 = vdwg.mxu0
    %2121 = vmatprep.subr.bf16.mxu0 %v773
    %2122 = vmatpush1.bf16.msra.mxu0 %v772
    %2123 = vmatprep.subr.bf16.mxu0 %v765
    %2124 = vmatpush1.bf16.msra.mxu0 %v764
    %2125 = vmatprep.subr.bf16.mxu0 %v757
    %2126 = vmatpush1.bf16.msra.mxu0 %v756
    %2127 = vmatprep.subr.bf16.mxu0 %v749
    %2128 = vmatpush1.bf16.msra.mxu0 %v748
    %2129 = vmatprep.subr.bf16.mxu0 %v741
    %2130 = vmatpush1.bf16.msra.mxu0 %v740
    %2131 = vmatprep.subr.bf16.mxu0 %v733
    %2132 = vmatpush1.bf16.msra.mxu0 %v732
    %2133 = vmatprep.subr.bf16.mxu0 %v725
    %2134 = vmatpush1.bf16.msra.mxu0 %v724
    %2135 = vmatprep.subr.bf16.mxu0 %v717
    %2136 = vmatpush1.bf16.msra.mxu0 %v716
    %2137 = vmatprep.subr.bf16.mxu0 %v837
    %2138 = vmatpush2.bf16.msra.mxu0 %v836
    %2139 = vmatprep.subr.bf16.mxu0 %v829
    %2140 = vmatpush2.bf16.msra.mxu0 %v828
    %2141 = vmatprep.subr.bf16.mxu0 %v821
    %2142 = vmatpush2.bf16.msra.mxu0 %v820
    %2143 = vmatprep.subr.bf16.mxu0 %v813
    %2144 = vmatpush2.bf16.msra.mxu0 %v812
    %2145 = vmatprep.subr.bf16.mxu0 %v805
    %2146 = vmatpush2.bf16.msra.mxu0 %v804
    %2147 = vmatprep.subr.bf16.mxu0 %v797
    %2148 = vmatpush2.bf16.msra.mxu0 %v796
    %2149 = vmatprep.subr.bf16.mxu0 %v789
    %2150 = vmatpush2.bf16.msra.mxu0 %v788
    %2151 = vmatprep.subr.bf16.mxu0 %v781
    %2152 = vmatpush2.bf16.msra.mxu0 %v780
    %2153 = vmatprep.mubr.bf16.mxu0 %v2059
    %2154 = vmatmul.mubr.bf16.gmra.mxu0 %v2058
    %v2155 = vpop.f32.mrf.mxu0
    %v2156 = vadd.f32 %v2074, %v2155
    %v2157 = vpop.f32.mrf.mxu0
    %v2158 = vadd.f32 %v2075, %v2157
    %v2159 = vpop.f32.mrf.mxu0
    %v2160 = vpop.f32.mrf.mxu0
    %2161 = vdwg.mxu0
    %2162 = vmatprep.subr.bf16.mxu0 %v775
    %2163 = vmatpush1.bf16.msra.mxu0 %v774
    %2164 = vmatprep.subr.bf16.mxu0 %v767
    %2165 = vmatpush1.bf16.msra.mxu0 %v766
    %2166 = vmatprep.subr.bf16.mxu0 %v759
    %2167 = vmatpush1.bf16.msra.mxu0 %v758
    %2168 = vmatprep.subr.bf16.mxu0 %v751
    %2169 = vmatpush1.bf16.msra.mxu0 %v750
    %2170 = vmatprep.subr.bf16.mxu0 %v743
    %2171 = vmatpush1.bf16.msra.mxu0 %v742
    %2172 = vmatprep.subr.bf16.mxu0 %v735
    %2173 = vmatpush1.bf16.msra.mxu0 %v734
    %2174 = vmatprep.subr.bf16.mxu0 %v727
    %2175 = vmatpush1.bf16.msra.mxu0 %v726
    %2176 = vmatprep.subr.bf16.mxu0 %v719
    %2177 = vmatpush1.bf16.msra.mxu0 %v718
    %2178 = vmatprep.subr.bf16.mxu0 %v839
    %2179 = vmatpush2.bf16.msra.mxu0 %v838
    %2180 = vmatprep.subr.bf16.mxu0 %v831
    %2181 = vmatpush2.bf16.msra.mxu0 %v830
    %2182 = vmatprep.subr.bf16.mxu0 %v823
    %2183 = vmatpush2.bf16.msra.mxu0 %v822
    %2184 = vmatprep.subr.bf16.mxu0 %v815
    %2185 = vmatpush2.bf16.msra.mxu0 %v814
    %2186 = vmatprep.subr.bf16.mxu0 %v807
    %2187 = vmatpush2.bf16.msra.mxu0 %v806
    %2188 = vmatprep.subr.bf16.mxu0 %v799
    %2189 = vmatpush2.bf16.msra.mxu0 %v798
    %2190 = vmatprep.subr.bf16.mxu0 %v791
    %2191 = vmatpush2.bf16.msra.mxu0 %v790
    %2192 = vmatprep.subr.bf16.mxu0 %v783
    %2193 = vmatpush2.bf16.msra.mxu0 %v782
    %2194 = vmatprep.mubr.bf16.mxu0 %v2059
    %2195 = vmatmul.mubr.bf16.gmra.mxu0 %v2058
    %v2196 = vpop.f32.mrf.mxu0
    %v2197 = vadd.f32 %v2076, %v2196
    %v2198 = vpop.f32.mrf.mxu0
    %v2199 = vadd.f32 %v2077, %v2198
    %v2200 = vpop.f32.mrf.mxu0
    %v2201 = vpop.f32.mrf.mxu0
    %2202 = vdwg.mxu0
    %2203 = vmatprep.subr.bf16.mxu0 %v777
    %2204 = vmatpush1.bf16.msra.mxu0 %v776
    %2205 = vmatprep.subr.bf16.mxu0 %v769
    %2206 = vmatpush1.bf16.msra.mxu0 %v768
    %2207 = vmatprep.subr.bf16.mxu0 %v761
    %2208 = vmatpush1.bf16.msra.mxu0 %v760
    %2209 = vmatprep.subr.bf16.mxu0 %v753
    %2210 = vmatpush1.bf16.msra.mxu0 %v752
    %2211 = vmatprep.subr.bf16.mxu0 %v745
    %2212 = vmatpush1.bf16.msra.mxu0 %v744
    %2213 = vmatprep.subr.bf16.mxu0 %v737
    %2214 = vmatpush1.bf16.msra.mxu0 %v736
    %2215 = vmatprep.subr.bf16.mxu0 %v729
    %2216 = vmatpush1.bf16.msra.mxu0 %v728
    %2217 = vmatprep.subr.bf16.mxu0 %v721
    %2218 = vmatpush1.bf16.msra.mxu0 %v720
    %2219 = vmatprep.subr.bf16.mxu0 %v841
    %2220 = vmatpush2.bf16.msra.mxu0 %v840
    %2221 = vmatprep.subr.bf16.mxu0 %v833
    %2222 = vmatpush2.bf16.msra.mxu0 %v832
    %2223 = vmatprep.subr.bf16.mxu0 %v825
    %2224 = vmatpush2.bf16.msra.mxu0 %v824
    %2225 = vmatprep.subr.bf16.mxu0 %v817
    %2226 = vmatpush2.bf16.msra.mxu0 %v816
    %2227 = vmatprep.subr.bf16.mxu0 %v809
    %2228 = vmatpush2.bf16.msra.mxu0 %v808
    %2229 = vmatprep.subr.bf16.mxu0 %v801
    %2230 = vmatpush2.bf16.msra.mxu0 %v800
    %2231 = vmatprep.subr.bf16.mxu0 %v793
    %2232 = vmatpush2.bf16.msra.mxu0 %v792
    %2233 = vmatprep.subr.bf16.mxu0 %v785
    %2234 = vmatpush2.bf16.msra.mxu0 %v784
    %2235 = vmatprep.mubr.bf16.mxu0 %v2059
    %2236 = vmatmul.mubr.bf16.gmra.mxu0 %v2058
    %v2237 = vpop.f32.mrf.mxu0
    %v2238 = vadd.f32 %v2078, %v2237
    %v2239 = vpop.f32.mrf.mxu0
    %v2240 = vadd.f32 %v2079, %v2239
    %v2241 = vpop.f32.mrf.mxu0
    %v2242 = vpop.f32.mrf.mxu0
    %2243 = vdwg.mxu0
    %v2244 = vmul.f32 %v2115, 0.5
    %v2245 = vmul.f32 %v2117, 0.5
    %v2246 = vmul.f32 %v2156, 0.5
    %v2247 = vmul.f32 %v2158, 0.5
    %v2248 = vtanh.pop %v2244
    %v2249 = vtanh.pop %v2245
    %v2250 = vtanh.pop %v2246
    %v2251 = vtanh.pop %v2247
    %v2252 = vmul.f32 %v2248, 0.5
    %v2253 = vmul.f32 %v2249, 0.5
    %v2254 = vmul.f32 %v2250, 0.5
    %v2255 = vmul.f32 %v2251, 0.5
    %v2256 = vadd.f32 %v2252, 0.5
    %v2257 = vadd.f32 %v2253, 0.5
    %v2258 = vadd.f32 %v2254, 0.5
    %v2259 = vadd.f32 %v2255, 0.5
    %v2260 = vtanh.pop %v2197
    %v2261 = vtanh.pop %v2199
    %v2262 = vmul.f32 %v2258, %v2044
    %v2263 = vmul.f32 %v2259, %v2045
    %v2264 = vmul.f32 %v2256, %v2260
    %v2265 = vmul.f32 %v2257, %v2261
    %v2266 = vadd.f32 %v2262, %v2264
    %v2267 = vadd.f32 %v2263, %v2265
    %v2268 = vtanh.pop %v2266
    %v2269 = vtanh.pop %v2267
    %v2270 = vmul.f32 %v2238, 0.5
    %v2271 = vmul.f32 %v2240, 0.5
    %v2272 = vtanh.pop %v2270
    %v2273 = vtanh.pop %v2271
    %v2274 = vmul.f32 %v2272, 0.5
    %v2275 = vmul.f32 %v2273, 0.5
    %v2276 = vadd.f32 %v2274, 0.5
    %v2277 = vadd.f32 %v2275, 0.5
    %v2278 = vmul.f32 %v2276, %v2268
    %v2279 = vmul.f32 %v2277, %v2269
    %v2280 = vpack.c.bf16 %v2278, %v2278
    %v2281 = vpack.c.bf16 %v2279, %v2279
    %2282 = vset.pattern.permute.xlu0 7
    %2283 = vperm.xlu0 %2282, %v38
    %v2284 = vpop.permute.xlu0 %2283
    %v2286 = vmul.f32 %v2284, %v50
    %v2287 = vmul.f32 %v2284, %v54
    %v2288 = vmul.f32 %v2284, %v58
    %v2289 = vmul.f32 %v2284, %v62
    %v2290 = vmul.f32 %v2284, %v66
    %v2291 = vmul.f32 %v2284, %v70
    %v2292 = vmul.f32 %v2284, %v74
    %v2293 = vmul.f32 %v2284, %v78
    %v2294 = vadd.f32 %v2286, %v99
    %v2295 = vadd.f32 %v2287, %v103
    %v2296 = vadd.f32 %v2288, %v107
    %v2297 = vadd.f32 %v2289, %v111
    %v2298 = vadd.f32 %v2290, %v115
    %v2299 = vadd.f32 %v2291, %v119
    %v2300 = vadd.f32 %v2292, %v123
    %v2301 = vadd.f32 %v2293, %v127
    %2302 = vmatprep.subr.bf16.mxu0 %v771
    %2303 = vmatpush1.bf16.msra.mxu0 %v770
    %2304 = vmatprep.subr.bf16.mxu0 %v763
    %2305 = vmatpush1.bf16.msra.mxu0 %v762
    %2306 = vmatprep.subr.bf16.mxu0 %v755
    %2307 = vmatpush1.bf16.msra.mxu0 %v754
    %2308 = vmatprep.subr.bf16.mxu0 %v747
    %2309 = vmatpush1.bf16.msra.mxu0 %v746
    %2310 = vmatprep.subr.bf16.mxu0 %v739
    %2311 = vmatpush1.bf16.msra.mxu0 %v738
    %2312 = vmatprep.subr.bf16.mxu0 %v731
    %2313 = vmatpush1.bf16.msra.mxu0 %v730
    %2314 = vmatprep.subr.bf16.mxu0 %v723
    %2315 = vmatpush1.bf16.msra.mxu0 %v722
    %2316 = vmatprep.subr.bf16.mxu0 %v715
    %2317 = vmatpush1.bf16.msra.mxu0 %v714
    %2318 = vmatprep.subr.bf16.mxu0 %v835
    %2319 = vmatpush2.bf16.msra.mxu0 %v834
    %2320 = vmatprep.subr.bf16.mxu0 %v827
    %2321 = vmatpush2.bf16.msra.mxu0 %v826
    %2322 = vmatprep.subr.bf16.mxu0 %v819
    %2323 = vmatpush2.bf16.msra.mxu0 %v818
    %2324 = vmatprep.subr.bf16.mxu0 %v811
    %2325 = vmatpush2.bf16.msra.mxu0 %v810
    %2326 = vmatprep.subr.bf16.mxu0 %v803
    %2327 = vmatpush2.bf16.msra.mxu0 %v802
    %2328 = vmatprep.subr.bf16.mxu0 %v795
    %2329 = vmatpush2.bf16.msra.mxu0 %v794
    %2330 = vmatprep.subr.bf16.mxu0 %v787
    %2331 = vmatpush2.bf16.msra.mxu0 %v786
    %2332 = vmatprep.subr.bf16.mxu0 %v779
    %2333 = vmatpush2.bf16.msra.mxu0 %v778
    %2334 = vmatprep.mubr.bf16.mxu0 %v2281
    %2335 = vmatmul.mubr.bf16.gmra.mxu0 %v2280
    %v2336 = vpop.f32.mrf.mxu0
    %v2337 = vadd.f32 %v2294, %v2336
    %v2338 = vpop.f32.mrf.mxu0
    %v2339 = vadd.f32 %v2295, %v2338
    %v2340 = vpop.f32.mrf.mxu0
    %v2341 = vpop.f32.mrf.mxu0
    %2342 = vdwg.mxu0
    %2343 = vmatprep.subr.bf16.mxu0 %v773
    %2344 = vmatpush1.bf16.msra.mxu0 %v772
    %2345 = vmatprep.subr.bf16.mxu0 %v765
    %2346 = vmatpush1.bf16.msra.mxu0 %v764
    %2347 = vmatprep.subr.bf16.mxu0 %v757
    %2348 = vmatpush1.bf16.msra.mxu0 %v756
    %2349 = vmatprep.subr.bf16.mxu0 %v749
    %2350 = vmatpush1.bf16.msra.mxu0 %v748
    %2351 = vmatprep.subr.bf16.mxu0 %v741
    %2352 = vmatpush1.bf16.msra.mxu0 %v740
    %2353 = vmatprep.subr.bf16.mxu0 %v733
    %2354 = vmatpush1.bf16.msra.mxu0 %v732
    %2355 = vmatprep.subr.bf16.mxu0 %v725
    %2356 = vmatpush1.bf16.msra.mxu0 %v724
    %2357 = vmatprep.subr.bf16.mxu0 %v717
    %2358 = vmatpush1.bf16.msra.mxu0 %v716
    %2359 = vmatprep.subr.bf16.mxu0 %v837
    %2360 = vmatpush2.bf16.msra.mxu0 %v836
    %2361 = vmatprep.subr.bf16.mxu0 %v829
    %2362 = vmatpush2.bf16.msra.mxu0 %v828
    %2363 = vmatprep.subr.bf16.mxu0 %v821
    %2364 = vmatpush2.bf16.msra.mxu0 %v820
    %2365 = vmatprep.subr.bf16.mxu0 %v813
    %2366 = vmatpush2.bf16.msra.mxu0 %v812
    %2367 = vmatprep.subr.bf16.mxu0 %v805
    %2368 = vmatpush2.bf16.msra.mxu0 %v804
    %2369 = vmatprep.subr.bf16.mxu0 %v797
    %2370 = vmatpush2.bf16.msra.mxu0 %v796
    %2371 = vmatprep.subr.bf16.mxu0 %v789
    %2372 = vmatpush2.bf16.msra.mxu0 %v788
    %2373 = vmatprep.subr.bf16.mxu0 %v781
    %2374 = vmatpush2.bf16.msra.mxu0 %v780
    %2375 = vmatprep.mubr.bf16.mxu0 %v2281
    %2376 = vmatmul.mubr.bf16.gmra.mxu0 %v2280
    %v2377 = vpop.f32.mrf.mxu0
    %v2378 = vadd.f32 %v2296, %v2377
    %v2379 = vpop.f32.mrf.mxu0
    %v2380 = vadd.f32 %v2297, %v2379
    %v2381 = vpop.f32.mrf.mxu0
    %v2382 = vpop.f32.mrf.mxu0
    %2383 = vdwg.mxu0
    %2384 = vmatprep.subr.bf16.mxu0 %v775
    %2385 = vmatpush1.bf16.msra.mxu0 %v774
    %2386 = vmatprep.subr.bf16.mxu0 %v767
    %2387 = vmatpush1.bf16.msra.mxu0 %v766
    %2388 = vmatprep.subr.bf16.mxu0 %v759
    %2389 = vmatpush1.bf16.msra.mxu0 %v758
    %2390 = vmatprep.subr.bf16.mxu0 %v751
    %2391 = vmatpush1.bf16.msra.mxu0 %v750
    %2392 = vmatprep.subr.bf16.mxu0 %v743
    %2393 = vmatpush1.bf16.msra.mxu0 %v742
    %2394 = vmatprep.subr.bf16.mxu0 %v735
    %2395 = vmatpush1.bf16.msra.mxu0 %v734
    %2396 = vmatprep.subr.bf16.mxu0 %v727
    %2397 = vmatpush1.bf16.msra.mxu0 %v726
    %2398 = vmatprep.subr.bf16.mxu0 %v719
    %2399 = vmatpush1.bf16.msra.mxu0 %v718
    %2400 = vmatprep.subr.bf16.mxu0 %v839
    %2401 = vmatpush2.bf16.msra.mxu0 %v838
    %2402 = vmatprep.subr.bf16.mxu0 %v831
    %2403 = vmatpush2.bf16.msra.mxu0 %v830
    %2404 = vmatprep.subr.bf16.mxu0 %v823
    %2405 = vmatpush2.bf16.msra.mxu0 %v822
    %2406 = vmatprep.subr.bf16.mxu0 %v815
    %2407 = vmatpush2.bf16.msra.mxu0 %v814
    %2408 = vmatprep.subr.bf16.mxu0 %v807
    %2409 = vmatpush2.bf16.msra.mxu0 %v806
    %2410 = vmatprep.subr.bf16.mxu0 %v799
    %2411 = vmatpush2.bf16.msra.mxu0 %v798
    %2412 = vmatprep.subr.bf16.mxu0 %v791
    %2413 = vmatpush2.bf16.msra.mxu0 %v790
    %2414 = vmatprep.subr.bf16.mxu0 %v783
    %2415 = vmatpush2.bf16.msra.mxu0 %v782
    %2416 = vmatprep.mubr.bf16.mxu0 %v2281
    %2417 = vmatmul.mubr.bf16.gmra.mxu0 %v2280
    %v2418 = vpop.f32.mrf.mxu0
    %v2419 = vadd.f32 %v2298, %v2418
    %v2420 = vpop.f32.mrf.mxu0
    %v2421 = vadd.f32 %v2299, %v2420
    %v2422 = vpop.f32.mrf.mxu0
    %v2423 = vpop.f32.mrf.mxu0
    %2424 = vdwg.mxu0
    %2425 = vmatprep.subr.bf16.mxu0 %v777
    %2426 = vmatpush1.bf16.msra.mxu0 %v776
    %2427 = vmatprep.subr.bf16.mxu0 %v769
    %2428 = vmatpush1.bf16.msra.mxu0 %v768
    %2429 = vmatprep.subr.bf16.mxu0 %v761
    %2430 = vmatpush1.bf16.msra.mxu0 %v760
    %2431 = vmatprep.subr.bf16.mxu0 %v753
    %2432 = vmatpush1.bf16.msra.mxu0 %v752
    %2433 = vmatprep.subr.bf16.mxu0 %v745
    %2434 = vmatpush1.bf16.msra.mxu0 %v744
    %2435 = vmatprep.subr.bf16.mxu0 %v737
    %2436 = vmatpush1.bf16.msra.mxu0 %v736
    %2437 = vmatprep.subr.bf16.mxu0 %v729
    %2438 = vmatpush1.bf16.msra.mxu0 %v728
    %2439 = vmatprep.subr.bf16.mxu0 %v721
    %2440 = vmatpush1.bf16.msra.mxu0 %v720
    %2441 = vmatprep.subr.bf16.mxu0 %v841
    %2442 = vmatpush2.bf16.msra.mxu0 %v840
    %2443 = vmatprep.subr.bf16.mxu0 %v833
    %2444 = vmatpush2.bf16.msra.mxu0 %v832
    %2445 = vmatprep.subr.bf16.mxu0 %v825
    %2446 = vmatpush2.bf16.msra.mxu0 %v824
    %2447 = vmatprep.subr.bf16.mxu0 %v817
    %2448 = vmatpush2.bf16.msra.mxu0 %v816
    %2449 = vmatprep.subr.bf16.mxu0 %v809
    %2450 = vmatpush2.bf16.msra.mxu0 %v808
    %2451 = vmatprep.subr.bf16.mxu0 %v801
    %2452 = vmatpush2.bf16.msra.mxu0 %v800
    %2453 = vmatprep.subr.bf16.mxu0 %v793
    %2454 = vmatpush2.bf16.msra.mxu0 %v792
    %2455 = vmatprep.subr.bf16.mxu0 %v785
    %2456 = vmatpush2.bf16.msra.mxu0 %v784
    %2457 = vmatprep.mubr.bf16.mxu0 %v2281
    %2458 = vmatmul.mubr.bf16.gmra.mxu0 %v2280
    %v2459 = vpop.f32.mrf.mxu0
    %v2460 = vadd.f32 %v2300, %v2459
    %v2461 = vpop.f32.mrf.mxu0
    %v2462 = vadd.f32 %v2301, %v2461
    %v2463 = vpop.f32.mrf.mxu0
    %v2464 = vpop.f32.mrf.mxu0
    %2465 = vdwg.mxu0
    %v2466 = vmul.f32 %v2337, 0.5
    %v2467 = vmul.f32 %v2339, 0.5
    %v2468 = vmul.f32 %v2378, 0.5
    %v2469 = vmul.f32 %v2380, 0.5
    %v2470 = vtanh.pop %v2466
    %v2471 = vtanh.pop %v2467
    %v2472 = vtanh.pop %v2468
    %v2473 = vtanh.pop %v2469
    %v2474 = vmul.f32 %v2470, 0.5
    %v2475 = vmul.f32 %v2471, 0.5
    %v2476 = vmul.f32 %v2472, 0.5
    %v2477 = vmul.f32 %v2473, 0.5
    %v2478 = vadd.f32 %v2474, 0.5
    %v2479 = vadd.f32 %v2475, 0.5
    %v2480 = vadd.f32 %v2476, 0.5
    %v2481 = vadd.f32 %v2477, 0.5
    %v2482 = vtanh.pop %v2419
    %v2483 = vtanh.pop %v2421
    %v2484 = vmul.f32 %v2480, %v2266
    %v2485 = vmul.f32 %v2481, %v2267
    %v2486 = vmul.f32 %v2478, %v2482
    %v2487 = vmul.f32 %v2479, %v2483
    %v2488 = vadd.f32 %v2484, %v2486
    %v2489 = vadd.f32 %v2485, %v2487
    %v2490 = vtanh.pop %v2488
    %v2491 = vtanh.pop %v2489
    %v2492 = vmul.f32 %v2460, 0.5
    %v2493 = vmul.f32 %v2462, 0.5
    %v2494 = vtanh.pop %v2492
    %v2495 = vtanh.pop %v2493
    %v2496 = vmul.f32 %v2494, 0.5
    %v2497 = vmul.f32 %v2495, 0.5
    %v2498 = vadd.f32 %v2496, 0.5
    %v2499 = vadd.f32 %v2497, 0.5
    %v2500 = vmul.f32 %v2498, %v2490
    %v2501 = vmul.f32 %v2499, %v2491
    %v2502 = vpack.c.bf16 %v2500, %v2500
    %v2503 = vpack.c.bf16 %v2501, %v2501
    %2504 = vset.pattern.permute.xlu0 8
    %2505 = vperm.xlu0 %2504, %v38
    %v2506 = vpop.permute.xlu0 %2505
    %v2508 = vmul.f32 %v2506, %v50
    %v2509 = vmul.f32 %v2506, %v54
    %v2510 = vmul.f32 %v2506, %v58
    %v2511 = vmul.f32 %v2506, %v62
    %v2512 = vmul.f32 %v2506, %v66
    %v2513 = vmul.f32 %v2506, %v70
    %v2514 = vmul.f32 %v2506, %v74
    %v2515 = vmul.f32 %v2506, %v78
    %v2516 = vadd.f32 %v2508, %v99
    %v2517 = vadd.f32 %v2509, %v103
    %v2518 = vadd.f32 %v2510, %v107
    %v2519 = vadd.f32 %v2511, %v111
    %v2520 = vadd.f32 %v2512, %v115
    %v2521 = vadd.f32 %v2513, %v119
    %v2522 = vadd.f32 %v2514, %v123
    %v2523 = vadd.f32 %v2515, %v127
    %2524 = vmatprep.subr.bf16.mxu0 %v771
    %2525 = vmatpush1.bf16.msra.mxu0 %v770
    %2526 = vmatprep.subr.bf16.mxu0 %v763
    %2527 = vmatpush1.bf16.msra.mxu0 %v762
    %2528 = vmatprep.subr.bf16.mxu0 %v755
    %2529 = vmatpush1.bf16.msra.mxu0 %v754
    %2530 = vmatprep.subr.bf16.mxu0 %v747
    %2531 = vmatpush1.bf16.msra.mxu0 %v746
    %2532 = vmatprep.subr.bf16.mxu0 %v739
    %2533 = vmatpush1.bf16.msra.mxu0 %v738
    %2534 = vmatprep.subr.bf16.mxu0 %v731
    %2535 = vmatpush1.bf16.msra.mxu0 %v730
    %2536 = vmatprep.subr.bf16.mxu0 %v723
    %2537 = vmatpush1.bf16.msra.mxu0 %v722
    %2538 = vmatprep.subr.bf16.mxu0 %v715
    %2539 = vmatpush1.bf16.msra.mxu0 %v714
    %2540 = vmatprep.subr.bf16.mxu0 %v835
    %2541 = vmatpush2.bf16.msra.mxu0 %v834
    %2542 = vmatprep.subr.bf16.mxu0 %v827
    %2543 = vmatpush2.bf16.msra.mxu0 %v826
    %2544 = vmatprep.subr.bf16.mxu0 %v819
    %2545 = vmatpush2.bf16.msra.mxu0 %v818
    %2546 = vmatprep.subr.bf16.mxu0 %v811
    %2547 = vmatpush2.bf16.msra.mxu0 %v810
    %2548 = vmatprep.subr.bf16.mxu0 %v803
    %2549 = vmatpush2.bf16.msra.mxu0 %v802
    %2550 = vmatprep.subr.bf16.mxu0 %v795
    %2551 = vmatpush2.bf16.msra.mxu0 %v794
    %2552 = vmatprep.subr.bf16.mxu0 %v787
    %2553 = vmatpush2.bf16.msra.mxu0 %v786
    %2554 = vmatprep.subr.bf16.mxu0 %v779
    %2555 = vmatpush2.bf16.msra.mxu0 %v778
    %2556 = vmatprep.mubr.bf16.mxu0 %v2503
    %2557 = vmatmul.mubr.bf16.gmra.mxu0 %v2502
    %v2558 = vpop.f32.mrf.mxu0
    %v2559 = vadd.f32 %v2516, %v2558
    %v2560 = vpop.f32.mrf.mxu0
    %v2561 = vadd.f32 %v2517, %v2560
    %v2562 = vpop.f32.mrf.mxu0
    %v2563 = vpop.f32.mrf.mxu0
    %2564 = vdwg.mxu0
    %2565 = vmatprep.subr.bf16.mxu0 %v773
    %2566 = vmatpush1.bf16.msra.mxu0 %v772
    %2567 = vmatprep.subr.bf16.mxu0 %v765
    %2568 = vmatpush1.bf16.msra.mxu0 %v764
    %2569 = vmatprep.subr.bf16.mxu0 %v757
    %2570 = vmatpush1.bf16.msra.mxu0 %v756
    %2571 = vmatprep.subr.bf16.mxu0 %v749
    %2572 = vmatpush1.bf16.msra.mxu0 %v748
    %2573 = vmatprep.subr.bf16.mxu0 %v741
    %2574 = vmatpush1.bf16.msra.mxu0 %v740
    %2575 = vmatprep.subr.bf16.mxu0 %v733
    %2576 = vmatpush1.bf16.msra.mxu0 %v732
    %2577 = vmatprep.subr.bf16.mxu0 %v725
    %2578 = vmatpush1.bf16.msra.mxu0 %v724
    %2579 = vmatprep.subr.bf16.mxu0 %v717
    %2580 = vmatpush1.bf16.msra.mxu0 %v716
    %2581 = vmatprep.subr.bf16.mxu0 %v837
    %2582 = vmatpush2.bf16.msra.mxu0 %v836
    %2583 = vmatprep.subr.bf16.mxu0 %v829
    %2584 = vmatpush2.bf16.msra.mxu0 %v828
    %2585 = vmatprep.subr.bf16.mxu0 %v821
    %2586 = vmatpush2.bf16.msra.mxu0 %v820
    %2587 = vmatprep.subr.bf16.mxu0 %v813
    %2588 = vmatpush2.bf16.msra.mxu0 %v812
    %2589 = vmatprep.subr.bf16.mxu0 %v805
    %2590 = vmatpush2.bf16.msra.mxu0 %v804
    %2591 = vmatprep.subr.bf16.mxu0 %v797
    %2592 = vmatpush2.bf16.msra.mxu0 %v796
    %2593 = vmatprep.subr.bf16.mxu0 %v789
    %2594 = vmatpush2.bf16.msra.mxu0 %v788
    %2595 = vmatprep.subr.bf16.mxu0 %v781
    %2596 = vmatpush2.bf16.msra.mxu0 %v780
    %2597 = vmatprep.mubr.bf16.mxu0 %v2503
    %2598 = vmatmul.mubr.bf16.gmra.mxu0 %v2502
    %v2599 = vpop.f32.mrf.mxu0
    %v2600 = vadd.f32 %v2518, %v2599
    %v2601 = vpop.f32.mrf.mxu0
    %v2602 = vadd.f32 %v2519, %v2601
    %v2603 = vpop.f32.mrf.mxu0
    %v2604 = vpop.f32.mrf.mxu0
    %2605 = vdwg.mxu0
    %2606 = vmatprep.subr.bf16.mxu0 %v775
    %2607 = vmatpush1.bf16.msra.mxu0 %v774
    %2608 = vmatprep.subr.bf16.mxu0 %v767
    %2609 = vmatpush1.bf16.msra.mxu0 %v766
    %2610 = vmatprep.subr.bf16.mxu0 %v759
    %2611 = vmatpush1.bf16.msra.mxu0 %v758
    %2612 = vmatprep.subr.bf16.mxu0 %v751
    %2613 = vmatpush1.bf16.msra.mxu0 %v750
    %2614 = vmatprep.subr.bf16.mxu0 %v743
    %2615 = vmatpush1.bf16.msra.mxu0 %v742
    %2616 = vmatprep.subr.bf16.mxu0 %v735
    %2617 = vmatpush1.bf16.msra.mxu0 %v734
    %2618 = vmatprep.subr.bf16.mxu0 %v727
    %2619 = vmatpush1.bf16.msra.mxu0 %v726
    %2620 = vmatprep.subr.bf16.mxu0 %v719
    %2621 = vmatpush1.bf16.msra.mxu0 %v718
    %2622 = vmatprep.subr.bf16.mxu0 %v839
    %2623 = vmatpush2.bf16.msra.mxu0 %v838
    %2624 = vmatprep.subr.bf16.mxu0 %v831
    %2625 = vmatpush2.bf16.msra.mxu0 %v830
    %2626 = vmatprep.subr.bf16.mxu0 %v823
    %2627 = vmatpush2.bf16.msra.mxu0 %v822
    %2628 = vmatprep.subr.bf16.mxu0 %v815
    %2629 = vmatpush2.bf16.msra.mxu0 %v814
    %2630 = vmatprep.subr.bf16.mxu0 %v807
    %2631 = vmatpush2.bf16.msra.mxu0 %v806
    %2632 = vmatprep.subr.bf16.mxu0 %v799
    %2633 = vmatpush2.bf16.msra.mxu0 %v798
    %2634 = vmatprep.subr.bf16.mxu0 %v791
    %2635 = vmatpush2.bf16.msra.mxu0 %v790
    %2636 = vmatprep.subr.bf16.mxu0 %v783
    %2637 = vmatpush2.bf16.msra.mxu0 %v782
    %2638 = vmatprep.mubr.bf16.mxu0 %v2503
    %2639 = vmatmul.mubr.bf16.gmra.mxu0 %v2502
    %v2640 = vpop.f32.mrf.mxu0
    %v2641 = vadd.f32 %v2520, %v2640
    %v2642 = vpop.f32.mrf.mxu0
    %v2643 = vadd.f32 %v2521, %v2642
    %v2644 = vpop.f32.mrf.mxu0
    %v2645 = vpop.f32.mrf.mxu0
    %2646 = vdwg.mxu0
    %2647 = vmatprep.subr.bf16.mxu0 %v777
    %2648 = vmatpush1.bf16.msra.mxu0 %v776
    %2649 = vmatprep.subr.bf16.mxu0 %v769
    %2650 = vmatpush1.bf16.msra.mxu0 %v768
    %2651 = vmatprep.subr.bf16.mxu0 %v761
    %2652 = vmatpush1.bf16.msra.mxu0 %v760
    %2653 = vmatprep.subr.bf16.mxu0 %v753
    %2654 = vmatpush1.bf16.msra.mxu0 %v752
    %2655 = vmatprep.subr.bf16.mxu0 %v745
    %2656 = vmatpush1.bf16.msra.mxu0 %v744
    %2657 = vmatprep.subr.bf16.mxu0 %v737
    %2658 = vmatpush1.bf16.msra.mxu0 %v736
    %2659 = vmatprep.subr.bf16.mxu0 %v729
    %2660 = vmatpush1.bf16.msra.mxu0 %v728
    %2661 = vmatprep.subr.bf16.mxu0 %v721
    %2662 = vmatpush1.bf16.msra.mxu0 %v720
    %2663 = vmatprep.subr.bf16.mxu0 %v841
    %2664 = vmatpush2.bf16.msra.mxu0 %v840
    %2665 = vmatprep.subr.bf16.mxu0 %v833
    %2666 = vmatpush2.bf16.msra.mxu0 %v832
    %2667 = vmatprep.subr.bf16.mxu0 %v825
    %2668 = vmatpush2.bf16.msra.mxu0 %v824
    %2669 = vmatprep.subr.bf16.mxu0 %v817
    %2670 = vmatpush2.bf16.msra.mxu0 %v816
    %2671 = vmatprep.subr.bf16.mxu0 %v809
    %2672 = vmatpush2.bf16.msra.mxu0 %v808
    %2673 = vmatprep.subr.bf16.mxu0 %v801
    %2674 = vmatpush2.bf16.msra.mxu0 %v800
    %2675 = vmatprep.subr.bf16.mxu0 %v793
    %2676 = vmatpush2.bf16.msra.mxu0 %v792
    %2677 = vmatprep.subr.bf16.mxu0 %v785
    %2678 = vmatpush2.bf16.msra.mxu0 %v784
    %2679 = vmatprep.mubr.bf16.mxu0 %v2503
    %2680 = vmatmul.mubr.bf16.gmra.mxu0 %v2502
    %v2681 = vpop.f32.mrf.mxu0
    %v2682 = vadd.f32 %v2522, %v2681
    %v2683 = vpop.f32.mrf.mxu0
    %v2684 = vadd.f32 %v2523, %v2683
    %v2685 = vpop.f32.mrf.mxu0
    %v2686 = vpop.f32.mrf.mxu0
    %2687 = vdwg.mxu0
    %v2688 = vmul.f32 %v2559, 0.5
    %v2689 = vmul.f32 %v2561, 0.5
    %v2690 = vmul.f32 %v2600, 0.5
    %v2691 = vmul.f32 %v2602, 0.5
    %v2692 = vtanh.pop %v2688
    %v2693 = vtanh.pop %v2689
    %v2694 = vtanh.pop %v2690
    %v2695 = vtanh.pop %v2691
    %v2696 = vmul.f32 %v2692, 0.5
    %v2697 = vmul.f32 %v2693, 0.5
    %v2698 = vmul.f32 %v2694, 0.5
    %v2699 = vmul.f32 %v2695, 0.5
    %v2700 = vadd.f32 %v2696, 0.5
    %v2701 = vadd.f32 %v2697, 0.5
    %v2702 = vadd.f32 %v2698, 0.5
    %v2703 = vadd.f32 %v2699, 0.5
    %v2704 = vtanh.pop %v2641
    %v2705 = vtanh.pop %v2643
    %v2706 = vmul.f32 %v2702, %v2488
    %v2707 = vmul.f32 %v2703, %v2489
    %v2708 = vmul.f32 %v2700, %v2704
    %v2709 = vmul.f32 %v2701, %v2705
    %v2710 = vadd.f32 %v2706, %v2708
    %v2711 = vadd.f32 %v2707, %v2709
    %v2712 = vtanh.pop %v2710
    %v2713 = vtanh.pop %v2711
    %v2714 = vmul.f32 %v2682, 0.5
    %v2715 = vmul.f32 %v2684, 0.5
    %v2716 = vtanh.pop %v2714
    %v2717 = vtanh.pop %v2715
    %v2718 = vmul.f32 %v2716, 0.5
    %v2719 = vmul.f32 %v2717, 0.5
    %v2720 = vadd.f32 %v2718, 0.5
    %v2721 = vadd.f32 %v2719, 0.5
    %v2722 = vmul.f32 %v2720, %v2712
    %v2723 = vmul.f32 %v2721, %v2713
    %v2724 = vpack.c.bf16 %v2722, %v2722
    %v2725 = vpack.c.bf16 %v2723, %v2723
    %2726 = vset.pattern.permute.xlu0 9
    %2727 = vperm.xlu0 %2726, %v38
    %v2728 = vpop.permute.xlu0 %2727
    %v2730 = vmul.f32 %v2728, %v50
    %v2731 = vmul.f32 %v2728, %v54
    %v2732 = vmul.f32 %v2728, %v58
    %v2733 = vmul.f32 %v2728, %v62
    %v2734 = vmul.f32 %v2728, %v66
    %v2735 = vmul.f32 %v2728, %v70
    %v2736 = vmul.f32 %v2728, %v74
    %v2737 = vmul.f32 %v2728, %v78
    %v2738 = vadd.f32 %v2730, %v99
    %v2739 = vadd.f32 %v2731, %v103
    %v2740 = vadd.f32 %v2732, %v107
    %v2741 = vadd.f32 %v2733, %v111
    %v2742 = vadd.f32 %v2734, %v115
    %v2743 = vadd.f32 %v2735, %v119
    %v2744 = vadd.f32 %v2736, %v123
    %v2745 = vadd.f32 %v2737, %v127
    %2746 = vmatprep.subr.bf16.mxu0 %v771
    %2747 = vmatpush1.bf16.msra.mxu0 %v770
    %2748 = vmatprep.subr.bf16.mxu0 %v763
    %2749 = vmatpush1.bf16.msra.mxu0 %v762
    %2750 = vmatprep.subr.bf16.mxu0 %v755
    %2751 = vmatpush1.bf16.msra.mxu0 %v754
    %2752 = vmatprep.subr.bf16.mxu0 %v747
    %2753 = vmatpush1.bf16.msra.mxu0 %v746
    %2754 = vmatprep.subr.bf16.mxu0 %v739
    %2755 = vmatpush1.bf16.msra.mxu0 %v738
    %2756 = vmatprep.subr.bf16.mxu0 %v731
    %2757 = vmatpush1.bf16.msra.mxu0 %v730
    %2758 = vmatprep.subr.bf16.mxu0 %v723
    %2759 = vmatpush1.bf16.msra.mxu0 %v722
    %2760 = vmatprep.subr.bf16.mxu0 %v715
    %2761 = vmatpush1.bf16.msra.mxu0 %v714
    %2762 = vmatprep.subr.bf16.mxu0 %v835
    %2763 = vmatpush2.bf16.msra.mxu0 %v834
    %2764 = vmatprep.subr.bf16.mxu0 %v827
    %2765 = vmatpush2.bf16.msra.mxu0 %v826
    %2766 = vmatprep.subr.bf16.mxu0 %v819
    %2767 = vmatpush2.bf16.msra.mxu0 %v818
    %2768 = vmatprep.subr.bf16.mxu0 %v811
    %2769 = vmatpush2.bf16.msra.mxu0 %v810
    %2770 = vmatprep.subr.bf16.mxu0 %v803
    %2771 = vmatpush2.bf16.msra.mxu0 %v802
    %2772 = vmatprep.subr.bf16.mxu0 %v795
    %2773 = vmatpush2.bf16.msra.mxu0 %v794
    %2774 = vmatprep.subr.bf16.mxu0 %v787
    %2775 = vmatpush2.bf16.msra.mxu0 %v786
    %2776 = vmatprep.subr.bf16.mxu0 %v779
    %2777 = vmatpush2.bf16.msra.mxu0 %v778
    %2778 = vmatprep.mubr.bf16.mxu0 %v2725
    %2779 = vmatmul.mubr.bf16.gmra.mxu0 %v2724
    %v2780 = vpop.f32.mrf.mxu0
    %v2781 = vadd.f32 %v2738, %v2780
    %v2782 = vpop.f32.mrf.mxu0
    %v2783 = vadd.f32 %v2739, %v2782
    %v2784 = vpop.f32.mrf.mxu0
    %v2785 = vpop.f32.mrf.mxu0
    %2786 = vdwg.mxu0
    %2787 = vmatprep.subr.bf16.mxu0 %v773
    %2788 = vmatpush1.bf16.msra.mxu0 %v772
    %2789 = vmatprep.subr.bf16.mxu0 %v765
    %2790 = vmatpush1.bf16.msra.mxu0 %v764
    %2791 = vmatprep.subr.bf16.mxu0 %v757
    %2792 = vmatpush1.bf16.msra.mxu0 %v756
    %2793 = vmatprep.subr.bf16.mxu0 %v749
    %2794 = vmatpush1.bf16.msra.mxu0 %v748
    %2795 = vmatprep.subr.bf16.mxu0 %v741
    %2796 = vmatpush1.bf16.msra.mxu0 %v740
    %2797 = vmatprep.subr.bf16.mxu0 %v733
    %2798 = vmatpush1.bf16.msra.mxu0 %v732
    %2799 = vmatprep.subr.bf16.mxu0 %v725
    %2800 = vmatpush1.bf16.msra.mxu0 %v724
    %2801 = vmatprep.subr.bf16.mxu0 %v717
    %2802 = vmatpush1.bf16.msra.mxu0 %v716
    %2803 = vmatprep.subr.bf16.mxu0 %v837
    %2804 = vmatpush2.bf16.msra.mxu0 %v836
    %2805 = vmatprep.subr.bf16.mxu0 %v829
    %2806 = vmatpush2.bf16.msra.mxu0 %v828
    %2807 = vmatprep.subr.bf16.mxu0 %v821
    %2808 = vmatpush2.bf16.msra.mxu0 %v820
    %2809 = vmatprep.subr.bf16.mxu0 %v813
    %2810 = vmatpush2.bf16.msra.mxu0 %v812
    %2811 = vmatprep.subr.bf16.mxu0 %v805
    %2812 = vmatpush2.bf16.msra.mxu0 %v804
    %2813 = vmatprep.subr.bf16.mxu0 %v797
    %2814 = vmatpush2.bf16.msra.mxu0 %v796
    %2815 = vmatprep.subr.bf16.mxu0 %v789
    %2816 = vmatpush2.bf16.msra.mxu0 %v788
    %2817 = vmatprep.subr.bf16.mxu0 %v781
    %2818 = vmatpush2.bf16.msra.mxu0 %v780
    %2819 = vmatprep.mubr.bf16.mxu0 %v2725
    %2820 = vmatmul.mubr.bf16.gmra.mxu0 %v2724
    %v2821 = vpop.f32.mrf.mxu0
    %v2822 = vadd.f32 %v2740, %v2821
    %v2823 = vpop.f32.mrf.mxu0
    %v2824 = vadd.f32 %v2741, %v2823
    %v2825 = vpop.f32.mrf.mxu0
    %v2826 = vpop.f32.mrf.mxu0
    %2827 = vdwg.mxu0
    %2828 = vmatprep.subr.bf16.mxu0 %v775
    %2829 = vmatpush1.bf16.msra.mxu0 %v774
    %2830 = vmatprep.subr.bf16.mxu0 %v767
    %2831 = vmatpush1.bf16.msra.mxu0 %v766
    %2832 = vmatprep.subr.bf16.mxu0 %v759
    %2833 = vmatpush1.bf16.msra.mxu0 %v758
    %2834 = vmatprep.subr.bf16.mxu0 %v751
    %2835 = vmatpush1.bf16.msra.mxu0 %v750
    %2836 = vmatprep.subr.bf16.mxu0 %v743
    %2837 = vmatpush1.bf16.msra.mxu0 %v742
    %2838 = vmatprep.subr.bf16.mxu0 %v735
    %2839 = vmatpush1.bf16.msra.mxu0 %v734
    %2840 = vmatprep.subr.bf16.mxu0 %v727
    %2841 = vmatpush1.bf16.msra.mxu0 %v726
    %2842 = vmatprep.subr.bf16.mxu0 %v719
    %2843 = vmatpush1.bf16.msra.mxu0 %v718
    %2844 = vmatprep.subr.bf16.mxu0 %v839
    %2845 = vmatpush2.bf16.msra.mxu0 %v838
    %2846 = vmatprep.subr.bf16.mxu0 %v831
    %2847 = vmatpush2.bf16.msra.mxu0 %v830
    %2848 = vmatprep.subr.bf16.mxu0 %v823
    %2849 = vmatpush2.bf16.msra.mxu0 %v822
    %2850 = vmatprep.subr.bf16.mxu0 %v815
    %2851 = vmatpush2.bf16.msra.mxu0 %v814
    %2852 = vmatprep.subr.bf16.mxu0 %v807
    %2853 = vmatpush2.bf16.msra.mxu0 %v806
    %2854 = vmatprep.subr.bf16.mxu0 %v799
    %2855 = vmatpush2.bf16.msra.mxu0 %v798
    %2856 = vmatprep.subr.bf16.mxu0 %v791
    %2857 = vmatpush2.bf16.msra.mxu0 %v790
    %2858 = vmatprep.subr.bf16.mxu0 %v783
    %2859 = vmatpush2.bf16.msra.mxu0 %v782
    %2860 = vmatprep.mubr.bf16.mxu0 %v2725
    %2861 = vmatmul.mubr.bf16.gmra.mxu0 %v2724
    %v2862 = vpop.f32.mrf.mxu0
    %v2863 = vadd.f32 %v2742, %v2862
    %v2864 = vpop.f32.mrf.mxu0
    %v2865 = vadd.f32 %v2743, %v2864
    %v2866 = vpop.f32.mrf.mxu0
    %v2867 = vpop.f32.mrf.mxu0
    %2868 = vdwg.mxu0
    %2869 = vmatprep.subr.bf16.mxu0 %v777
    %2870 = vmatpush1.bf16.msra.mxu0 %v776
    %2871 = vmatprep.subr.bf16.mxu0 %v769
    %2872 = vmatpush1.bf16.msra.mxu0 %v768
    %2873 = vmatprep.subr.bf16.mxu0 %v761
    %2874 = vmatpush1.bf16.msra.mxu0 %v760
    %2875 = vmatprep.subr.bf16.mxu0 %v753
    %2876 = vmatpush1.bf16.msra.mxu0 %v752
    %2877 = vmatprep.subr.bf16.mxu0 %v745
    %2878 = vmatpush1.bf16.msra.mxu0 %v744
    %2879 = vmatprep.subr.bf16.mxu0 %v737
    %2880 = vmatpush1.bf16.msra.mxu0 %v736
    %2881 = vmatprep.subr.bf16.mxu0 %v729
    %2882 = vmatpush1.bf16.msra.mxu0 %v728
    %2883 = vmatprep.subr.bf16.mxu0 %v721
    %2884 = vmatpush1.bf16.msra.mxu0 %v720
    %2885 = vmatprep.subr.bf16.mxu0 %v841
    %2886 = vmatpush2.bf16.msra.mxu0 %v840
    %2887 = vmatprep.subr.bf16.mxu0 %v833
    %2888 = vmatpush2.bf16.msra.mxu0 %v832
    %2889 = vmatprep.subr.bf16.mxu0 %v825
    %2890 = vmatpush2.bf16.msra.mxu0 %v824
    %2891 = vmatprep.subr.bf16.mxu0 %v817
    %2892 = vmatpush2.bf16.msra.mxu0 %v816
    %2893 = vmatprep.subr.bf16.mxu0 %v809
    %2894 = vmatpush2.bf16.msra.mxu0 %v808
    %2895 = vmatprep.subr.bf16.mxu0 %v801
    %2896 = vmatpush2.bf16.msra.mxu0 %v800
    %2897 = vmatprep.subr.bf16.mxu0 %v793
    %2898 = vmatpush2.bf16.msra.mxu0 %v792
    %2899 = vmatprep.subr.bf16.mxu0 %v785
    %2900 = vmatpush2.bf16.msra.mxu0 %v784
    %2901 = vmatprep.mubr.bf16.mxu0 %v2725
    %2902 = vmatmul.mubr.bf16.gmra.mxu0 %v2724
    %v2903 = vpop.f32.mrf.mxu0
    %v2904 = vadd.f32 %v2744, %v2903
    %v2905 = vpop.f32.mrf.mxu0
    %v2906 = vadd.f32 %v2745, %v2905
    %v2907 = vpop.f32.mrf.mxu0
    %v2908 = vpop.f32.mrf.mxu0
    %2909 = vdwg.mxu0
    %v2910 = vmul.f32 %v2781, 0.5
    %v2911 = vmul.f32 %v2783, 0.5
    %v2912 = vmul.f32 %v2822, 0.5
    %v2913 = vmul.f32 %v2824, 0.5
    %v2914 = vtanh.pop %v2910
    %v2915 = vtanh.pop %v2911
    %v2916 = vtanh.pop %v2912
    %v2917 = vtanh.pop %v2913
    %v2918 = vmul.f32 %v2914, 0.5
    %v2919 = vmul.f32 %v2915, 0.5
    %v2920 = vmul.f32 %v2916, 0.5
    %v2921 = vmul.f32 %v2917, 0.5
    %v2922 = vadd.f32 %v2918, 0.5
    %v2923 = vadd.f32 %v2919, 0.5
    %v2924 = vadd.f32 %v2920, 0.5
    %v2925 = vadd.f32 %v2921, 0.5
    %v2926 = vtanh.pop %v2863
    %v2927 = vtanh.pop %v2865
    %v2928 = vmul.f32 %v2924, %v2710
    %v2929 = vmul.f32 %v2925, %v2711
    %v2930 = vmul.f32 %v2922, %v2926
    %v2931 = vmul.f32 %v2923, %v2927
    %v2932 = vadd.f32 %v2928, %v2930
    %v2933 = vadd.f32 %v2929, %v2931
    %v2934 = vtanh.pop %v2932
    %v2935 = vtanh.pop %v2933
    %v2936 = vmul.f32 %v2904, 0.5
    %v2937 = vmul.f32 %v2906, 0.5
    %v2938 = vtanh.pop %v2936
    %v2939 = vtanh.pop %v2937
    %v2940 = vmul.f32 %v2938, 0.5
    %v2941 = vmul.f32 %v2939, 0.5
    %v2942 = vadd.f32 %v2940, 0.5
    %v2943 = vadd.f32 %v2941, 0.5
    %v2944 = vmul.f32 %v2942, %v2934
    %v2945 = vmul.f32 %v2943, %v2935
    %v2946 = vpack.c.bf16 %v2944, %v2944
    %v2947 = vpack.c.bf16 %v2945, %v2945
    %2948 = vset.pattern.permute.xlu0 10
    %2949 = vperm.xlu0 %2948, %v38
    %v2950 = vpop.permute.xlu0 %2949
    %v2952 = vmul.f32 %v2950, %v50
    %v2953 = vmul.f32 %v2950, %v54
    %v2954 = vmul.f32 %v2950, %v58
    %v2955 = vmul.f32 %v2950, %v62
    %v2956 = vmul.f32 %v2950, %v66
    %v2957 = vmul.f32 %v2950, %v70
    %v2958 = vmul.f32 %v2950, %v74
    %v2959 = vmul.f32 %v2950, %v78
    %v2960 = vadd.f32 %v2952, %v99
    %v2961 = vadd.f32 %v2953, %v103
    %v2962 = vadd.f32 %v2954, %v107
    %v2963 = vadd.f32 %v2955, %v111
    %v2964 = vadd.f32 %v2956, %v115
    %v2965 = vadd.f32 %v2957, %v119
    %v2966 = vadd.f32 %v2958, %v123
    %v2967 = vadd.f32 %v2959, %v127
    %2968 = vmatprep.subr.bf16.mxu0 %v771
    %2969 = vmatpush1.bf16.msra.mxu0 %v770
    %2970 = vmatprep.subr.bf16.mxu0 %v763
    %2971 = vmatpush1.bf16.msra.mxu0 %v762
    %2972 = vmatprep.subr.bf16.mxu0 %v755
    %2973 = vmatpush1.bf16.msra.mxu0 %v754
    %2974 = vmatprep.subr.bf16.mxu0 %v747
    %2975 = vmatpush1.bf16.msra.mxu0 %v746
    %2976 = vmatprep.subr.bf16.mxu0 %v739
    %2977 = vmatpush1.bf16.msra.mxu0 %v738
    %2978 = vmatprep.subr.bf16.mxu0 %v731
    %2979 = vmatpush1.bf16.msra.mxu0 %v730
    %2980 = vmatprep.subr.bf16.mxu0 %v723
    %2981 = vmatpush1.bf16.msra.mxu0 %v722
    %2982 = vmatprep.subr.bf16.mxu0 %v715
    %2983 = vmatpush1.bf16.msra.mxu0 %v714
    %2984 = vmatprep.subr.bf16.mxu0 %v835
    %2985 = vmatpush2.bf16.msra.mxu0 %v834
    %2986 = vmatprep.subr.bf16.mxu0 %v827
    %2987 = vmatpush2.bf16.msra.mxu0 %v826
    %2988 = vmatprep.subr.bf16.mxu0 %v819
    %2989 = vmatpush2.bf16.msra.mxu0 %v818
    %2990 = vmatprep.subr.bf16.mxu0 %v811
    %2991 = vmatpush2.bf16.msra.mxu0 %v810
    %2992 = vmatprep.subr.bf16.mxu0 %v803
    %2993 = vmatpush2.bf16.msra.mxu0 %v802
    %2994 = vmatprep.subr.bf16.mxu0 %v795
    %2995 = vmatpush2.bf16.msra.mxu0 %v794
    %2996 = vmatprep.subr.bf16.mxu0 %v787
    %2997 = vmatpush2.bf16.msra.mxu0 %v786
    %2998 = vmatprep.subr.bf16.mxu0 %v779
    %2999 = vmatpush2.bf16.msra.mxu0 %v778
    %3000 = vmatprep.mubr.bf16.mxu0 %v2947
    %3001 = vmatmul.mubr.bf16.gmra.mxu0 %v2946
    %v3002 = vpop.f32.mrf.mxu0
    %v3003 = vadd.f32 %v2960, %v3002
    %v3004 = vpop.f32.mrf.mxu0
    %v3005 = vadd.f32 %v2961, %v3004
    %v3006 = vpop.f32.mrf.mxu0
    %v3007 = vpop.f32.mrf.mxu0
    %3008 = vdwg.mxu0
    %3009 = vmatprep.subr.bf16.mxu0 %v773
    %3010 = vmatpush1.bf16.msra.mxu0 %v772
    %3011 = vmatprep.subr.bf16.mxu0 %v765
    %3012 = vmatpush1.bf16.msra.mxu0 %v764
    %3013 = vmatprep.subr.bf16.mxu0 %v757
    %3014 = vmatpush1.bf16.msra.mxu0 %v756
    %3015 = vmatprep.subr.bf16.mxu0 %v749
    %3016 = vmatpush1.bf16.msra.mxu0 %v748
    %3017 = vmatprep.subr.bf16.mxu0 %v741
    %3018 = vmatpush1.bf16.msra.mxu0 %v740
    %3019 = vmatprep.subr.bf16.mxu0 %v733
    %3020 = vmatpush1.bf16.msra.mxu0 %v732
    %3021 = vmatprep.subr.bf16.mxu0 %v725
    %3022 = vmatpush1.bf16.msra.mxu0 %v724
    %3023 = vmatprep.subr.bf16.mxu0 %v717
    %3024 = vmatpush1.bf16.msra.mxu0 %v716
    %3025 = vmatprep.subr.bf16.mxu0 %v837
    %3026 = vmatpush2.bf16.msra.mxu0 %v836
    %3027 = vmatprep.subr.bf16.mxu0 %v829
    %3028 = vmatpush2.bf16.msra.mxu0 %v828
    %3029 = vmatprep.subr.bf16.mxu0 %v821
    %3030 = vmatpush2.bf16.msra.mxu0 %v820
    %3031 = vmatprep.subr.bf16.mxu0 %v813
    %3032 = vmatpush2.bf16.msra.mxu0 %v812
    %3033 = vmatprep.subr.bf16.mxu0 %v805
    %3034 = vmatpush2.bf16.msra.mxu0 %v804
    %3035 = vmatprep.subr.bf16.mxu0 %v797
    %3036 = vmatpush2.bf16.msra.mxu0 %v796
    %3037 = vmatprep.subr.bf16.mxu0 %v789
    %3038 = vmatpush2.bf16.msra.mxu0 %v788
    %3039 = vmatprep.subr.bf16.mxu0 %v781
    %3040 = vmatpush2.bf16.msra.mxu0 %v780
    %3041 = vmatprep.mubr.bf16.mxu0 %v2947
    %3042 = vmatmul.mubr.bf16.gmra.mxu0 %v2946
    %v3043 = vpop.f32.mrf.mxu0
    %v3044 = vadd.f32 %v2962, %v3043
    %v3045 = vpop.f32.mrf.mxu0
    %v3046 = vadd.f32 %v2963, %v3045
    %v3047 = vpop.f32.mrf.mxu0
    %v3048 = vpop.f32.mrf.mxu0
    %3049 = vdwg.mxu0
    %3050 = vmatprep.subr.bf16.mxu0 %v775
    %3051 = vmatpush1.bf16.msra.mxu0 %v774
    %3052 = vmatprep.subr.bf16.mxu0 %v767
    %3053 = vmatpush1.bf16.msra.mxu0 %v766
    %3054 = vmatprep.subr.bf16.mxu0 %v759
    %3055 = vmatpush1.bf16.msra.mxu0 %v758
    %3056 = vmatprep.subr.bf16.mxu0 %v751
    %3057 = vmatpush1.bf16.msra.mxu0 %v750
    %3058 = vmatprep.subr.bf16.mxu0 %v743
    %3059 = vmatpush1.bf16.msra.mxu0 %v742
    %3060 = vmatprep.subr.bf16.mxu0 %v735
    %3061 = vmatpush1.bf16.msra.mxu0 %v734
    %3062 = vmatprep.subr.bf16.mxu0 %v727
    %3063 = vmatpush1.bf16.msra.mxu0 %v726
    %3064 = vmatprep.subr.bf16.mxu0 %v719
    %3065 = vmatpush1.bf16.msra.mxu0 %v718
    %3066 = vmatprep.subr.bf16.mxu0 %v839
    %3067 = vmatpush2.bf16.msra.mxu0 %v838
    %3068 = vmatprep.subr.bf16.mxu0 %v831
    %3069 = vmatpush2.bf16.msra.mxu0 %v830
    %3070 = vmatprep.subr.bf16.mxu0 %v823
    %3071 = vmatpush2.bf16.msra.mxu0 %v822
    %3072 = vmatprep.subr.bf16.mxu0 %v815
    %3073 = vmatpush2.bf16.msra.mxu0 %v814
    %3074 = vmatprep.subr.bf16.mxu0 %v807
    %3075 = vmatpush2.bf16.msra.mxu0 %v806
    %3076 = vmatprep.subr.bf16.mxu0 %v799
    %3077 = vmatpush2.bf16.msra.mxu0 %v798
    %3078 = vmatprep.subr.bf16.mxu0 %v791
    %3079 = vmatpush2.bf16.msra.mxu0 %v790
    %3080 = vmatprep.subr.bf16.mxu0 %v783
    %3081 = vmatpush2.bf16.msra.mxu0 %v782
    %3082 = vmatprep.mubr.bf16.mxu0 %v2947
    %3083 = vmatmul.mubr.bf16.gmra.mxu0 %v2946
    %v3084 = vpop.f32.mrf.mxu0
    %v3085 = vadd.f32 %v2964, %v3084
    %v3086 = vpop.f32.mrf.mxu0
    %v3087 = vadd.f32 %v2965, %v3086
    %v3088 = vpop.f32.mrf.mxu0
    %v3089 = vpop.f32.mrf.mxu0
    %3090 = vdwg.mxu0
    %3091 = vmatprep.subr.bf16.mxu0 %v777
    %3092 = vmatpush1.bf16.msra.mxu0 %v776
    %3093 = vmatprep.subr.bf16.mxu0 %v769
    %3094 = vmatpush1.bf16.msra.mxu0 %v768
    %3095 = vmatprep.subr.bf16.mxu0 %v761
    %3096 = vmatpush1.bf16.msra.mxu0 %v760
    %3097 = vmatprep.subr.bf16.mxu0 %v753
    %3098 = vmatpush1.bf16.msra.mxu0 %v752
    %3099 = vmatprep.subr.bf16.mxu0 %v745
    %3100 = vmatpush1.bf16.msra.mxu0 %v744
    %3101 = vmatprep.subr.bf16.mxu0 %v737
    %3102 = vmatpush1.bf16.msra.mxu0 %v736
    %3103 = vmatprep.subr.bf16.mxu0 %v729
    %3104 = vmatpush1.bf16.msra.mxu0 %v728
    %3105 = vmatprep.subr.bf16.mxu0 %v721
    %3106 = vmatpush1.bf16.msra.mxu0 %v720
    %3107 = vmatprep.subr.bf16.mxu0 %v841
    %3108 = vmatpush2.bf16.msra.mxu0 %v840
    %3109 = vmatprep.subr.bf16.mxu0 %v833
    %3110 = vmatpush2.bf16.msra.mxu0 %v832
    %3111 = vmatprep.subr.bf16.mxu0 %v825
    %3112 = vmatpush2.bf16.msra.mxu0 %v824
    %3113 = vmatprep.subr.bf16.mxu0 %v817
    %3114 = vmatpush2.bf16.msra.mxu0 %v816
    %3115 = vmatprep.subr.bf16.mxu0 %v809
    %3116 = vmatpush2.bf16.msra.mxu0 %v808
    %3117 = vmatprep.subr.bf16.mxu0 %v801
    %3118 = vmatpush2.bf16.msra.mxu0 %v800
    %3119 = vmatprep.subr.bf16.mxu0 %v793
    %3120 = vmatpush2.bf16.msra.mxu0 %v792
    %3121 = vmatprep.subr.bf16.mxu0 %v785
    %3122 = vmatpush2.bf16.msra.mxu0 %v784
    %3123 = vmatprep.mubr.bf16.mxu0 %v2947
    %3124 = vmatmul.mubr.bf16.gmra.mxu0 %v2946
    %v3125 = vpop.f32.mrf.mxu0
    %v3126 = vadd.f32 %v2966, %v3125
    %v3127 = vpop.f32.mrf.mxu0
    %v3128 = vadd.f32 %v2967, %v3127
    %v3129 = vpop.f32.mrf.mxu0
    %v3130 = vpop.f32.mrf.mxu0
    %3131 = vdwg.mxu0
    %v3132 = vmul.f32 %v3003, 0.5
    %v3133 = vmul.f32 %v3005, 0.5
    %v3134 = vmul.f32 %v3044, 0.5
    %v3135 = vmul.f32 %v3046, 0.5
    %v3136 = vtanh.pop %v3132
    %v3137 = vtanh.pop %v3133
    %v3138 = vtanh.pop %v3134
    %v3139 = vtanh.pop %v3135
    %v3140 = vmul.f32 %v3136, 0.5
    %v3141 = vmul.f32 %v3137, 0.5
    %v3142 = vmul.f32 %v3138, 0.5
    %v3143 = vmul.f32 %v3139, 0.5
    %v3144 = vadd.f32 %v3140, 0.5
    %v3145 = vadd.f32 %v3141, 0.5
    %v3146 = vadd.f32 %v3142, 0.5
    %v3147 = vadd.f32 %v3143, 0.5
    %v3148 = vtanh.pop %v3085
    %v3149 = vtanh.pop %v3087
    %v3150 = vmul.f32 %v3146, %v2932
    %v3151 = vmul.f32 %v3147, %v2933
    %v3152 = vmul.f32 %v3144, %v3148
    %v3153 = vmul.f32 %v3145, %v3149
    %v3154 = vadd.f32 %v3150, %v3152
    %v3155 = vadd.f32 %v3151, %v3153
    %v3156 = vtanh.pop %v3154
    %v3157 = vtanh.pop %v3155
    %v3158 = vmul.f32 %v3126, 0.5
    %v3159 = vmul.f32 %v3128, 0.5
    %v3160 = vtanh.pop %v3158
    %v3161 = vtanh.pop %v3159
    %v3162 = vmul.f32 %v3160, 0.5
    %v3163 = vmul.f32 %v3161, 0.5
    %v3164 = vadd.f32 %v3162, 0.5
    %v3165 = vadd.f32 %v3163, 0.5
    %v3166 = vmul.f32 %v3164, %v3156
    %v3167 = vmul.f32 %v3165, %v3157
    %v3168 = vpack.c.bf16 %v3166, %v3166
    %v3169 = vpack.c.bf16 %v3167, %v3167
    %3170 = vset.pattern.permute.xlu0 11
    %3171 = vperm.xlu0 %3170, %v38
    %v3172 = vpop.permute.xlu0 %3171
    %v3174 = vmul.f32 %v3172, %v50
    %v3175 = vmul.f32 %v3172, %v54
    %v3176 = vmul.f32 %v3172, %v58
    %v3177 = vmul.f32 %v3172, %v62
    %v3178 = vmul.f32 %v3172, %v66
    %v3179 = vmul.f32 %v3172, %v70
    %v3180 = vmul.f32 %v3172, %v74
    %v3181 = vmul.f32 %v3172, %v78
    %v3182 = vadd.f32 %v3174, %v99
    %v3183 = vadd.f32 %v3175, %v103
    %v3184 = vadd.f32 %v3176, %v107
    %v3185 = vadd.f32 %v3177, %v111
    %v3186 = vadd.f32 %v3178, %v115
    %v3187 = vadd.f32 %v3179, %v119
    %v3188 = vadd.f32 %v3180, %v123
    %v3189 = vadd.f32 %v3181, %v127
    %3190 = vmatprep.subr.bf16.mxu0 %v771
    %3191 = vmatpush1.bf16.msra.mxu0 %v770
    %3192 = vmatprep.subr.bf16.mxu0 %v763
    %3193 = vmatpush1.bf16.msra.mxu0 %v762
    %3194 = vmatprep.subr.bf16.mxu0 %v755
    %3195 = vmatpush1.bf16.msra.mxu0 %v754
    %3196 = vmatprep.subr.bf16.mxu0 %v747
    %3197 = vmatpush1.bf16.msra.mxu0 %v746
    %3198 = vmatprep.subr.bf16.mxu0 %v739
    %3199 = vmatpush1.bf16.msra.mxu0 %v738
    %3200 = vmatprep.subr.bf16.mxu0 %v731
    %3201 = vmatpush1.bf16.msra.mxu0 %v730
    %3202 = vmatprep.subr.bf16.mxu0 %v723
    %3203 = vmatpush1.bf16.msra.mxu0 %v722
    %3204 = vmatprep.subr.bf16.mxu0 %v715
    %3205 = vmatpush1.bf16.msra.mxu0 %v714
    %3206 = vmatprep.subr.bf16.mxu0 %v835
    %3207 = vmatpush2.bf16.msra.mxu0 %v834
    %3208 = vmatprep.subr.bf16.mxu0 %v827
    %3209 = vmatpush2.bf16.msra.mxu0 %v826
    %3210 = vmatprep.subr.bf16.mxu0 %v819
    %3211 = vmatpush2.bf16.msra.mxu0 %v818
    %3212 = vmatprep.subr.bf16.mxu0 %v811
    %3213 = vmatpush2.bf16.msra.mxu0 %v810
    %3214 = vmatprep.subr.bf16.mxu0 %v803
    %3215 = vmatpush2.bf16.msra.mxu0 %v802
    %3216 = vmatprep.subr.bf16.mxu0 %v795
    %3217 = vmatpush2.bf16.msra.mxu0 %v794
    %3218 = vmatprep.subr.bf16.mxu0 %v787
    %3219 = vmatpush2.bf16.msra.mxu0 %v786
    %3220 = vmatprep.subr.bf16.mxu0 %v779
    %3221 = vmatpush2.bf16.msra.mxu0 %v778
    %3222 = vmatprep.mubr.bf16.mxu0 %v3169
    %3223 = vmatmul.mubr.bf16.gmra.mxu0 %v3168
    %v3224 = vpop.f32.mrf.mxu0
    %v3225 = vadd.f32 %v3182, %v3224
    %v3226 = vpop.f32.mrf.mxu0
    %v3227 = vadd.f32 %v3183, %v3226
    %v3228 = vpop.f32.mrf.mxu0
    %v3229 = vpop.f32.mrf.mxu0
    %3230 = vdwg.mxu0
    %3231 = vmatprep.subr.bf16.mxu0 %v773
    %3232 = vmatpush1.bf16.msra.mxu0 %v772
    %3233 = vmatprep.subr.bf16.mxu0 %v765
    %3234 = vmatpush1.bf16.msra.mxu0 %v764
    %3235 = vmatprep.subr.bf16.mxu0 %v757
    %3236 = vmatpush1.bf16.msra.mxu0 %v756
    %3237 = vmatprep.subr.bf16.mxu0 %v749
    %3238 = vmatpush1.bf16.msra.mxu0 %v748
    %3239 = vmatprep.subr.bf16.mxu0 %v741
    %3240 = vmatpush1.bf16.msra.mxu0 %v740
    %3241 = vmatprep.subr.bf16.mxu0 %v733
    %3242 = vmatpush1.bf16.msra.mxu0 %v732
    %3243 = vmatprep.subr.bf16.mxu0 %v725
    %3244 = vmatpush1.bf16.msra.mxu0 %v724
    %3245 = vmatprep.subr.bf16.mxu0 %v717
    %3246 = vmatpush1.bf16.msra.mxu0 %v716
    %3247 = vmatprep.subr.bf16.mxu0 %v837
    %3248 = vmatpush2.bf16.msra.mxu0 %v836
    %3249 = vmatprep.subr.bf16.mxu0 %v829
    %3250 = vmatpush2.bf16.msra.mxu0 %v828
    %3251 = vmatprep.subr.bf16.mxu0 %v821
    %3252 = vmatpush2.bf16.msra.mxu0 %v820
    %3253 = vmatprep.subr.bf16.mxu0 %v813
    %3254 = vmatpush2.bf16.msra.mxu0 %v812
    %3255 = vmatprep.subr.bf16.mxu0 %v805
    %3256 = vmatpush2.bf16.msra.mxu0 %v804
    %3257 = vmatprep.subr.bf16.mxu0 %v797
    %3258 = vmatpush2.bf16.msra.mxu0 %v796
    %3259 = vmatprep.subr.bf16.mxu0 %v789
    %3260 = vmatpush2.bf16.msra.mxu0 %v788
    %3261 = vmatprep.subr.bf16.mxu0 %v781
    %3262 = vmatpush2.bf16.msra.mxu0 %v780
    %3263 = vmatprep.mubr.bf16.mxu0 %v3169
    %3264 = vmatmul.mubr.bf16.gmra.mxu0 %v3168
    %v3265 = vpop.f32.mrf.mxu0
    %v3266 = vadd.f32 %v3184, %v3265
    %v3267 = vpop.f32.mrf.mxu0
    %v3268 = vadd.f32 %v3185, %v3267
    %v3269 = vpop.f32.mrf.mxu0
    %v3270 = vpop.f32.mrf.mxu0
    %3271 = vdwg.mxu0
    %3272 = vmatprep.subr.bf16.mxu0 %v775
    %3273 = vmatpush1.bf16.msra.mxu0 %v774
    %3274 = vmatprep.subr.bf16.mxu0 %v767
    %3275 = vmatpush1.bf16.msra.mxu0 %v766
    %3276 = vmatprep.subr.bf16.mxu0 %v759
    %3277 = vmatpush1.bf16.msra.mxu0 %v758
    %3278 = vmatprep.subr.bf16.mxu0 %v751
    %3279 = vmatpush1.bf16.msra.mxu0 %v750
    %3280 = vmatprep.subr.bf16.mxu0 %v743
    %3281 = vmatpush1.bf16.msra.mxu0 %v742
    %3282 = vmatprep.subr.bf16.mxu0 %v735
    %3283 = vmatpush1.bf16.msra.mxu0 %v734
    %3284 = vmatprep.subr.bf16.mxu0 %v727
    %3285 = vmatpush1.bf16.msra.mxu0 %v726
    %3286 = vmatprep.subr.bf16.mxu0 %v719
    %3287 = vmatpush1.bf16.msra.mxu0 %v718
    %3288 = vmatprep.subr.bf16.mxu0 %v839
    %3289 = vmatpush2.bf16.msra.mxu0 %v838
    %3290 = vmatprep.subr.bf16.mxu0 %v831
    %3291 = vmatpush2.bf16.msra.mxu0 %v830
    %3292 = vmatprep.subr.bf16.mxu0 %v823
    %3293 = vmatpush2.bf16.msra.mxu0 %v822
    %3294 = vmatprep.subr.bf16.mxu0 %v815
    %3295 = vmatpush2.bf16.msra.mxu0 %v814
    %3296 = vmatprep.subr.bf16.mxu0 %v807
    %3297 = vmatpush2.bf16.msra.mxu0 %v806
    %3298 = vmatprep.subr.bf16.mxu0 %v799
    %3299 = vmatpush2.bf16.msra.mxu0 %v798
    %3300 = vmatprep.subr.bf16.mxu0 %v791
    %3301 = vmatpush2.bf16.msra.mxu0 %v790
    %3302 = vmatprep.subr.bf16.mxu0 %v783
    %3303 = vmatpush2.bf16.msra.mxu0 %v782
    %3304 = vmatprep.mubr.bf16.mxu0 %v3169
    %3305 = vmatmul.mubr.bf16.gmra.mxu0 %v3168
    %v3306 = vpop.f32.mrf.mxu0
    %v3307 = vadd.f32 %v3186, %v3306
    %v3308 = vpop.f32.mrf.mxu0
    %v3309 = vadd.f32 %v3187, %v3308
    %v3310 = vpop.f32.mrf.mxu0
    %v3311 = vpop.f32.mrf.mxu0
    %3312 = vdwg.mxu0
    %3313 = vmatprep.subr.bf16.mxu0 %v777
    %3314 = vmatpush1.bf16.msra.mxu0 %v776
    %3315 = vmatprep.subr.bf16.mxu0 %v769
    %3316 = vmatpush1.bf16.msra.mxu0 %v768
    %3317 = vmatprep.subr.bf16.mxu0 %v761
    %3318 = vmatpush1.bf16.msra.mxu0 %v760
    %3319 = vmatprep.subr.bf16.mxu0 %v753
    %3320 = vmatpush1.bf16.msra.mxu0 %v752
    %3321 = vmatprep.subr.bf16.mxu0 %v745
    %3322 = vmatpush1.bf16.msra.mxu0 %v744
    %3323 = vmatprep.subr.bf16.mxu0 %v737
    %3324 = vmatpush1.bf16.msra.mxu0 %v736
    %3325 = vmatprep.subr.bf16.mxu0 %v729
    %3326 = vmatpush1.bf16.msra.mxu0 %v728
    %3327 = vmatprep.subr.bf16.mxu0 %v721
    %3328 = vmatpush1.bf16.msra.mxu0 %v720
    %3329 = vmatprep.subr.bf16.mxu0 %v841
    %3330 = vmatpush2.bf16.msra.mxu0 %v840
    %3331 = vmatprep.subr.bf16.mxu0 %v833
    %3332 = vmatpush2.bf16.msra.mxu0 %v832
    %3333 = vmatprep.subr.bf16.mxu0 %v825
    %3334 = vmatpush2.bf16.msra.mxu0 %v824
    %3335 = vmatprep.subr.bf16.mxu0 %v817
    %3336 = vmatpush2.bf16.msra.mxu0 %v816
    %3337 = vmatprep.subr.bf16.mxu0 %v809
    %3338 = vmatpush2.bf16.msra.mxu0 %v808
    %3339 = vmatprep.subr.bf16.mxu0 %v801
    %3340 = vmatpush2.bf16.msra.mxu0 %v800
    %3341 = vmatprep.subr.bf16.mxu0 %v793
    %3342 = vmatpush2.bf16.msra.mxu0 %v792
    %3343 = vmatprep.subr.bf16.mxu0 %v785
    %3344 = vmatpush2.bf16.msra.mxu0 %v784
    %3345 = vmatprep.mubr.bf16.mxu0 %v3169
    %3346 = vmatmul.mubr.bf16.gmra.mxu0 %v3168
    %v3347 = vpop.f32.mrf.mxu0
    %v3348 = vadd.f32 %v3188, %v3347
    %v3349 = vpop.f32.mrf.mxu0
    %v3350 = vadd.f32 %v3189, %v3349
    %v3351 = vpop.f32.mrf.mxu0
    %v3352 = vpop.f32.mrf.mxu0
    %3353 = vdwg.mxu0
    %v3354 = vmul.f32 %v3225, 0.5
    %v3355 = vmul.f32 %v3227, 0.5
    %v3356 = vmul.f32 %v3266, 0.5
    %v3357 = vmul.f32 %v3268, 0.5
    %v3358 = vtanh.pop %v3354
    %v3359 = vtanh.pop %v3355
    %v3360 = vtanh.pop %v3356
    %v3361 = vtanh.pop %v3357
    %v3362 = vmul.f32 %v3358, 0.5
    %v3363 = vmul.f32 %v3359, 0.5
    %v3364 = vmul.f32 %v3360, 0.5
    %v3365 = vmul.f32 %v3361, 0.5
    %v3366 = vadd.f32 %v3362, 0.5
    %v3367 = vadd.f32 %v3363, 0.5
    %v3368 = vadd.f32 %v3364, 0.5
    %v3369 = vadd.f32 %v3365, 0.5
    %v3370 = vtanh.pop %v3307
    %v3371 = vtanh.pop %v3309
    %v3372 = vmul.f32 %v3368, %v3154
    %v3373 = vmul.f32 %v3369, %v3155
    %v3374 = vmul.f32 %v3366, %v3370
    %v3375 = vmul.f32 %v3367, %v3371
    %v3376 = vadd.f32 %v3372, %v3374
    %v3377 = vadd.f32 %v3373, %v3375
    %v3378 = vtanh.pop %v3376
    %v3379 = vtanh.pop %v3377
    %v3380 = vmul.f32 %v3348, 0.5
    %v3381 = vmul.f32 %v3350, 0.5
    %v3382 = vtanh.pop %v3380
    %v3383 = vtanh.pop %v3381
    %v3384 = vmul.f32 %v3382, 0.5
    %v3385 = vmul.f32 %v3383, 0.5
    %v3386 = vadd.f32 %v3384, 0.5
    %v3387 = vadd.f32 %v3385, 0.5
    %v3388 = vmul.f32 %v3386, %v3378
    %v3389 = vmul.f32 %v3387, %v3379
    %v3390 = vld [vmem:[%s4] sm:$0xff]
    %v3391 = vld [vmem:[%s4 + $0x8] sm:$0xff]
    %v3392 = vld [vmem:[%s4 + $0x10] sm:$0xff]
    %v3393 = vld [vmem:[%s4 + $0x18] sm:$0xff]
    %v3394 = vld [vmem:[%s4 + $0x20] sm:$0xff]
    %v3395 = vld [vmem:[%s4 + $0x28] sm:$0xff]
    %v3396 = vld [vmem:[%s4 + $0x30] sm:$0xff]
    %v3397 = vld [vmem:[%s4 + $0x38] sm:$0xff]
    %v3398 = vld [vmem:[%s4 + $0x40] sm:$0xff]
    %v3399 = vld [vmem:[%s4 + $0x48] sm:$0xff]
    %v3400 = vld [vmem:[%s4 + $0x50] sm:$0xff]
    %v3401 = vld [vmem:[%s4 + $0x58] sm:$0xff]
    %v3402 = vld [vmem:[%s4 + $0x60] sm:$0xff]
    %v3403 = vld [vmem:[%s4 + $0x68] sm:$0xff]
    %v3404 = vld [vmem:[%s4 + $0x70] sm:$0xff]
    %v3405 = vld [vmem:[%s4 + $0x78] sm:$0xff]
    %v3406 = vld [vmem:[%s4 + $0x80] sm:$0xff]
    %v3407 = vld [vmem:[%s4 + $0x88] sm:$0xff]
    %v3408 = vld [vmem:[%s4 + $0x90] sm:$0xff]
    %v3409 = vld [vmem:[%s4 + $0x98] sm:$0xff]
    %v3410 = vld [vmem:[%s4 + $0xa0] sm:$0xff]
    %v3411 = vld [vmem:[%s4 + $0xa8] sm:$0xff]
    %v3412 = vld [vmem:[%s4 + $0xb0] sm:$0xff]
    %v3413 = vld [vmem:[%s4 + $0xb8] sm:$0xff]
    %v3414 = vld [vmem:[%s4 + $0xc0] sm:$0xff]
    %v3415 = vld [vmem:[%s4 + $0xc8] sm:$0xff]
    %v3416 = vld [vmem:[%s4 + $0xd0] sm:$0xff]
    %v3417 = vld [vmem:[%s4 + $0xd8] sm:$0xff]
    %v3418 = vld [vmem:[%s4 + $0xe0] sm:$0xff]
    %v3419 = vld [vmem:[%s4 + $0xe8] sm:$0xff]
    %v3420 = vld [vmem:[%s4 + $0xf0] sm:$0xff]
    %v3421 = vld [vmem:[%s4 + $0xf8] sm:$0xff]
    %v3422 = vld [vmem:[%s5] sm:$0x1]
    %v3424 = vlaneseq
    %v3425 = vshrl.u32 %v3424, 7
    %v3426 = vsub.s32 0, %v3425
    %v3427 = vrot.slane %v3422, %v3426
    %3429 = vmatprep.subr.mxu0 0.0
    %3430 = vmatpush1.msra.mxu0 %v3405
    %3431 = vmatprep.subr.mxu0 0.0
    %3432 = vmatpush1.msra.mxu0 %v3404
    %3433 = vmatprep.subr.mxu0 0.0
    %3434 = vmatpush1.msra.mxu0 %v3403
    %3435 = vmatprep.subr.mxu0 0.0
    %3436 = vmatpush1.msra.mxu0 %v3402
    %3437 = vmatprep.subr.mxu0 0.0
    %3438 = vmatpush1.msra.mxu0 %v3401
    %3439 = vmatprep.subr.mxu0 0.0
    %3440 = vmatpush1.msra.mxu0 %v3400
    %3441 = vmatprep.subr.mxu0 0.0
    %3442 = vmatpush1.msra.mxu0 %v3399
    %3443 = vmatprep.subr.mxu0 0.0
    %3444 = vmatpush1.msra.mxu0 %v3398
    %3445 = vmatprep.subr.mxu0 0.0
    %3446 = vmatpush1.msra.mxu0 %v3397
    %3447 = vmatprep.subr.mxu0 0.0
    %3448 = vmatpush1.msra.mxu0 %v3396
    %3449 = vmatprep.subr.mxu0 0.0
    %3450 = vmatpush1.msra.mxu0 %v3395
    %3451 = vmatprep.subr.mxu0 0.0
    %3452 = vmatpush1.msra.mxu0 %v3394
    %3453 = vmatprep.subr.mxu0 0.0
    %3454 = vmatpush1.msra.mxu0 %v3393
    %3455 = vmatprep.subr.mxu0 0.0
    %3456 = vmatpush1.msra.mxu0 %v3392
    %3457 = vmatprep.subr.mxu0 0.0
    %3458 = vmatpush1.msra.mxu0 %v3391
    %3459 = vmatprep.subr.mxu0 0.0
    %3460 = vmatpush1.msra.mxu0 %v3390
    %3461 = vmatprep.subr.mxu0 0.0
    %3462 = vmatpush2.msra.mxu0 %v3421
    %3463 = vmatprep.subr.mxu0 0.0
    %3464 = vmatpush2.msra.mxu0 %v3420
    %3465 = vmatprep.subr.mxu0 0.0
    %3466 = vmatpush2.msra.mxu0 %v3419
    %3467 = vmatprep.subr.mxu0 0.0
    %3468 = vmatpush2.msra.mxu0 %v3418
    %3469 = vmatprep.subr.mxu0 0.0
    %3470 = vmatpush2.msra.mxu0 %v3417
    %3471 = vmatprep.subr.mxu0 0.0
    %3472 = vmatpush2.msra.mxu0 %v3416
    %3473 = vmatprep.subr.mxu0 0.0
    %3474 = vmatpush2.msra.mxu0 %v3415
    %3475 = vmatprep.subr.mxu0 0.0
    %3476 = vmatpush2.msra.mxu0 %v3414
    %3477 = vmatprep.subr.mxu0 0.0
    %3478 = vmatpush2.msra.mxu0 %v3413
    %3479 = vmatprep.subr.mxu0 0.0
    %3480 = vmatpush2.msra.mxu0 %v3412
    %3481 = vmatprep.subr.mxu0 0.0
    %3482 = vmatpush2.msra.mxu0 %v3411
    %3483 = vmatprep.subr.mxu0 0.0
    %3484 = vmatpush2.msra.mxu0 %v3410
    %3485 = vmatprep.subr.mxu0 0.0
    %3486 = vmatpush2.msra.mxu0 %v3409
    %3487 = vmatprep.subr.mxu0 0.0
    %3488 = vmatpush2.msra.mxu0 %v3408
    %3489 = vmatprep.subr.mxu0 0.0
    %3490 = vmatpush2.msra.mxu0 %v3407
    %3491 = vmatprep.subr.mxu0 0.0
    %3492 = vmatpush2.msra.mxu0 %v3406
    %3493 = vmatprep.mubr.f32.mxu0 %v3389
    %3494 = vmatmul.mubr.f32.gmra.mxu0 %v3388
    %v3495 = vpop.f32.mrf.mxu0
    %v3496 = vadd.f32 %v3427, %v3495
    %v3497 = vpop.f32.mrf.mxu0
    %3498 = vdwg.mxu0
    %vm3499 = vcmp.gt.f32.partialorder %v3496, 0.0
    %v3500 = vmul.f32 %v3496, 0.01
    %v3501 = vsel %vm3499, %v3496, %v3500
    %vm3502 = vcmask 523264
    %3503 = vst.msk [vmem:[#allocation5] sm:$0xff] %vm3502, %v3501
    // Predicated region
    $region30: #{encoder_forward.1} parent=1 // pred_check
      _
    $region31: #{encoder_forward.1} parent=1 // pred_check_branch
      %3505 = sbr.rel (0) target = $region33
    $region32: #{encoder_forward.1} parent=1 // pred_region
      %s3507 = ssub.s32 128, 128
      %3508 = vsyncadd [#allocation4], %s3507
      %s3510 = sshll.u32 [#allocation5], 4
      %s3511 = int_to_ptr.vmem [resolvable:$true] %s3510
      %3513 = dma.vmem_to_hbm [thread:$0]  %s3511, 128, %s6, [#allocation4]
    $region33: #{encoder_forward.1} parent=1 // pred_fallthru
      _
    // Predicated region
    $region34: #{encoder_forward.1} parent=1 // pred_check
      _
    $region35: #{encoder_forward.1} parent=1 // pred_check_branch
      %3515 = sbr.rel (0) target = $region37
    $region36: #{encoder_forward.1} parent=1 // pred_region
      %3516 = dma.done [#allocation4], 128
    $region37: #{encoder_forward.1} parent=1 // pred_fallthru
      _
    %3517 = vsyncpa [#allocation3], 1
    %3518 = vsyncpa [#allocation4], 1

</llo_original>
